<compile_context>
chip_gen: v7x
topology: tpu7x:2x2x1
jax: 0.10.0
libtpu: 0.0.40
codegen_flags: <defaults>
</compile_context>

<pallas_src>
import functools

import jax
import jax.numpy as jnp
from jax.experimental import pallas as pl
from jax.experimental.pallas import tpu as pltpu

HIDDEN = 500        # logical hidden size (matches the PyTorch module)
HIDDEN_PAD = 512    # padded to 4*128 for dense lanes / aligned MXU tiling
M_CHUNK = 128       # row-chunk for the fused layer-2 + final-layer epilogue


def _round_up(x, m):
    return ((x + m - 1) // m) * m


def _critic_kernel(x_ref, w1_ref, b1_ref, w2_ref, b2_ref, w3_ref, b3_ref, o_ref):
    # Feature-major layout (batch on the lane axis):
    #   x_ref  : (K_pad, bb) bf16   -- concat(state, action), zero-padded to K_pad
    #   w1     : (512, K_pad) bf16     b1, b2 : (512, 1) f32
    #   w2     : (512, 512) bf16       w3     : (512, 1) f32
    #   b3     : (1, 1) f32 in SMEM    o_ref  : (1, bb) f32 (lane-dense)
    x = x_ref[...]                                                   # bf16 already

    # Layer 1 -- single merged matmul (concat + pad done on host, zero cols in W1).
    h1 = jnp.dot(w1_ref[...], x, preferred_element_type=jnp.float32) + b1_ref[...]
    h1 = jnp.maximum(h1, 0.0).astype(jnp.bfloat16)                   # (512, bb)

    # Layer 2 + final layer fused per 128-row M-chunk: for each chunk compute
    # relu(W2_chunk @ h1 + b2_chunk) and immediately reduce it against w3_chunk,
    # so only a (128, bb) f32 tile is live at a time (no full (512, bb) f32 h2).
    acc = None
    for c in range(HIDDEN_PAD // M_CHUNK):
        rows = pl.ds(c * M_CHUNK, M_CHUNK)
        h2c = (jnp.dot(w2_ref[rows, :], h1, preferred_element_type=jnp.float32)
               + b2_ref[rows, :])
        h2c = jnp.maximum(h2c, 0.0)                                  # (128, bb) f32
        part = jnp.sum(h2c * w3_ref[rows, :], axis=0, keepdims=True) # (1, bb)
        acc = part if acc is None else acc + part

    o_ref[...] = (acc + b3_ref[0, 0]).astype(o_ref.dtype)


@functools.partial(jax.jit, static_argnames=("block_b",))
def critic_forward(state, action, params, block_b=512):
    """Equivalent of Critic.forward(state, action) -> (B, 1) float32."""
    w1, b1, w2, b2, w3, b3 = params
    B = state.shape[0]
    K = state.shape[1] + action.shape[1]
    K_pad = w1.shape[1]

    # Host side: fuse concat + bf16 cast + K-pad + transpose into one prep op.
    x = jnp.concatenate([state.astype(jnp.bfloat16),
                         action.astype(jnp.bfloat16)], axis=1)       # (B, K) bf16
    if K_pad > K:
        x = jnp.pad(x, ((0, 0), (0, K_pad - K)))
    xt = x.T                                                         # (K_pad, B) bf16

    # Batch tile: full batch when small; otherwise a multiple of 128 chosen so the
    # grid has >= 2 steps (both v7x TensorCores get work), capped at block_b to
    # amortize per-step overhead on large batches.  Ragged last block is handled
    # by Pallas (OOB output lanes dropped; garbage input lanes stay column-local).
    if B < 256:
        bb = B
    else:
        bb = min(block_b, _round_up(pl.cdiv(B, 2), 128))
    grid = (pl.cdiv(B, bb),)

    # Advisory cost so XLA schedules the host-side prep around the custom call.
    flops = 2 * B * HIDDEN_PAD * (K_pad + HIDDEN_PAD + 1)
    bytes_accessed = (int(w1.size) * 2 + int(w2.size) * 2
                      + int(b1.size + b2.size + w3.size + b3.size) * 4
                      + K_pad * B * 2 + B * 4)
    cost = pl.CostEstimate(flops=flops, transcendentals=0,
                           bytes_accessed=bytes_accessed)

    out = pl.pallas_call(
        _critic_kernel,
        out_shape=jax.ShapeDtypeStruct((1, B), jnp.float32),
        grid_spec=pltpu.PrefetchScalarGridSpec(
            num_scalar_prefetch=0,
            grid=grid,
            in_specs=[
                # activations: tiled over the batch (lane) axis
                pl.BlockSpec((K_pad, bb), lambda i: (0, i)),
                # weights / biases: constant block index -> fetched once, stay resident
                pl.BlockSpec((HIDDEN_PAD, K_pad), lambda i: (0, 0)),
                pl.BlockSpec((HIDDEN_PAD, 1), lambda i: (0, 0)),
                pl.BlockSpec((HIDDEN_PAD, HIDDEN_PAD), lambda i: (0, 0)),
                pl.BlockSpec((HIDDEN_PAD, 1), lambda i: (0, 0)),
                pl.BlockSpec((HIDDEN_PAD, 1), lambda i: (0, 0)),
                # final bias: scalar in SMEM
                pl.BlockSpec(memory_space=pltpu.MemorySpace.SMEM),
            ],
            out_specs=pl.BlockSpec((1, bb), lambda i: (0, i)),
        ),
        compiler_params=pltpu.CompilerParams(
            dimension_semantics=("parallel",),
            vmem_limit_bytes=32 * 1024 * 1024,   # v5e default is only 16 MiB
        ),
        cost_estimate=cost,
    )(xt, w1, b1, w2, b2, w3, b3)

    # (1, B) row-major -> (B, 1): a free reshape.
    return out.reshape(B, 1)


def init_critic_params(key, n_states, n_actions):
    """Mirrors torch.nn.Linear default init (U(+-1/sqrt(fan_in))) on the true
    500-wide network, then stores kernel-layout params:
      * W1 as a single (512, K_pad) bf16 matrix (K = n_states + n_actions zero-padded),
      * hidden dim zero-padded 500 -> 512 (mathematically identical),
      * W2 (512, 512) bf16, biases as (512, 1) f32 columns, final bias (1, 1) f32.
    Returns (kernel_params, f32_master_params)."""
    d_in = n_states + n_actions
    k_pad = _round_up(d_in, 32)

    def linear(k, fan_in, fan_out):
        kw, kb = jax.random.split(k)
        bound = 1.0 / jnp.sqrt(jnp.float32(fan_in))
        w = jax.random.uniform(kw, (fan_out, fan_in), jnp.float32, -bound, bound)
        b = jax.random.uniform(kb, (fan_out,), jnp.float32, -bound, bound)
        return w, b

    k1, k2, k3 = jax.random.split(key, 3)
    w1, b1 = linear(k1, d_in, HIDDEN)      # (500, d_in), (500,)
    w2, b2 = linear(k2, HIDDEN, HIDDEN)    # (500, 500),  (500,)
    w3, b3 = linear(k3, HIDDEN, 1)         # (1, 500),    (1,)

    pad_h = HIDDEN_PAD - HIDDEN
    w1p = jnp.pad(w1, ((0, pad_h), (0, k_pad - d_in))).astype(jnp.bfloat16)  # (512, K_pad)
    b1p = jnp.pad(b1, (0, pad_h)).reshape(HIDDEN_PAD, 1)                     # (512, 1) f32
    w2p = jnp.pad(w2, ((0, pad_h), (0, pad_h))).astype(jnp.bfloat16)         # (512, 512) bf16
    b2p = jnp.pad(b2, (0, pad_h)).reshape(HIDDEN_PAD, 1)                     # (512, 1) f32
    w3p = jnp.pad(w3, ((0, 0), (0, pad_h))).reshape(HIDDEN_PAD, 1)           # (512, 1) f32
    b3p = b3.reshape(1, 1)                                                   # (1, 1) f32

    kernel_params = (w1p, b1p, w2p, b2p, w3p, b3p)
    master_params = (w1, b1, w2, b2, w3, b3)
    return kernel_params, master_params


def _reference_forward_bf16(state, action, params):
    """Pure-JAX mirror of the kernel math (same bf16 cast points)."""
    w1, b1, w2, b2, w3, b3 = params
    k_pad = w1.shape[1]
    x = jnp.concatenate([state.astype(jnp.bfloat16),
                         action.astype(jnp.bfloat16)], axis=1)
    x = jnp.pad(x, ((0, 0), (0, k_pad - x.shape[1])))
    h1 = jnp.dot(w1, x.T, preferred_element_type=jnp.float32) + b1
    h1 = jnp.maximum(h1, 0.0).astype(jnp.bfloat16)
    h2 = jnp.dot(w2, h1, preferred_element_type=jnp.float32) + b2
    h2 = jnp.maximum(h2, 0.0)
    out = jnp.sum(h2 * w3, axis=0, keepdims=True) + b3[0, 0]
    return out.reshape(-1, 1)


def _reference_forward_f32(state, action, master):
    """Full-precision reference matching the original PyTorch module."""
    w1, b1, w2, b2, w3, b3 = master
    hp = jax.lax.Precision.HIGHEST
    x = jnp.concatenate([state, action], axis=1)
    h1 = jnp.maximum(jnp.dot(x, w1.T, precision=hp) + b1, 0.0)
    h2 = jnp.maximum(jnp.dot(h1, w2.T, precision=hp) + b2, 0.0)
    return jnp.dot(h2, w3.T, precision=hp) + b3


if __name__ == "__main__":
    n_states, n_actions = 17, 6

    key = jax.random.PRNGKey(0)
    k_params, k_s, k_a, k_s2, k_a2 = jax.random.split(key, 5)

    params, master = init_critic_params(k_params, n_states, n_actions)

    # Small batch (single grid step) -- check kernel vs bf16 mirror and f32 master.
    batch = 8
    state = jax.random.normal(k_s, (batch, n_states), jnp.float32)
    action = jax.random.normal(k_a, (batch, n_actions), jnp.float32)

    out = jax.block_until_ready(critic_forward(state, action, params))
    assert out.shape == (batch, 1), out.shape

    ref_mirror = _reference_forward_bf16(state, action, params)
    ref_master = _reference_forward_f32(state, action, master)
    # NOTE: bf16 weights/activations are an intentional precision downgrade vs the
    # f32 PyTorch module (fine for an RL critic); hence the 3e-2 master tolerance.
    assert jnp.allclose(out, ref_mirror, atol=2e-3, rtol=2e-3), (
        float(jnp.max(jnp.abs(out - ref_mirror))))
    assert jnp.allclose(out, ref_master, atol=3e-2, rtol=3e-2), (
        float(jnp.max(jnp.abs(out - ref_master))))

    # Moderate batch -- exercises the >=2-step grid (v7x megacore path) and the
    # ragged last batch block (OOB output lanes masked on store).
    batch2 = 384
    state2 = jax.random.normal(k_s2, (batch2, n_states), jnp.float32)
    action2 = jax.random.normal(k_a2, (batch2, n_actions), jnp.float32)
    out2 = jax.block_until_ready(critic_forward(state2, action2, params))
    assert out2.shape == (batch2, 1), out2.shape
    ref2 = _reference_forward_bf16(state2, action2, params)
    assert jnp.allclose(out2, ref2, atol=2e-3, rtol=2e-3), (
        float(jnp.max(jnp.abs(out2 - ref2))))

    # TODO(synk): get_tensor_values is a pure reshape/repeat wrapper around forward;
    # it is left to the caller (no kernel needed).
    print("KERNEL_OK")
</pallas_src>

<mosaic_0001>
module attributes {stable_mosaic.version = 11 : i64} {
  func.func @_critic_kernel(%arg0: i32, %arg1: memref<32x8xbf16, #tpu.memory_space<vmem>>, %arg2: memref<512x32xbf16, #tpu.memory_space<vmem>>, %arg3: memref<512x1xf32, #tpu.memory_space<vmem>>, %arg4: memref<512x512xbf16, #tpu.memory_space<vmem>>, %arg5: memref<512x1xf32, #tpu.memory_space<vmem>>, %arg6: memref<512x1xf32, #tpu.memory_space<vmem>>, %arg7: memref<1x1xf32, #tpu.memory_space<smem>>, %arg8: memref<1x8xf32, #tpu.memory_space<vmem>>) attributes {dimension_semantics = [#tpu.dimension_semantics<parallel>], iteration_bounds = array<i64: 1>, scalar_prefetch = 0 : i64, scratch_operands = 0 : i64, tpu.core_type = #tpu.core_type<tc>, window_params = [{transform_indices = @transform_0, window_bounds = array<i64: 32, 8>}, {pipeline_mode = #tpu.pipeline_mode<synchronous>, transform_indices = @transform_1, window_bounds = array<i64: 512, 32>}, {pipeline_mode = #tpu.pipeline_mode<synchronous>, transform_indices = @transform_2, window_bounds = array<i64: 512, 1>}, {pipeline_mode = #tpu.pipeline_mode<synchronous>, transform_indices = @transform_3, window_bounds = array<i64: 512, 512>}, {pipeline_mode = #tpu.pipeline_mode<synchronous>, transform_indices = @transform_4, window_bounds = array<i64: 512, 1>}, {pipeline_mode = #tpu.pipeline_mode<synchronous>, transform_indices = @transform_5, window_bounds = array<i64: 512, 1>}, {transform_indices = @transform_6, window_bounds = array<i64: 1, 1>}, {transform_indices = @transform_7, window_bounds = array<i64: 1, 8>}]} {
    %c0 = arith.constant 0 : index
    %c0_0 = arith.constant 0 : index
    %0 = vector.load %arg1[%c0, %c0_0] : memref<32x8xbf16, #tpu.memory_space<vmem>>, vector<32x8xbf16>
    %c0_1 = arith.constant 0 : index
    %c0_2 = arith.constant 0 : index
    %1 = vector.load %arg2[%c0_1, %c0_2] : memref<512x32xbf16, #tpu.memory_space<vmem>>, vector<512x32xbf16>
    %cst = arith.constant dense<0.000000e+00> : vector<512x8xf32>
    %2 = tpu.matmul %1, %0, %cst {dimension_numbers = #tpu.dot_dimension_numbers<[1], [0], [0], [1], [0, 0, 1, 1], [], []>} : vector<512x32xbf16>, vector<32x8xbf16>, vector<512x8xf32> -> vector<512x8xf32>
    %c0_3 = arith.constant 0 : index
    %c0_4 = arith.constant 0 : index
    %3 = vector.load %arg3[%c0_3, %c0_4] : memref<512x1xf32, #tpu.memory_space<vmem>>, vector<512x1xf32>
    %4 = vector.broadcast %3 : vector<512x1xf32> to vector<512x8xf32>
    %5 = arith.addf %2, %4 : vector<512x8xf32>
    %cst_5 = arith.constant 0.000000e+00 : f32
    %6 = vector.broadcast %cst_5 : f32 to vector<512x8xf32>
    %7 = arith.maximumf %5, %6 : vector<512x8xf32>
    %8 = arith.truncf %7 : vector<512x8xf32> to vector<512x8xbf16>
    %c0_6 = arith.constant 0 : index
    %c0_7 = arith.constant 0 : index
    %9 = vector.load %arg4[%c0_6, %c0_7] : memref<512x512xbf16, #tpu.memory_space<vmem>>, vector<128x512xbf16>
    %cst_8 = arith.constant dense<0.000000e+00> : vector<128x8xf32>
    %10 = tpu.matmul %9, %8, %cst_8 {dimension_numbers = #tpu.dot_dimension_numbers<[1], [0], [0], [1], [0, 0, 1, 1], [], []>} : vector<128x512xbf16>, vector<512x8xbf16>, vector<128x8xf32> -> vector<128x8xf32>
    %c0_9 = arith.constant 0 : index
    %c0_10 = arith.constant 0 : index
    %11 = vector.load %arg5[%c0_9, %c0_10] : memref<512x1xf32, #tpu.memory_space<vmem>>, vector<128x1xf32>
    %12 = vector.broadcast %11 : vector<128x1xf32> to vector<128x8xf32>
    %13 = arith.addf %10, %12 : vector<128x8xf32>
    %cst_11 = arith.constant 0.000000e+00 : f32
    %14 = vector.broadcast %cst_11 : f32 to vector<128x8xf32>
    %15 = arith.maximumf %13, %14 : vector<128x8xf32>
    %c0_12 = arith.constant 0 : index
    %c0_13 = arith.constant 0 : index
    %16 = vector.load %arg6[%c0_12, %c0_13] : memref<512x1xf32, #tpu.memory_space<vmem>>, vector<128x1xf32>
    %17 = vector.broadcast %16 : vector<128x1xf32> to vector<128x8xf32>
    %18 = arith.mulf %15, %17 : vector<128x8xf32>
    %cst_14 = arith.constant dense<0.000000e+00> : vector<8xf32>
    %19 = vector.multi_reduction <add>, %18, %cst_14 [0] : vector<128x8xf32> to vector<8xf32>
    %20 = vector.shape_cast %19 : vector<8xf32> to vector<1x8xf32>
    %c128 = arith.constant 128 : index
    %c0_15 = arith.constant 0 : index
    %21 = vector.load %arg4[%c128, %c0_15] : memref<512x512xbf16, #tpu.memory_space<vmem>>, vector<128x512xbf16>
    %cst_16 = arith.constant dense<0.000000e+00> : vector<128x8xf32>
    %22 = tpu.matmul %21, %8, %cst_16 {dimension_numbers = #tpu.dot_dimension_numbers<[1], [0], [0], [1], [0, 0, 1, 1], [], []>} : vector<128x512xbf16>, vector<512x8xbf16>, vector<128x8xf32> -> vector<128x8xf32>
    %c128_17 = arith.constant 128 : index
    %c0_18 = arith.constant 0 : index
    %23 = vector.load %arg5[%c128_17, %c0_18] : memref<512x1xf32, #tpu.memory_space<vmem>>, vector<128x1xf32>
    %24 = vector.broadcast %23 : vector<128x1xf32> to vector<128x8xf32>
    %25 = arith.addf %22, %24 : vector<128x8xf32>
    %cst_19 = arith.constant 0.000000e+00 : f32
    %26 = vector.broadcast %cst_19 : f32 to vector<128x8xf32>
    %27 = arith.maximumf %25, %26 : vector<128x8xf32>
    %c128_20 = arith.constant 128 : index
    %c0_21 = arith.constant 0 : index
    %28 = vector.load %arg6[%c128_20, %c0_21] : memref<512x1xf32, #tpu.memory_space<vmem>>, vector<128x1xf32>
    %29 = vector.broadcast %28 : vector<128x1xf32> to vector<128x8xf32>
    %30 = arith.mulf %27, %29 : vector<128x8xf32>
    %cst_22 = arith.constant dense<0.000000e+00> : vector<8xf32>
    %31 = vector.multi_reduction <add>, %30, %cst_22 [0] : vector<128x8xf32> to vector<8xf32>
    %32 = vector.shape_cast %31 : vector<8xf32> to vector<1x8xf32>
    %33 = arith.addf %20, %32 : vector<1x8xf32>
    %c256 = arith.constant 256 : index
    %c0_23 = arith.constant 0 : index
    %34 = vector.load %arg4[%c256, %c0_23] : memref<512x512xbf16, #tpu.memory_space<vmem>>, vector<128x512xbf16>
    %cst_24 = arith.constant dense<0.000000e+00> : vector<128x8xf32>
    %35 = tpu.matmul %34, %8, %cst_24 {dimension_numbers = #tpu.dot_dimension_numbers<[1], [0], [0], [1], [0, 0, 1, 1], [], []>} : vector<128x512xbf16>, vector<512x8xbf16>, vector<128x8xf32> -> vector<128x8xf32>
    %c256_25 = arith.constant 256 : index
    %c0_26 = arith.constant 0 : index
    %36 = vector.load %arg5[%c256_25, %c0_26] : memref<512x1xf32, #tpu.memory_space<vmem>>, vector<128x1xf32>
    %37 = vector.broadcast %36 : vector<128x1xf32> to vector<128x8xf32>
    %38 = arith.addf %35, %37 : vector<128x8xf32>
    %cst_27 = arith.constant 0.000000e+00 : f32
    %39 = vector.broadcast %cst_27 : f32 to vector<128x8xf32>
    %40 = arith.maximumf %38, %39 : vector<128x8xf32>
    %c256_28 = arith.constant 256 : index
    %c0_29 = arith.constant 0 : index
    %41 = vector.load %arg6[%c256_28, %c0_29] : memref<512x1xf32, #tpu.memory_space<vmem>>, vector<128x1xf32>
    %42 = vector.broadcast %41 : vector<128x1xf32> to vector<128x8xf32>
    %43 = arith.mulf %40, %42 : vector<128x8xf32>
    %cst_30 = arith.constant dense<0.000000e+00> : vector<8xf32>
    %44 = vector.multi_reduction <add>, %43, %cst_30 [0] : vector<128x8xf32> to vector<8xf32>
    %45 = vector.shape_cast %44 : vector<8xf32> to vector<1x8xf32>
    %46 = arith.addf %33, %45 : vector<1x8xf32>
    %c384 = arith.constant 384 : index
    %c0_31 = arith.constant 0 : index
    %47 = vector.load %arg4[%c384, %c0_31] : memref<512x512xbf16, #tpu.memory_space<vmem>>, vector<128x512xbf16>
    %cst_32 = arith.constant dense<0.000000e+00> : vector<128x8xf32>
    %48 = tpu.matmul %47, %8, %cst_32 {dimension_numbers = #tpu.dot_dimension_numbers<[1], [0], [0], [1], [0, 0, 1, 1], [], []>} : vector<128x512xbf16>, vector<512x8xbf16>, vector<128x8xf32> -> vector<128x8xf32>
    %c384_33 = arith.constant 384 : index
    %c0_34 = arith.constant 0 : index
    %49 = vector.load %arg5[%c384_33, %c0_34] : memref<512x1xf32, #tpu.memory_space<vmem>>, vector<128x1xf32>
    %50 = vector.broadcast %49 : vector<128x1xf32> to vector<128x8xf32>
    %51 = arith.addf %48, %50 : vector<128x8xf32>
    %cst_35 = arith.constant 0.000000e+00 : f32
    %52 = vector.broadcast %cst_35 : f32 to vector<128x8xf32>
    %53 = arith.maximumf %51, %52 : vector<128x8xf32>
    %c384_36 = arith.constant 384 : index
    %c0_37 = arith.constant 0 : index
    %54 = vector.load %arg6[%c384_36, %c0_37] : memref<512x1xf32, #tpu.memory_space<vmem>>, vector<128x1xf32>
    %55 = vector.broadcast %54 : vector<128x1xf32> to vector<128x8xf32>
    %56 = arith.mulf %53, %55 : vector<128x8xf32>
    %cst_38 = arith.constant dense<0.000000e+00> : vector<8xf32>
    %57 = vector.multi_reduction <add>, %56, %cst_38 [0] : vector<128x8xf32> to vector<8xf32>
    %58 = vector.shape_cast %57 : vector<8xf32> to vector<1x8xf32>
    %59 = arith.addf %46, %58 : vector<1x8xf32>
    %c0_39 = arith.constant 0 : index
    %c0_40 = arith.constant 0 : index
    %60 = memref.load %arg7[%c0_39, %c0_40] : memref<1x1xf32, #tpu.memory_space<smem>>
    %61 = vector.broadcast %60 : f32 to vector<1x8xf32>
    %62 = arith.addf %59, %61 : vector<1x8xf32>
    %c0_41 = arith.constant 0 : index
    %c0_42 = arith.constant 0 : index
    %63 = vector.load %arg8[%c0_41, %c0_42] : memref<1x8xf32, #tpu.memory_space<vmem>>, vector<1x8xf32>
    tpu.vector_store %arg8[%c0_41, %c0_42], %62 {strides = array<i32>} : memref<1x8xf32, #tpu.memory_space<vmem>>, vector<1x8xf32>,
    return
  }
  func.func @transform_0(%arg0: i32) -> (i32, i32) {
    %c0_i32 = arith.constant 0 : i32
    %c0_i32_0 = arith.constant 0 : i32
    return %c0_i32, %arg0 : i32, i32
  }
  func.func @transform_1(%arg0: i32) -> (i32, i32) {
    %c0_i32 = arith.constant 0 : i32
    %c0_i32_0 = arith.constant 0 : i32
    %c0_i32_1 = arith.constant 0 : i32
    return %c0_i32, %c0_i32_0 : i32, i32
  }
  func.func @transform_2(%arg0: i32) -> (i32, i32) {
    %c0_i32 = arith.constant 0 : i32
    %c0_i32_0 = arith.constant 0 : i32
    %c0_i32_1 = arith.constant 0 : i32
    return %c0_i32, %c0_i32_0 : i32, i32
  }
  func.func @transform_3(%arg0: i32) -> (i32, i32) {
    %c0_i32 = arith.constant 0 : i32
    %c0_i32_0 = arith.constant 0 : i32
    %c0_i32_1 = arith.constant 0 : i32
    return %c0_i32, %c0_i32_0 : i32, i32
  }
  func.func @transform_4(%arg0: i32) -> (i32, i32) {
    %c0_i32 = arith.constant 0 : i32
    %c0_i32_0 = arith.constant 0 : i32
    %c0_i32_1 = arith.constant 0 : i32
    return %c0_i32, %c0_i32_0 : i32, i32
  }
  func.func @transform_5(%arg0: i32) -> (i32, i32) {
    %c0_i32 = arith.constant 0 : i32
    %c0_i32_0 = arith.constant 0 : i32
    %c0_i32_1 = arith.constant 0 : i32
    return %c0_i32, %c0_i32_0 : i32, i32
  }
  func.func @transform_6(%arg0: i32) -> (i32, i32) {
    %c0_i32 = arith.constant 0 : i32
    %c0_i32_0 = arith.constant 0 : i32
    %c0_i32_1 = arith.constant 0 : i32
    return %c0_i32, %c0_i32_0 : i32, i32
  }
  func.func @transform_7(%arg0: i32) -> (i32, i32) {
    %c0_i32 = arith.constant 0 : i32
    %c0_i32_0 = arith.constant 0 : i32
    return %c0_i32, %arg0 : i32, i32
  }
}

</mosaic_0001>

<llo_original>
// kernel: critic_forward.1
$region0: #{critic_forward.1}
  #allocation0 [shape = 'u32[]', space=smem, size = 0x4, offset = 0x4, fixed_abs, tag = 'smem constant byte address 0x4 - core index']
  #allocation1 [shape = 'u32[144,128]{1,0:T(1,128)}', space=vmem, size = 0x12000, scoped, tag = 'internal scratch']
  #allocation2 [shape = 'f32[1,1]{1,0:T(1,128)S(6)}', space=smem, size = 0x200, scoped, tag = 'scoped memory for critic_forward.1']
  %s0 = inlined_call_operand.vmem [shape: bf16[32,8], index: 0, kind: input, shape index: {}]
  %s1 = inlined_call_operand.vmem [shape: bf16[512,32], index: 1, kind: input, shape index: {}]
  %s2 = inlined_call_operand.vmem [shape: f32[512,1], index: 2, kind: input, shape index: {}]
  %s3 = inlined_call_operand.vmem [shape: bf16[512,512], index: 3, kind: input, shape index: {}]
  %s4 = inlined_call_operand.vmem [shape: f32[512,1], index: 4, kind: input, shape index: {}]
  %s5 = inlined_call_operand.vmem [shape: f32[512,1], index: 5, kind: input, shape index: {}]
  %s6 = inlined_call_operand.<no memory space> [shape: f32[1,1], index: 6, kind: input, shape index: {}]
  %s7 = inlined_call_operand.hbm [shape: f32[1,8], index: 7, kind: output, shape index: {}]
  %s8 = sld [smem:[#allocation0]]
  $region38: #{critic_forward.1} parent=0
    _
  %s10 = ssub.s32 1, %s8
  %s11 = scalar_select 0, %s10, %s8
  %12 = sst [smem:[#allocation2]] %s6
  $region1: #{critic_forward.1} parent=0
    #allocation3 [shape = 'u8[512]{0}', space=vmem, size = 0x400, scoped, tag = 'output window, operand 0, single buffered']
    #allocation4 [shape = 's32[1]{0}', space=sflag, size = 0x4, scoped, tag = 'scoped memory for critic_forward.1']
    %13 = vsyncpa [#allocation4], 0
    // Predicated region
    $region2: #{critic_forward.1} parent=1 // pred_check
      _
    $region3: #{critic_forward.1} parent=1 // pred_check_branch
      %15 = sbr.rel (0) target = $region5
    $region4: #{critic_forward.1} parent=1 // pred_region
      _
    $region5: #{critic_forward.1} parent=1 // pred_fallthru
      _
    // Predicated region
    $region6: #{critic_forward.1} parent=1 // pred_check
      _
    $region7: #{critic_forward.1} parent=1 // pred_check_branch
      %17 = sbr.rel (0) target = $region9
    $region8: #{critic_forward.1} parent=1 // pred_region
      _
    $region9: #{critic_forward.1} parent=1 // pred_fallthru
      _
    // Predicated region
    $region10: #{critic_forward.1} parent=1 // pred_check
      _
    $region11: #{critic_forward.1} parent=1 // pred_check_branch
      %19 = sbr.rel (0) target = $region13
    $region12: #{critic_forward.1} parent=1 // pred_region
      _
    $region13: #{critic_forward.1} parent=1 // pred_fallthru
      _
    // Predicated region
    $region14: #{critic_forward.1} parent=1 // pred_check
      _
    $region15: #{critic_forward.1} parent=1 // pred_check_branch
      %21 = sbr.rel (0) target = $region17
    $region16: #{critic_forward.1} parent=1 // pred_region
      _
    $region17: #{critic_forward.1} parent=1 // pred_fallthru
      _
    // Predicated region
    $region18: #{critic_forward.1} parent=1 // pred_check
      _
    $region19: #{critic_forward.1} parent=1 // pred_check_branch
      %23 = sbr.rel (0) target = $region21
    $region20: #{critic_forward.1} parent=1 // pred_region
      _
    $region21: #{critic_forward.1} parent=1 // pred_fallthru
      _
    // Predicated region
    $region22: #{critic_forward.1} parent=1 // pred_check
      _
    $region23: #{critic_forward.1} parent=1 // pred_check_branch
      %25 = sbr.rel (0) target = $region25
    $region24: #{critic_forward.1} parent=1 // pred_region
      _
    $region25: #{critic_forward.1} parent=1 // pred_fallthru
      _
    // Predicated region
    $region26: #{critic_forward.1} parent=1 // pred_check
      _
    $region27: #{critic_forward.1} parent=1 // pred_check_branch
      %27 = sbr.rel (0) target = $region29
    $region28: #{critic_forward.1} parent=1 // pred_region
      _
    $region29: #{critic_forward.1} parent=1 // pred_fallthru
      _
    %v29 = vld [vmem:[%s0] sm:$0xf]
    %v30 = vld [vmem:[%s0 + $0x4] sm:$0xf]
    %v31 = vld [vmem:[%s0 + $0x8] sm:$0xf]
    %v32 = vld [vmem:[%s0 + $0xc] sm:$0xf]
    %v33 = vld [vmem:[%s1] sm:$0xf]
    %v34 = vld [vmem:[%s1 + $0x4] sm:$0xf]
    %v35 = vld [vmem:[%s1 + $0x8] sm:$0xf]
    %v36 = vld [vmem:[%s1 + $0xc] sm:$0xf]
    %v37 = vld [vmem:[%s1 + $0x10] sm:$0xf]
    %v38 = vld [vmem:[%s1 + $0x14] sm:$0xf]
    %v39 = vld [vmem:[%s1 + $0x18] sm:$0xf]
    %v40 = vld [vmem:[%s1 + $0x1c] sm:$0xf]
    %v41 = vld [vmem:[%s1 + $0x20] sm:$0xf]
    %v42 = vld [vmem:[%s1 + $0x24] sm:$0xf]
    %v43 = vld [vmem:[%s1 + $0x28] sm:$0xf]
    %v44 = vld [vmem:[%s1 + $0x2c] sm:$0xf]
    %v45 = vld [vmem:[%s1 + $0x30] sm:$0xf]
    %v46 = vld [vmem:[%s1 + $0x34] sm:$0xf]
    %v47 = vld [vmem:[%s1 + $0x38] sm:$0xf]
    %v48 = vld [vmem:[%s1 + $0x3c] sm:$0xf]
    %v49 = vld [vmem:[%s1 + $0x40] sm:$0xf]
    %v50 = vld [vmem:[%s1 + $0x44] sm:$0xf]
    %v51 = vld [vmem:[%s1 + $0x48] sm:$0xf]
    %v52 = vld [vmem:[%s1 + $0x4c] sm:$0xf]
    %v53 = vld [vmem:[%s1 + $0x50] sm:$0xf]
    %v54 = vld [vmem:[%s1 + $0x54] sm:$0xf]
    %v55 = vld [vmem:[%s1 + $0x58] sm:$0xf]
    %v56 = vld [vmem:[%s1 + $0x5c] sm:$0xf]
    %v57 = vld [vmem:[%s1 + $0x60] sm:$0xf]
    %v58 = vld [vmem:[%s1 + $0x64] sm:$0xf]
    %v59 = vld [vmem:[%s1 + $0x68] sm:$0xf]
    %v60 = vld [vmem:[%s1 + $0x6c] sm:$0xf]
    %v61 = vld [vmem:[%s1 + $0x70] sm:$0xf]
    %v62 = vld [vmem:[%s1 + $0x74] sm:$0xf]
    %v63 = vld [vmem:[%s1 + $0x78] sm:$0xf]
    %v64 = vld [vmem:[%s1 + $0x7c] sm:$0xf]
    %v65 = vld [vmem:[%s1 + $0x80] sm:$0xf]
    %v66 = vld [vmem:[%s1 + $0x84] sm:$0xf]
    %v67 = vld [vmem:[%s1 + $0x88] sm:$0xf]
    %v68 = vld [vmem:[%s1 + $0x8c] sm:$0xf]
    %v69 = vld [vmem:[%s1 + $0x90] sm:$0xf]
    %v70 = vld [vmem:[%s1 + $0x94] sm:$0xf]
    %v71 = vld [vmem:[%s1 + $0x98] sm:$0xf]
    %v72 = vld [vmem:[%s1 + $0x9c] sm:$0xf]
    %v73 = vld [vmem:[%s1 + $0xa0] sm:$0xf]
    %v74 = vld [vmem:[%s1 + $0xa4] sm:$0xf]
    %v75 = vld [vmem:[%s1 + $0xa8] sm:$0xf]
    %v76 = vld [vmem:[%s1 + $0xac] sm:$0xf]
    %v77 = vld [vmem:[%s1 + $0xb0] sm:$0xf]
    %v78 = vld [vmem:[%s1 + $0xb4] sm:$0xf]
    %v79 = vld [vmem:[%s1 + $0xb8] sm:$0xf]
    %v80 = vld [vmem:[%s1 + $0xbc] sm:$0xf]
    %v81 = vld [vmem:[%s1 + $0xc0] sm:$0xf]
    %v82 = vld [vmem:[%s1 + $0xc4] sm:$0xf]
    %v83 = vld [vmem:[%s1 + $0xc8] sm:$0xf]
    %v84 = vld [vmem:[%s1 + $0xcc] sm:$0xf]
    %v85 = vld [vmem:[%s1 + $0xd0] sm:$0xf]
    %v86 = vld [vmem:[%s1 + $0xd4] sm:$0xf]
    %v87 = vld [vmem:[%s1 + $0xd8] sm:$0xf]
    %v88 = vld [vmem:[%s1 + $0xdc] sm:$0xf]
    %v89 = vld [vmem:[%s1 + $0xe0] sm:$0xf]
    %v90 = vld [vmem:[%s1 + $0xe4] sm:$0xf]
    %v91 = vld [vmem:[%s1 + $0xe8] sm:$0xf]
    %v92 = vld [vmem:[%s1 + $0xec] sm:$0xf]
    %v93 = vld [vmem:[%s1 + $0xf0] sm:$0xf]
    %v94 = vld [vmem:[%s1 + $0xf4] sm:$0xf]
    %v95 = vld [vmem:[%s1 + $0xf8] sm:$0xf]
    %v96 = vld [vmem:[%s1 + $0xfc] sm:$0xf]
    %v97 = vld [vmem:[%s2] sm:$0xff]
    %v98 = vld [vmem:[%s2 + $0x8] sm:$0xff]
    %v99 = vld [vmem:[%s2 + $0x10] sm:$0xff]
    %v100 = vld [vmem:[%s2 + $0x18] sm:$0xff]
    %v101 = vld [vmem:[%s2 + $0x20] sm:$0xff]
    %v102 = vld [vmem:[%s2 + $0x28] sm:$0xff]
    %v103 = vld [vmem:[%s2 + $0x30] sm:$0xff]
    %v104 = vld [vmem:[%s2 + $0x38] sm:$0xff]
    %v105 = vld [vmem:[%s2 + $0x40] sm:$0xff]
    %v106 = vld [vmem:[%s2 + $0x48] sm:$0xff]
    %v107 = vld [vmem:[%s2 + $0x50] sm:$0xff]
    %v108 = vld [vmem:[%s2 + $0x58] sm:$0xff]
    %v109 = vld [vmem:[%s2 + $0x60] sm:$0xff]
    %v110 = vld [vmem:[%s2 + $0x68] sm:$0xff]
    %v111 = vld [vmem:[%s2 + $0x70] sm:$0xff]
    %v112 = vld [vmem:[%s2 + $0x78] sm:$0xff]
    %v113 = vld [vmem:[%s2 + $0x80] sm:$0xff]
    %v114 = vld [vmem:[%s2 + $0x88] sm:$0xff]
    %v115 = vld [vmem:[%s2 + $0x90] sm:$0xff]
    %v116 = vld [vmem:[%s2 + $0x98] sm:$0xff]
    %v117 = vld [vmem:[%s2 + $0xa0] sm:$0xff]
    %v118 = vld [vmem:[%s2 + $0xa8] sm:$0xff]
    %v119 = vld [vmem:[%s2 + $0xb0] sm:$0xff]
    %v120 = vld [vmem:[%s2 + $0xb8] sm:$0xff]
    %v121 = vld [vmem:[%s2 + $0xc0] sm:$0xff]
    %v122 = vld [vmem:[%s2 + $0xc8] sm:$0xff]
    %v123 = vld [vmem:[%s2 + $0xd0] sm:$0xff]
    %v124 = vld [vmem:[%s2 + $0xd8] sm:$0xff]
    %v125 = vld [vmem:[%s2 + $0xe0] sm:$0xff]
    %v126 = vld [vmem:[%s2 + $0xe8] sm:$0xff]
    %v127 = vld [vmem:[%s2 + $0xf0] sm:$0xff]
    %v128 = vld [vmem:[%s2 + $0xf8] sm:$0xff]
    %v129 = vld [vmem:[%s2 + $0x100] sm:$0xff]
    %v130 = vld [vmem:[%s2 + $0x108] sm:$0xff]
    %v131 = vld [vmem:[%s2 + $0x110] sm:$0xff]
    %v132 = vld [vmem:[%s2 + $0x118] sm:$0xff]
    %v133 = vld [vmem:[%s2 + $0x120] sm:$0xff]
    %v134 = vld [vmem:[%s2 + $0x128] sm:$0xff]
    %v135 = vld [vmem:[%s2 + $0x130] sm:$0xff]
    %v136 = vld [vmem:[%s2 + $0x138] sm:$0xff]
    %v137 = vld [vmem:[%s2 + $0x140] sm:$0xff]
    %v138 = vld [vmem:[%s2 + $0x148] sm:$0xff]
    %v139 = vld [vmem:[%s2 + $0x150] sm:$0xff]
    %v140 = vld [vmem:[%s2 + $0x158] sm:$0xff]
    %v141 = vld [vmem:[%s2 + $0x160] sm:$0xff]
    %v142 = vld [vmem:[%s2 + $0x168] sm:$0xff]
    %v143 = vld [vmem:[%s2 + $0x170] sm:$0xff]
    %v144 = vld [vmem:[%s2 + $0x178] sm:$0xff]
    %v145 = vld [vmem:[%s2 + $0x180] sm:$0xff]
    %v146 = vld [vmem:[%s2 + $0x188] sm:$0xff]
    %v147 = vld [vmem:[%s2 + $0x190] sm:$0xff]
    %v148 = vld [vmem:[%s2 + $0x198] sm:$0xff]
    %v149 = vld [vmem:[%s2 + $0x1a0] sm:$0xff]
    %v150 = vld [vmem:[%s2 + $0x1a8] sm:$0xff]
    %v151 = vld [vmem:[%s2 + $0x1b0] sm:$0xff]
    %v152 = vld [vmem:[%s2 + $0x1b8] sm:$0xff]
    %v153 = vld [vmem:[%s2 + $0x1c0] sm:$0xff]
    %v154 = vld [vmem:[%s2 + $0x1c8] sm:$0xff]
    %v155 = vld [vmem:[%s2 + $0x1d0] sm:$0xff]
    %v156 = vld [vmem:[%s2 + $0x1d8] sm:$0xff]
    %v157 = vld [vmem:[%s2 + $0x1e0] sm:$0xff]
    %v158 = vld [vmem:[%s2 + $0x1e8] sm:$0xff]
    %v159 = vld [vmem:[%s2 + $0x1f0] sm:$0xff]
    %v160 = vld [vmem:[%s2 + $0x1f8] sm:$0xff]
    %162 = vset.pattern.permute.xlu0 0
    %163 = vperm.xlu0 %162, %v97
    %v164 = vpop.permute.xlu0 %163
    %167 = vset.pattern.permute.xlu0 0
    %168 = vperm.xlu0 %167, %v98
    %v169 = vpop.permute.xlu0 %168
    %172 = vset.pattern.permute.xlu0 0
    %173 = vperm.xlu0 %172, %v99
    %v174 = vpop.permute.xlu0 %173
    %177 = vset.pattern.permute.xlu0 0
    %178 = vperm.xlu0 %177, %v100
    %v179 = vpop.permute.xlu0 %178
    %182 = vset.pattern.permute.xlu0 0
    %183 = vperm.xlu0 %182, %v101
    %v184 = vpop.permute.xlu0 %183
    %187 = vset.pattern.permute.xlu0 0
    %188 = vperm.xlu0 %187, %v102
    %v189 = vpop.permute.xlu0 %188
    %192 = vset.pattern.permute.xlu0 0
    %193 = vperm.xlu0 %192, %v103
    %v194 = vpop.permute.xlu0 %193
    %197 = vset.pattern.permute.xlu0 0
    %198 = vperm.xlu0 %197, %v104
    %v199 = vpop.permute.xlu0 %198
    %202 = vset.pattern.permute.xlu0 0
    %203 = vperm.xlu0 %202, %v105
    %v204 = vpop.permute.xlu0 %203
    %207 = vset.pattern.permute.xlu0 0
    %208 = vperm.xlu0 %207, %v106
    %v209 = vpop.permute.xlu0 %208
    %212 = vset.pattern.permute.xlu0 0
    %213 = vperm.xlu0 %212, %v107
    %v214 = vpop.permute.xlu0 %213
    %217 = vset.pattern.permute.xlu0 0
    %218 = vperm.xlu0 %217, %v108
    %v219 = vpop.permute.xlu0 %218
    %222 = vset.pattern.permute.xlu0 0
    %223 = vperm.xlu0 %222, %v109
    %v224 = vpop.permute.xlu0 %223
    %227 = vset.pattern.permute.xlu0 0
    %228 = vperm.xlu0 %227, %v110
    %v229 = vpop.permute.xlu0 %228
    %232 = vset.pattern.permute.xlu0 0
    %233 = vperm.xlu0 %232, %v111
    %v234 = vpop.permute.xlu0 %233
    %237 = vset.pattern.permute.xlu0 0
    %238 = vperm.xlu0 %237, %v112
    %v239 = vpop.permute.xlu0 %238
    %242 = vset.pattern.permute.xlu0 0
    %243 = vperm.xlu0 %242, %v113
    %v244 = vpop.permute.xlu0 %243
    %247 = vset.pattern.permute.xlu0 0
    %248 = vperm.xlu0 %247, %v114
    %v249 = vpop.permute.xlu0 %248
    %252 = vset.pattern.permute.xlu0 0
    %253 = vperm.xlu0 %252, %v115
    %v254 = vpop.permute.xlu0 %253
    %257 = vset.pattern.permute.xlu0 0
    %258 = vperm.xlu0 %257, %v116
    %v259 = vpop.permute.xlu0 %258
    %262 = vset.pattern.permute.xlu0 0
    %263 = vperm.xlu0 %262, %v117
    %v264 = vpop.permute.xlu0 %263
    %267 = vset.pattern.permute.xlu0 0
    %268 = vperm.xlu0 %267, %v118
    %v269 = vpop.permute.xlu0 %268
    %272 = vset.pattern.permute.xlu0 0
    %273 = vperm.xlu0 %272, %v119
    %v274 = vpop.permute.xlu0 %273
    %277 = vset.pattern.permute.xlu0 0
    %278 = vperm.xlu0 %277, %v120
    %v279 = vpop.permute.xlu0 %278
    %282 = vset.pattern.permute.xlu0 0
    %283 = vperm.xlu0 %282, %v121
    %v284 = vpop.permute.xlu0 %283
    %287 = vset.pattern.permute.xlu0 0
    %288 = vperm.xlu0 %287, %v122
    %v289 = vpop.permute.xlu0 %288
    %292 = vset.pattern.permute.xlu0 0
    %293 = vperm.xlu0 %292, %v123
    %v294 = vpop.permute.xlu0 %293
    %297 = vset.pattern.permute.xlu0 0
    %298 = vperm.xlu0 %297, %v124
    %v299 = vpop.permute.xlu0 %298
    %302 = vset.pattern.permute.xlu0 0
    %303 = vperm.xlu0 %302, %v125
    %v304 = vpop.permute.xlu0 %303
    %307 = vset.pattern.permute.xlu0 0
    %308 = vperm.xlu0 %307, %v126
    %v309 = vpop.permute.xlu0 %308
    %312 = vset.pattern.permute.xlu0 0
    %313 = vperm.xlu0 %312, %v127
    %v314 = vpop.permute.xlu0 %313
    %317 = vset.pattern.permute.xlu0 0
    %318 = vperm.xlu0 %317, %v128
    %v319 = vpop.permute.xlu0 %318
    %322 = vset.pattern.permute.xlu0 0
    %323 = vperm.xlu0 %322, %v129
    %v324 = vpop.permute.xlu0 %323
    %327 = vset.pattern.permute.xlu0 0
    %328 = vperm.xlu0 %327, %v130
    %v329 = vpop.permute.xlu0 %328
    %332 = vset.pattern.permute.xlu0 0
    %333 = vperm.xlu0 %332, %v131
    %v334 = vpop.permute.xlu0 %333
    %337 = vset.pattern.permute.xlu0 0
    %338 = vperm.xlu0 %337, %v132
    %v339 = vpop.permute.xlu0 %338
    %342 = vset.pattern.permute.xlu0 0
    %343 = vperm.xlu0 %342, %v133
    %v344 = vpop.permute.xlu0 %343
    %347 = vset.pattern.permute.xlu0 0
    %348 = vperm.xlu0 %347, %v134
    %v349 = vpop.permute.xlu0 %348
    %352 = vset.pattern.permute.xlu0 0
    %353 = vperm.xlu0 %352, %v135
    %v354 = vpop.permute.xlu0 %353
    %357 = vset.pattern.permute.xlu0 0
    %358 = vperm.xlu0 %357, %v136
    %v359 = vpop.permute.xlu0 %358
    %362 = vset.pattern.permute.xlu0 0
    %363 = vperm.xlu0 %362, %v137
    %v364 = vpop.permute.xlu0 %363
    %367 = vset.pattern.permute.xlu0 0
    %368 = vperm.xlu0 %367, %v138
    %v369 = vpop.permute.xlu0 %368
    %372 = vset.pattern.permute.xlu0 0
    %373 = vperm.xlu0 %372, %v139
    %v374 = vpop.permute.xlu0 %373
    %377 = vset.pattern.permute.xlu0 0
    %378 = vperm.xlu0 %377, %v140
    %v379 = vpop.permute.xlu0 %378
    %382 = vset.pattern.permute.xlu0 0
    %383 = vperm.xlu0 %382, %v141
    %v384 = vpop.permute.xlu0 %383
    %387 = vset.pattern.permute.xlu0 0
    %388 = vperm.xlu0 %387, %v142
    %v389 = vpop.permute.xlu0 %388
    %392 = vset.pattern.permute.xlu0 0
    %393 = vperm.xlu0 %392, %v143
    %v394 = vpop.permute.xlu0 %393
    %397 = vset.pattern.permute.xlu0 0
    %398 = vperm.xlu0 %397, %v144
    %v399 = vpop.permute.xlu0 %398
    %402 = vset.pattern.permute.xlu0 0
    %403 = vperm.xlu0 %402, %v145
    %v404 = vpop.permute.xlu0 %403
    %407 = vset.pattern.permute.xlu0 0
    %408 = vperm.xlu0 %407, %v146
    %v409 = vpop.permute.xlu0 %408
    %412 = vset.pattern.permute.xlu0 0
    %413 = vperm.xlu0 %412, %v147
    %v414 = vpop.permute.xlu0 %413
    %417 = vset.pattern.permute.xlu0 0
    %418 = vperm.xlu0 %417, %v148
    %v419 = vpop.permute.xlu0 %418
    %422 = vset.pattern.permute.xlu0 0
    %423 = vperm.xlu0 %422, %v149
    %v424 = vpop.permute.xlu0 %423
    %427 = vset.pattern.permute.xlu0 0
    %428 = vperm.xlu0 %427, %v150
    %v429 = vpop.permute.xlu0 %428
    %432 = vset.pattern.permute.xlu0 0
    %433 = vperm.xlu0 %432, %v151
    %v434 = vpop.permute.xlu0 %433
    %437 = vset.pattern.permute.xlu0 0
    %438 = vperm.xlu0 %437, %v152
    %v439 = vpop.permute.xlu0 %438
    %442 = vset.pattern.permute.xlu0 0
    %443 = vperm.xlu0 %442, %v153
    %v444 = vpop.permute.xlu0 %443
    %447 = vset.pattern.permute.xlu0 0
    %448 = vperm.xlu0 %447, %v154
    %v449 = vpop.permute.xlu0 %448
    %452 = vset.pattern.permute.xlu0 0
    %453 = vperm.xlu0 %452, %v155
    %v454 = vpop.permute.xlu0 %453
    %457 = vset.pattern.permute.xlu0 0
    %458 = vperm.xlu0 %457, %v156
    %v459 = vpop.permute.xlu0 %458
    %462 = vset.pattern.permute.xlu0 0
    %463 = vperm.xlu0 %462, %v157
    %v464 = vpop.permute.xlu0 %463
    %467 = vset.pattern.permute.xlu0 0
    %468 = vperm.xlu0 %467, %v158
    %v469 = vpop.permute.xlu0 %468
    %472 = vset.pattern.permute.xlu0 0
    %473 = vperm.xlu0 %472, %v159
    %v474 = vpop.permute.xlu0 %473
    %477 = vset.pattern.permute.xlu0 0
    %478 = vperm.xlu0 %477, %v160
    %v479 = vpop.permute.xlu0 %478
    %v545 = vunpack.c.l.b16 %v33
    %v546 = vunpack.c.l.b16 %v34
    %v547 = vunpack.c.l.b16 %v35
    %v548 = vunpack.c.l.b16 %v36
    %v549 = vunpack.c.l.b16 %v37
    %v550 = vunpack.c.l.b16 %v38
    %v551 = vunpack.c.l.b16 %v39
    %v552 = vunpack.c.l.b16 %v40
    %v553 = vunpack.c.l.b16 %v41
    %v554 = vunpack.c.l.b16 %v42
    %v555 = vunpack.c.l.b16 %v43
    %v556 = vunpack.c.l.b16 %v44
    %v557 = vunpack.c.l.b16 %v45
    %v558 = vunpack.c.l.b16 %v46
    %v559 = vunpack.c.l.b16 %v47
    %v560 = vunpack.c.l.b16 %v48
    %v561 = vunpack.c.l.b16 %v49
    %v562 = vunpack.c.l.b16 %v50
    %v563 = vunpack.c.l.b16 %v51
    %v564 = vunpack.c.l.b16 %v52
    %v565 = vunpack.c.l.b16 %v53
    %v566 = vunpack.c.l.b16 %v54
    %v567 = vunpack.c.l.b16 %v55
    %v568 = vunpack.c.l.b16 %v56
    %v569 = vunpack.c.l.b16 %v57
    %v570 = vunpack.c.l.b16 %v58
    %v571 = vunpack.c.l.b16 %v59
    %v572 = vunpack.c.l.b16 %v60
    %v573 = vunpack.c.l.b16 %v61
    %v574 = vunpack.c.l.b16 %v62
    %v575 = vunpack.c.l.b16 %v63
    %v576 = vunpack.c.l.b16 %v64
    %v577 = vunpack.c.l.b16 %v65
    %v578 = vunpack.c.l.b16 %v66
    %v579 = vunpack.c.l.b16 %v67
    %v580 = vunpack.c.l.b16 %v68
    %v581 = vunpack.c.l.b16 %v69
    %v582 = vunpack.c.l.b16 %v70
    %v583 = vunpack.c.l.b16 %v71
    %v584 = vunpack.c.l.b16 %v72
    %v585 = vunpack.c.l.b16 %v73
    %v586 = vunpack.c.l.b16 %v74
    %v587 = vunpack.c.l.b16 %v75
    %v588 = vunpack.c.l.b16 %v76
    %v589 = vunpack.c.l.b16 %v77
    %v590 = vunpack.c.l.b16 %v78
    %v591 = vunpack.c.l.b16 %v79
    %v592 = vunpack.c.l.b16 %v80
    %v593 = vunpack.c.l.b16 %v81
    %v594 = vunpack.c.l.b16 %v82
    %v595 = vunpack.c.l.b16 %v83
    %v596 = vunpack.c.l.b16 %v84
    %v597 = vunpack.c.l.b16 %v85
    %v598 = vunpack.c.l.b16 %v86
    %v599 = vunpack.c.l.b16 %v87
    %v600 = vunpack.c.l.b16 %v88
    %v601 = vunpack.c.l.b16 %v89
    %v602 = vunpack.c.l.b16 %v90
    %v603 = vunpack.c.l.b16 %v91
    %v604 = vunpack.c.l.b16 %v92
    %v605 = vunpack.c.l.b16 %v93
    %v606 = vunpack.c.l.b16 %v94
    %v607 = vunpack.c.l.b16 %v95
    %v608 = vunpack.c.l.b16 %v96
    %v609 = vpack.c.b16 %v546, %v545
    %v610 = vpack.c.b16 %v548, %v547
    %v611 = vpack.c.b16 %v550, %v549
    %v612 = vpack.c.b16 %v552, %v551
    %v613 = vpack.c.b16 %v554, %v553
    %v614 = vpack.c.b16 %v556, %v555
    %v615 = vpack.c.b16 %v558, %v557
    %v616 = vpack.c.b16 %v560, %v559
    %v617 = vpack.c.b16 %v562, %v561
    %v618 = vpack.c.b16 %v564, %v563
    %v619 = vpack.c.b16 %v566, %v565
    %v620 = vpack.c.b16 %v568, %v567
    %v621 = vpack.c.b16 %v570, %v569
    %v622 = vpack.c.b16 %v572, %v571
    %v623 = vpack.c.b16 %v574, %v573
    %v624 = vpack.c.b16 %v576, %v575
    %v625 = vpack.c.b16 %v578, %v577
    %v626 = vpack.c.b16 %v580, %v579
    %v627 = vpack.c.b16 %v582, %v581
    %v628 = vpack.c.b16 %v584, %v583
    %v629 = vpack.c.b16 %v586, %v585
    %v630 = vpack.c.b16 %v588, %v587
    %v631 = vpack.c.b16 %v590, %v589
    %v632 = vpack.c.b16 %v592, %v591
    %v633 = vpack.c.b16 %v594, %v593
    %v634 = vpack.c.b16 %v596, %v595
    %v635 = vpack.c.b16 %v598, %v597
    %v636 = vpack.c.b16 %v600, %v599
    %v637 = vpack.c.b16 %v602, %v601
    %v638 = vpack.c.b16 %v604, %v603
    %v639 = vpack.c.b16 %v606, %v605
    %v640 = vpack.c.b16 %v608, %v607
    %v645 = vunpack.c.l.b16 %v29
    %v646 = vunpack.c.l.b16 %v30
    %v647 = vunpack.c.l.b16 %v31
    %v648 = vunpack.c.l.b16 %v32
    %v649 = vpack.c.b16 %v646, %v645
    %v650 = vpack.c.b16 %v648, %v647
    %vm653 = vcmask 261120
    %v655 = vsel %vm653, %v609, 0
    %v658 = vsel %vm653, %v610, 0
    %v661 = vsel %vm653, %v611, 0
    %v664 = vsel %vm653, %v612, 0
    %v667 = vsel %vm653, %v613, 0
    %v670 = vsel %vm653, %v614, 0
    %v673 = vsel %vm653, %v615, 0
    %v676 = vsel %vm653, %v616, 0
    %v679 = vsel %vm653, %v617, 0
    %v682 = vsel %vm653, %v618, 0
    %v685 = vsel %vm653, %v619, 0
    %v688 = vsel %vm653, %v620, 0
    %v691 = vsel %vm653, %v621, 0
    %v694 = vsel %vm653, %v622, 0
    %v697 = vsel %vm653, %v623, 0
    %v700 = vsel %vm653, %v624, 0
    %v703 = vsel %vm653, %v625, 0
    %v706 = vsel %vm653, %v626, 0
    %v709 = vsel %vm653, %v627, 0
    %v712 = vsel %vm653, %v628, 0
    %v715 = vsel %vm653, %v629, 0
    %v718 = vsel %vm653, %v630, 0
    %v721 = vsel %vm653, %v631, 0
    %v724 = vsel %vm653, %v632, 0
    %v727 = vsel %vm653, %v633, 0
    %v730 = vsel %vm653, %v634, 0
    %v733 = vsel %vm653, %v635, 0
    %v736 = vsel %vm653, %v636, 0
    %v739 = vsel %vm653, %v637, 0
    %v742 = vsel %vm653, %v638, 0
    %v745 = vsel %vm653, %v639, 0
    %v748 = vsel %vm653, %v640, 0
    %750 = vmatprep.subr.bf16.mxu0 0
    %751 = vmatpush1.bf16.msra.mxu0 %v649
    %752 = vmatprep.subr.bf16.mxu0 0
    %753 = vmatpush1.bf16.msra.mxu0 %v650
    %754 = vmatprep.subr.bf16.mxu0 0
    %755 = vmatpush1.bf16.msra.mxu0 0
    %756 = vmatprep.subr.bf16.mxu0 0
    %757 = vmatpush1.bf16.msra.mxu0 0
    %758 = vmatprep.subr.bf16.mxu0 0
    %759 = vmatpush1.bf16.msra.mxu0 0
    %760 = vmatprep.subr.bf16.mxu0 0
    %761 = vmatpush1.bf16.msra.mxu0 0
    %762 = vmatprep.subr.bf16.mxu0 0
    %763 = vmatpush1.bf16.msra.mxu0 0
    %764 = vmatprep.subr.bf16.mxu0 0
    %765 = vmatpush1.bf16.msra.mxu0 0
    %766 = vmatprep.subr.bf16.mxu0 0
    %767 = vmatpush1.bf16.msra.mxu0 0
    %768 = vmatprep.subr.bf16.mxu0 0
    %769 = vmatpush1.bf16.msra.mxu0 0
    %770 = vmatprep.subr.bf16.mxu0 0
    %771 = vmatpush1.bf16.msra.mxu0 0
    %772 = vmatprep.subr.bf16.mxu0 0
    %773 = vmatpush1.bf16.msra.mxu0 0
    %774 = vmatprep.subr.bf16.mxu0 0
    %775 = vmatpush1.bf16.msra.mxu0 0
    %776 = vmatprep.subr.bf16.mxu0 0
    %777 = vmatpush1.bf16.msra.mxu0 0
    %778 = vmatprep.subr.bf16.mxu0 0
    %779 = vmatpush1.bf16.msra.mxu0 0
    %780 = vmatprep.subr.bf16.mxu0 0
    %781 = vmatpush1.bf16.msra.mxu0 0
    %782 = vmatprep.mubr.bf16.mxu0 0
    %783 = vmatmul.mubr.bf16.gmra.mrb[0].mxu0 %v655
    %v784 = vpop.f32.mrb[0].mxu0
    %v785 = vadd.f32 %v164, %v784
    %v786 = vpop.f32.mrb[0].mxu0
    %v787 = vpop.f32.mrb[0].mxu0
    %v788 = vadd.f32 %v169, %v787
    %v789 = vpop.f32.mrb[0].mxu0
    %790 = vmatprep.mubr.bf16.mxu0 0
    %791 = vmatmul.mubr.bf16.gmra.mrb[0].mxu0 %v658
    %v792 = vpop.f32.mrb[0].mxu0
    %v793 = vadd.f32 %v174, %v792
    %v794 = vpop.f32.mrb[0].mxu0
    %v795 = vpop.f32.mrb[0].mxu0
    %v796 = vadd.f32 %v179, %v795
    %v797 = vpop.f32.mrb[0].mxu0
    %798 = vmatprep.mubr.bf16.mxu0 0
    %799 = vmatmul.mubr.bf16.gmra.mrb[0].mxu0 %v661
    %v800 = vpop.f32.mrb[0].mxu0
    %v801 = vadd.f32 %v184, %v800
    %v802 = vpop.f32.mrb[0].mxu0
    %v803 = vpop.f32.mrb[0].mxu0
    %v804 = vadd.f32 %v189, %v803
    %v805 = vpop.f32.mrb[0].mxu0
    %806 = vmatprep.mubr.bf16.mxu0 0
    %807 = vmatmul.mubr.bf16.gmra.mrb[0].mxu0 %v664
    %v808 = vpop.f32.mrb[0].mxu0
    %v809 = vadd.f32 %v194, %v808
    %v810 = vpop.f32.mrb[0].mxu0
    %v811 = vpop.f32.mrb[0].mxu0
    %v812 = vadd.f32 %v199, %v811
    %v813 = vpop.f32.mrb[0].mxu0
    %814 = vmatprep.mubr.bf16.mxu0 0
    %815 = vmatmul.mubr.bf16.gmra.mrb[0].mxu0 %v667
    %v816 = vpop.f32.mrb[0].mxu0
    %v817 = vadd.f32 %v204, %v816
    %v818 = vpop.f32.mrb[0].mxu0
    %v819 = vpop.f32.mrb[0].mxu0
    %v820 = vadd.f32 %v209, %v819
    %v821 = vpop.f32.mrb[0].mxu0
    %822 = vmatprep.mubr.bf16.mxu0 0
    %823 = vmatmul.mubr.bf16.gmra.mrb[0].mxu0 %v670
    %v824 = vpop.f32.mrb[0].mxu0
    %v825 = vadd.f32 %v214, %v824
    %v826 = vpop.f32.mrb[0].mxu0
    %v827 = vpop.f32.mrb[0].mxu0
    %v828 = vadd.f32 %v219, %v827
    %v829 = vpop.f32.mrb[0].mxu0
    %830 = vmatprep.mubr.bf16.mxu0 0
    %831 = vmatmul.mubr.bf16.gmra.mrb[0].mxu0 %v673
    %v832 = vpop.f32.mrb[0].mxu0
    %v833 = vadd.f32 %v224, %v832
    %v834 = vpop.f32.mrb[0].mxu0
    %v835 = vpop.f32.mrb[0].mxu0
    %v836 = vadd.f32 %v229, %v835
    %v837 = vpop.f32.mrb[0].mxu0
    %838 = vmatprep.mubr.bf16.mxu0 0
    %839 = vmatmul.mubr.bf16.gmra.mrb[0].mxu0 %v676
    %v840 = vpop.f32.mrb[0].mxu0
    %v841 = vadd.f32 %v234, %v840
    %v842 = vpop.f32.mrb[0].mxu0
    %v843 = vpop.f32.mrb[0].mxu0
    %v844 = vadd.f32 %v239, %v843
    %v845 = vpop.f32.mrb[0].mxu0
    %846 = vmatprep.mubr.bf16.mxu0 0
    %847 = vmatmul.mubr.bf16.gmra.mrb[0].mxu0 %v679
    %v848 = vpop.f32.mrb[0].mxu0
    %v849 = vadd.f32 %v244, %v848
    %v850 = vpop.f32.mrb[0].mxu0
    %v851 = vpop.f32.mrb[0].mxu0
    %v852 = vadd.f32 %v249, %v851
    %v853 = vpop.f32.mrb[0].mxu0
    %854 = vmatprep.mubr.bf16.mxu0 0
    %855 = vmatmul.mubr.bf16.gmra.mrb[0].mxu0 %v682
    %v856 = vpop.f32.mrb[0].mxu0
    %v857 = vadd.f32 %v254, %v856
    %v858 = vpop.f32.mrb[0].mxu0
    %v859 = vpop.f32.mrb[0].mxu0
    %v860 = vadd.f32 %v259, %v859
    %v861 = vpop.f32.mrb[0].mxu0
    %862 = vmatprep.mubr.bf16.mxu0 0
    %863 = vmatmul.mubr.bf16.gmra.mrb[0].mxu0 %v685
    %v864 = vpop.f32.mrb[0].mxu0
    %v865 = vadd.f32 %v264, %v864
    %v866 = vpop.f32.mrb[0].mxu0
    %v867 = vpop.f32.mrb[0].mxu0
    %v868 = vadd.f32 %v269, %v867
    %v869 = vpop.f32.mrb[0].mxu0
    %870 = vmatprep.mubr.bf16.mxu0 0
    %871 = vmatmul.mubr.bf16.gmra.mrb[0].mxu0 %v688
    %v872 = vpop.f32.mrb[0].mxu0
    %v873 = vadd.f32 %v274, %v872
    %v874 = vpop.f32.mrb[0].mxu0
    %v875 = vpop.f32.mrb[0].mxu0
    %v876 = vadd.f32 %v279, %v875
    %v877 = vpop.f32.mrb[0].mxu0
    %878 = vmatprep.mubr.bf16.mxu0 0
    %879 = vmatmul.mubr.bf16.gmra.mrb[0].mxu0 %v691
    %v880 = vpop.f32.mrb[0].mxu0
    %v881 = vadd.f32 %v284, %v880
    %v882 = vpop.f32.mrb[0].mxu0
    %v883 = vpop.f32.mrb[0].mxu0
    %v884 = vadd.f32 %v289, %v883
    %v885 = vpop.f32.mrb[0].mxu0
    %886 = vmatprep.mubr.bf16.mxu0 0
    %887 = vmatmul.mubr.bf16.gmra.mrb[0].mxu0 %v694
    %v888 = vpop.f32.mrb[0].mxu0
    %v889 = vadd.f32 %v294, %v888
    %v890 = vpop.f32.mrb[0].mxu0
    %v891 = vpop.f32.mrb[0].mxu0
    %v892 = vadd.f32 %v299, %v891
    %v893 = vpop.f32.mrb[0].mxu0
    %894 = vmatprep.mubr.bf16.mxu0 0
    %895 = vmatmul.mubr.bf16.gmra.mrb[0].mxu0 %v697
    %v896 = vpop.f32.mrb[0].mxu0
    %v897 = vadd.f32 %v304, %v896
    %v898 = vpop.f32.mrb[0].mxu0
    %v899 = vpop.f32.mrb[0].mxu0
    %v900 = vadd.f32 %v309, %v899
    %v901 = vpop.f32.mrb[0].mxu0
    %902 = vmatprep.mubr.bf16.mxu0 0
    %903 = vmatmul.mubr.bf16.gmra.mrb[0].mxu0 %v700
    %v904 = vpop.f32.mrb[0].mxu0
    %v905 = vadd.f32 %v314, %v904
    %v906 = vpop.f32.mrb[0].mxu0
    %v907 = vpop.f32.mrb[0].mxu0
    %v908 = vadd.f32 %v319, %v907
    %v909 = vpop.f32.mrb[0].mxu0
    %910 = vmatprep.mubr.bf16.mxu0 0
    %911 = vmatmul.mubr.bf16.gmra.mrb[0].mxu0 %v703
    %v912 = vpop.f32.mrb[0].mxu0
    %v913 = vadd.f32 %v324, %v912
    %v914 = vpop.f32.mrb[0].mxu0
    %v915 = vpop.f32.mrb[0].mxu0
    %v916 = vadd.f32 %v329, %v915
    %v917 = vpop.f32.mrb[0].mxu0
    %918 = vmatprep.mubr.bf16.mxu0 0
    %919 = vmatmul.mubr.bf16.gmra.mrb[0].mxu0 %v706
    %v920 = vpop.f32.mrb[0].mxu0
    %v921 = vadd.f32 %v334, %v920
    %v922 = vpop.f32.mrb[0].mxu0
    %v923 = vpop.f32.mrb[0].mxu0
    %v924 = vadd.f32 %v339, %v923
    %v925 = vpop.f32.mrb[0].mxu0
    %926 = vmatprep.mubr.bf16.mxu0 0
    %927 = vmatmul.mubr.bf16.gmra.mrb[0].mxu0 %v709
    %v928 = vpop.f32.mrb[0].mxu0
    %v929 = vadd.f32 %v344, %v928
    %v930 = vpop.f32.mrb[0].mxu0
    %v931 = vpop.f32.mrb[0].mxu0
    %v932 = vadd.f32 %v349, %v931
    %v933 = vpop.f32.mrb[0].mxu0
    %934 = vmatprep.mubr.bf16.mxu0 0
    %935 = vmatmul.mubr.bf16.gmra.mrb[0].mxu0 %v712
    %v936 = vpop.f32.mrb[0].mxu0
    %v937 = vadd.f32 %v354, %v936
    %v938 = vpop.f32.mrb[0].mxu0
    %v939 = vpop.f32.mrb[0].mxu0
    %v940 = vadd.f32 %v359, %v939
    %v941 = vpop.f32.mrb[0].mxu0
    %942 = vmatprep.mubr.bf16.mxu0 0
    %943 = vmatmul.mubr.bf16.gmra.mrb[0].mxu0 %v715
    %v944 = vpop.f32.mrb[0].mxu0
    %v945 = vadd.f32 %v364, %v944
    %v946 = vpop.f32.mrb[0].mxu0
    %v947 = vpop.f32.mrb[0].mxu0
    %v948 = vadd.f32 %v369, %v947
    %v949 = vpop.f32.mrb[0].mxu0
    %950 = vmatprep.mubr.bf16.mxu0 0
    %951 = vmatmul.mubr.bf16.gmra.mrb[0].mxu0 %v718
    %v952 = vpop.f32.mrb[0].mxu0
    %v953 = vadd.f32 %v374, %v952
    %v954 = vpop.f32.mrb[0].mxu0
    %v955 = vpop.f32.mrb[0].mxu0
    %v956 = vadd.f32 %v379, %v955
    %v957 = vpop.f32.mrb[0].mxu0
    %958 = vmatprep.mubr.bf16.mxu0 0
    %959 = vmatmul.mubr.bf16.gmra.mrb[0].mxu0 %v721
    %v960 = vpop.f32.mrb[0].mxu0
    %v961 = vadd.f32 %v384, %v960
    %v962 = vpop.f32.mrb[0].mxu0
    %v963 = vpop.f32.mrb[0].mxu0
    %v964 = vadd.f32 %v389, %v963
    %v965 = vpop.f32.mrb[0].mxu0
    %966 = vmatprep.mubr.bf16.mxu0 0
    %967 = vmatmul.mubr.bf16.gmra.mrb[0].mxu0 %v724
    %v968 = vpop.f32.mrb[0].mxu0
    %v969 = vadd.f32 %v394, %v968
    %v970 = vpop.f32.mrb[0].mxu0
    %v971 = vpop.f32.mrb[0].mxu0
    %v972 = vadd.f32 %v399, %v971
    %v973 = vpop.f32.mrb[0].mxu0
    %974 = vmatprep.mubr.bf16.mxu0 0
    %975 = vmatmul.mubr.bf16.gmra.mrb[0].mxu0 %v727
    %v976 = vpop.f32.mrb[0].mxu0
    %v977 = vadd.f32 %v404, %v976
    %v978 = vpop.f32.mrb[0].mxu0
    %v979 = vpop.f32.mrb[0].mxu0
    %v980 = vadd.f32 %v409, %v979
    %v981 = vpop.f32.mrb[0].mxu0
    %982 = vmatprep.mubr.bf16.mxu0 0
    %983 = vmatmul.mubr.bf16.gmra.mrb[0].mxu0 %v730
    %v984 = vpop.f32.mrb[0].mxu0
    %v985 = vadd.f32 %v414, %v984
    %v986 = vpop.f32.mrb[0].mxu0
    %v987 = vpop.f32.mrb[0].mxu0
    %v988 = vadd.f32 %v419, %v987
    %v989 = vpop.f32.mrb[0].mxu0
    %990 = vmatprep.mubr.bf16.mxu0 0
    %991 = vmatmul.mubr.bf16.gmra.mrb[0].mxu0 %v733
    %v992 = vpop.f32.mrb[0].mxu0
    %v993 = vadd.f32 %v424, %v992
    %v994 = vpop.f32.mrb[0].mxu0
    %v995 = vpop.f32.mrb[0].mxu0
    %v996 = vadd.f32 %v429, %v995
    %v997 = vpop.f32.mrb[0].mxu0
    %998 = vmatprep.mubr.bf16.mxu0 0
    %999 = vmatmul.mubr.bf16.gmra.mrb[0].mxu0 %v736
    %v1000 = vpop.f32.mrb[0].mxu0
    %v1001 = vadd.f32 %v434, %v1000
    %v1002 = vpop.f32.mrb[0].mxu0
    %v1003 = vpop.f32.mrb[0].mxu0
    %v1004 = vadd.f32 %v439, %v1003
    %v1005 = vpop.f32.mrb[0].mxu0
    %1006 = vmatprep.mubr.bf16.mxu0 0
    %1007 = vmatmul.mubr.bf16.gmra.mrb[0].mxu0 %v739
    %v1008 = vpop.f32.mrb[0].mxu0
    %v1009 = vadd.f32 %v444, %v1008
    %v1010 = vpop.f32.mrb[0].mxu0
    %v1011 = vpop.f32.mrb[0].mxu0
    %v1012 = vadd.f32 %v449, %v1011
    %v1013 = vpop.f32.mrb[0].mxu0
    %1014 = vmatprep.mubr.bf16.mxu0 0
    %1015 = vmatmul.mubr.bf16.gmra.mrb[0].mxu0 %v742
    %v1016 = vpop.f32.mrb[0].mxu0
    %v1017 = vadd.f32 %v454, %v1016
    %v1018 = vpop.f32.mrb[0].mxu0
    %v1019 = vpop.f32.mrb[0].mxu0
    %v1020 = vadd.f32 %v459, %v1019
    %v1021 = vpop.f32.mrb[0].mxu0
    %1022 = vmatprep.mubr.bf16.mxu0 0
    %1023 = vmatmul.mubr.bf16.gmra.mrb[0].mxu0 %v745
    %v1024 = vpop.f32.mrb[0].mxu0
    %v1025 = vadd.f32 %v464, %v1024
    %v1026 = vpop.f32.mrb[0].mxu0
    %v1027 = vpop.f32.mrb[0].mxu0
    %v1028 = vadd.f32 %v469, %v1027
    %v1029 = vpop.f32.mrb[0].mxu0
    %1030 = vmatprep.mubr.bf16.mxu0 0
    %1031 = vmatmul.mubr.bf16.gmra.mrb[0].mxu0 %v748
    %v1032 = vpop.f32.mrb[0].mxu0
    %v1033 = vadd.f32 %v474, %v1032
    %v1034 = vpop.f32.mrb[0].mxu0
    %v1035 = vpop.f32.mrb[0].mxu0
    %v1036 = vadd.f32 %v479, %v1035
    %v1037 = vpop.f32.mrb[0].mxu0
    %1038 = vdwg.mxu0
    %v1039 = vmax.f32 %v785, 0.0
    %v1040 = vmax.f32 %v788, 0.0
    %v1041 = vmax.f32 %v793, 0.0
    %v1042 = vmax.f32 %v796, 0.0
    %v1043 = vmax.f32 %v801, 0.0
    %v1044 = vmax.f32 %v804, 0.0
    %v1045 = vmax.f32 %v809, 0.0
    %v1046 = vmax.f32 %v812, 0.0
    %v1047 = vmax.f32 %v817, 0.0
    %v1048 = vmax.f32 %v820, 0.0
    %v1049 = vmax.f32 %v825, 0.0
    %v1050 = vmax.f32 %v828, 0.0
    %v1051 = vmax.f32 %v833, 0.0
    %v1052 = vmax.f32 %v836, 0.0
    %v1053 = vmax.f32 %v841, 0.0
    %v1054 = vmax.f32 %v844, 0.0
    %v1055 = vmax.f32 %v849, 0.0
    %v1056 = vmax.f32 %v852, 0.0
    %v1057 = vmax.f32 %v857, 0.0
    %v1058 = vmax.f32 %v860, 0.0
    %v1059 = vmax.f32 %v865, 0.0
    %v1060 = vmax.f32 %v868, 0.0
    %v1061 = vmax.f32 %v873, 0.0
    %v1062 = vmax.f32 %v876, 0.0
    %v1063 = vmax.f32 %v881, 0.0
    %v1064 = vmax.f32 %v884, 0.0
    %v1065 = vmax.f32 %v889, 0.0
    %v1066 = vmax.f32 %v892, 0.0
    %v1067 = vmax.f32 %v897, 0.0
    %v1068 = vmax.f32 %v900, 0.0
    %v1069 = vmax.f32 %v905, 0.0
    %v1070 = vmax.f32 %v908, 0.0
    %v1071 = vmax.f32 %v913, 0.0
    %v1072 = vmax.f32 %v916, 0.0
    %v1073 = vmax.f32 %v921, 0.0
    %v1074 = vmax.f32 %v924, 0.0
    %v1075 = vmax.f32 %v929, 0.0
    %v1076 = vmax.f32 %v932, 0.0
    %v1077 = vmax.f32 %v937, 0.0
    %v1078 = vmax.f32 %v940, 0.0
    %v1079 = vmax.f32 %v945, 0.0
    %v1080 = vmax.f32 %v948, 0.0
    %v1081 = vmax.f32 %v953, 0.0
    %v1082 = vmax.f32 %v956, 0.0
    %v1083 = vmax.f32 %v961, 0.0
    %v1084 = vmax.f32 %v964, 0.0
    %v1085 = vmax.f32 %v969, 0.0
    %v1086 = vmax.f32 %v972, 0.0
    %v1087 = vmax.f32 %v977, 0.0
    %v1088 = vmax.f32 %v980, 0.0
    %v1089 = vmax.f32 %v985, 0.0
    %v1090 = vmax.f32 %v988, 0.0
    %v1091 = vmax.f32 %v993, 0.0
    %v1092 = vmax.f32 %v996, 0.0
    %v1093 = vmax.f32 %v1001, 0.0
    %v1094 = vmax.f32 %v1004, 0.0
    %v1095 = vmax.f32 %v1009, 0.0
    %v1096 = vmax.f32 %v1012, 0.0
    %v1097 = vmax.f32 %v1017, 0.0
    %v1098 = vmax.f32 %v1020, 0.0
    %v1099 = vmax.f32 %v1025, 0.0
    %v1100 = vmax.f32 %v1028, 0.0
    %v1101 = vmax.f32 %v1033, 0.0
    %v1102 = vmax.f32 %v1036, 0.0
    %v1103 = vpack.c.bf16 %v1040, %v1039
    %v1104 = vpack.c.bf16 %v1042, %v1041
    %v1105 = vpack.c.bf16 %v1044, %v1043
    %v1106 = vpack.c.bf16 %v1046, %v1045
    %v1107 = vpack.c.bf16 %v1048, %v1047
    %v1108 = vpack.c.bf16 %v1050, %v1049
    %v1109 = vpack.c.bf16 %v1052, %v1051
    %v1110 = vpack.c.bf16 %v1054, %v1053
    %v1111 = vpack.c.bf16 %v1056, %v1055
    %v1112 = vpack.c.bf16 %v1058, %v1057
    %v1113 = vpack.c.bf16 %v1060, %v1059
    %v1114 = vpack.c.bf16 %v1062, %v1061
    %v1115 = vpack.c.bf16 %v1064, %v1063
    %v1116 = vpack.c.bf16 %v1066, %v1065
    %v1117 = vpack.c.bf16 %v1068, %v1067
    %v1118 = vpack.c.bf16 %v1070, %v1069
    %v1119 = vpack.c.bf16 %v1072, %v1071
    %v1120 = vpack.c.bf16 %v1074, %v1073
    %v1121 = vpack.c.bf16 %v1076, %v1075
    %v1122 = vpack.c.bf16 %v1078, %v1077
    %v1123 = vpack.c.bf16 %v1080, %v1079
    %v1124 = vpack.c.bf16 %v1082, %v1081
    %v1125 = vpack.c.bf16 %v1084, %v1083
    %v1126 = vpack.c.bf16 %v1086, %v1085
    %v1127 = vpack.c.bf16 %v1088, %v1087
    %v1128 = vpack.c.bf16 %v1090, %v1089
    %v1129 = vpack.c.bf16 %v1092, %v1091
    %v1130 = vpack.c.bf16 %v1094, %v1093
    %v1131 = vpack.c.bf16 %v1096, %v1095
    %v1132 = vpack.c.bf16 %v1098, %v1097
    %v1133 = vpack.c.bf16 %v1100, %v1099
    %v1134 = vpack.c.bf16 %v1102, %v1101
    %v1135 = vld [vmem:[%s3] sm:$0xff]
    %v1136 = vld [vmem:[%s3 + $0x8] sm:$0xff]
    %v1137 = vld [vmem:[%s3 + $0x10] sm:$0xff]
    %v1138 = vld [vmem:[%s3 + $0x18] sm:$0xff]
    %v1139 = vld [vmem:[%s3 + $0x20] sm:$0xff]
    %v1140 = vld [vmem:[%s3 + $0x28] sm:$0xff]
    %v1141 = vld [vmem:[%s3 + $0x30] sm:$0xff]
    %v1142 = vld [vmem:[%s3 + $0x38] sm:$0xff]
    %v1143 = vld [vmem:[%s3 + $0x40] sm:$0xff]
    %v1144 = vld [vmem:[%s3 + $0x48] sm:$0xff]
    %v1145 = vld [vmem:[%s3 + $0x50] sm:$0xff]
    %v1146 = vld [vmem:[%s3 + $0x58] sm:$0xff]
    %v1147 = vld [vmem:[%s3 + $0x60] sm:$0xff]
    %v1148 = vld [vmem:[%s3 + $0x68] sm:$0xff]
    %v1149 = vld [vmem:[%s3 + $0x70] sm:$0xff]
    %v1150 = vld [vmem:[%s3 + $0x78] sm:$0xff]
    %v1151 = vld [vmem:[%s3 + $0x80] sm:$0xff]
    %v1152 = vld [vmem:[%s3 + $0x88] sm:$0xff]
    %v1153 = vld [vmem:[%s3 + $0x90] sm:$0xff]
    %v1154 = vld [vmem:[%s3 + $0x98] sm:$0xff]
    %v1155 = vld [vmem:[%s3 + $0xa0] sm:$0xff]
    %v1156 = vld [vmem:[%s3 + $0xa8] sm:$0xff]
    %v1157 = vld [vmem:[%s3 + $0xb0] sm:$0xff]
    %v1158 = vld [vmem:[%s3 + $0xb8] sm:$0xff]
    %v1159 = vld [vmem:[%s3 + $0xc0] sm:$0xff]
    %v1160 = vld [vmem:[%s3 + $0xc8] sm:$0xff]
    %v1161 = vld [vmem:[%s3 + $0xd0] sm:$0xff]
    %v1162 = vld [vmem:[%s3 + $0xd8] sm:$0xff]
    %v1163 = vld [vmem:[%s3 + $0xe0] sm:$0xff]
    %v1164 = vld [vmem:[%s3 + $0xe8] sm:$0xff]
    %v1165 = vld [vmem:[%s3 + $0xf0] sm:$0xff]
    %v1166 = vld [vmem:[%s3 + $0xf8] sm:$0xff]
    %v1167 = vld [vmem:[%s4] sm:$0xff]
    %v1168 = vld [vmem:[%s4 + $0x8] sm:$0xff]
    %v1169 = vld [vmem:[%s4 + $0x10] sm:$0xff]
    %v1170 = vld [vmem:[%s4 + $0x18] sm:$0xff]
    %v1171 = vld [vmem:[%s4 + $0x20] sm:$0xff]
    %v1172 = vld [vmem:[%s4 + $0x28] sm:$0xff]
    %v1173 = vld [vmem:[%s4 + $0x30] sm:$0xff]
    %v1174 = vld [vmem:[%s4 + $0x38] sm:$0xff]
    %v1175 = vld [vmem:[%s4 + $0x40] sm:$0xff]
    %v1176 = vld [vmem:[%s4 + $0x48] sm:$0xff]
    %v1177 = vld [vmem:[%s4 + $0x50] sm:$0xff]
    %v1178 = vld [vmem:[%s4 + $0x58] sm:$0xff]
    %v1179 = vld [vmem:[%s4 + $0x60] sm:$0xff]
    %v1180 = vld [vmem:[%s4 + $0x68] sm:$0xff]
    %v1181 = vld [vmem:[%s4 + $0x70] sm:$0xff]
    %v1182 = vld [vmem:[%s4 + $0x78] sm:$0xff]
    %1184 = vset.pattern.permute.xlu0 0
    %1185 = vperm.xlu0 %1184, %v1167
    %v1186 = vpop.permute.xlu0 %1185
    %1189 = vset.pattern.permute.xlu0 0
    %1190 = vperm.xlu0 %1189, %v1168
    %v1191 = vpop.permute.xlu0 %1190
    %1194 = vset.pattern.permute.xlu0 0
    %1195 = vperm.xlu0 %1194, %v1169
    %v1196 = vpop.permute.xlu0 %1195
    %1199 = vset.pattern.permute.xlu0 0
    %1200 = vperm.xlu0 %1199, %v1170
    %v1201 = vpop.permute.xlu0 %1200
    %1204 = vset.pattern.permute.xlu0 0
    %1205 = vperm.xlu0 %1204, %v1171
    %v1206 = vpop.permute.xlu0 %1205
    %1209 = vset.pattern.permute.xlu0 0
    %1210 = vperm.xlu0 %1209, %v1172
    %v1211 = vpop.permute.xlu0 %1210
    %1214 = vset.pattern.permute.xlu0 0
    %1215 = vperm.xlu0 %1214, %v1173
    %v1216 = vpop.permute.xlu0 %1215
    %1219 = vset.pattern.permute.xlu0 0
    %1220 = vperm.xlu0 %1219, %v1174
    %v1221 = vpop.permute.xlu0 %1220
    %1224 = vset.pattern.permute.xlu0 0
    %1225 = vperm.xlu0 %1224, %v1175
    %v1226 = vpop.permute.xlu0 %1225
    %1229 = vset.pattern.permute.xlu0 0
    %1230 = vperm.xlu0 %1229, %v1176
    %v1231 = vpop.permute.xlu0 %1230
    %1234 = vset.pattern.permute.xlu0 0
    %1235 = vperm.xlu0 %1234, %v1177
    %v1236 = vpop.permute.xlu0 %1235
    %1239 = vset.pattern.permute.xlu0 0
    %1240 = vperm.xlu0 %1239, %v1178
    %v1241 = vpop.permute.xlu0 %1240
    %1244 = vset.pattern.permute.xlu0 0
    %1245 = vperm.xlu0 %1244, %v1179
    %v1246 = vpop.permute.xlu0 %1245
    %1249 = vset.pattern.permute.xlu0 0
    %1250 = vperm.xlu0 %1249, %v1180
    %v1251 = vpop.permute.xlu0 %1250
    %1254 = vset.pattern.permute.xlu0 0
    %1255 = vperm.xlu0 %1254, %v1181
    %v1256 = vpop.permute.xlu0 %1255
    %1259 = vset.pattern.permute.xlu0 0
    %1260 = vperm.xlu0 %1259, %v1182
    %v1261 = vpop.permute.xlu0 %1260
    %v1295 = vunpack.c.l.b16 %v1135
    %v1296 = vunpack.c.h.b16 %v1135
    %v1297 = vunpack.c.l.b16 %v1136
    %v1298 = vunpack.c.h.b16 %v1136
    %v1299 = vunpack.c.l.b16 %v1137
    %v1300 = vunpack.c.h.b16 %v1137
    %v1301 = vunpack.c.l.b16 %v1138
    %v1302 = vunpack.c.h.b16 %v1138
    %v1303 = vunpack.c.l.b16 %v1139
    %v1304 = vunpack.c.h.b16 %v1139
    %v1305 = vunpack.c.l.b16 %v1140
    %v1306 = vunpack.c.h.b16 %v1140
    %v1307 = vunpack.c.l.b16 %v1141
    %v1308 = vunpack.c.h.b16 %v1141
    %v1309 = vunpack.c.l.b16 %v1142
    %v1310 = vunpack.c.h.b16 %v1142
    %v1311 = vunpack.c.l.b16 %v1143
    %v1312 = vunpack.c.h.b16 %v1143
    %v1313 = vunpack.c.l.b16 %v1144
    %v1314 = vunpack.c.h.b16 %v1144
    %v1315 = vunpack.c.l.b16 %v1145
    %v1316 = vunpack.c.h.b16 %v1145
    %v1317 = vunpack.c.l.b16 %v1146
    %v1318 = vunpack.c.h.b16 %v1146
    %v1319 = vunpack.c.l.b16 %v1147
    %v1320 = vunpack.c.h.b16 %v1147
    %v1321 = vunpack.c.l.b16 %v1148
    %v1322 = vunpack.c.h.b16 %v1148
    %v1323 = vunpack.c.l.b16 %v1149
    %v1324 = vunpack.c.h.b16 %v1149
    %v1325 = vunpack.c.l.b16 %v1150
    %v1326 = vunpack.c.h.b16 %v1150
    %v1327 = vunpack.c.l.b16 %v1151
    %v1328 = vunpack.c.h.b16 %v1151
    %v1329 = vunpack.c.l.b16 %v1152
    %v1330 = vunpack.c.h.b16 %v1152
    %v1331 = vunpack.c.l.b16 %v1153
    %v1332 = vunpack.c.h.b16 %v1153
    %v1333 = vunpack.c.l.b16 %v1154
    %v1334 = vunpack.c.h.b16 %v1154
    %v1335 = vunpack.c.l.b16 %v1155
    %v1336 = vunpack.c.h.b16 %v1155
    %v1337 = vunpack.c.l.b16 %v1156
    %v1338 = vunpack.c.h.b16 %v1156
    %v1339 = vunpack.c.l.b16 %v1157
    %v1340 = vunpack.c.h.b16 %v1157
    %v1341 = vunpack.c.l.b16 %v1158
    %v1342 = vunpack.c.h.b16 %v1158
    %v1343 = vunpack.c.l.b16 %v1159
    %v1344 = vunpack.c.h.b16 %v1159
    %v1345 = vunpack.c.l.b16 %v1160
    %v1346 = vunpack.c.h.b16 %v1160
    %v1347 = vunpack.c.l.b16 %v1161
    %v1348 = vunpack.c.h.b16 %v1161
    %v1349 = vunpack.c.l.b16 %v1162
    %v1350 = vunpack.c.h.b16 %v1162
    %v1351 = vunpack.c.l.b16 %v1163
    %v1352 = vunpack.c.h.b16 %v1163
    %v1353 = vunpack.c.l.b16 %v1164
    %v1354 = vunpack.c.h.b16 %v1164
    %v1355 = vunpack.c.l.b16 %v1165
    %v1356 = vunpack.c.h.b16 %v1165
    %v1357 = vunpack.c.l.b16 %v1166
    %v1358 = vunpack.c.h.b16 %v1166
    %v1359 = vpack.c.b16 %v1299, %v1295
    %v1360 = vpack.c.b16 %v1300, %v1296
    %v1361 = vpack.c.b16 %v1301, %v1297
    %v1362 = vpack.c.b16 %v1302, %v1298
    %v1363 = vpack.c.b16 %v1307, %v1303
    %v1364 = vpack.c.b16 %v1308, %v1304
    %v1365 = vpack.c.b16 %v1309, %v1305
    %v1366 = vpack.c.b16 %v1310, %v1306
    %v1367 = vpack.c.b16 %v1315, %v1311
    %v1368 = vpack.c.b16 %v1316, %v1312
    %v1369 = vpack.c.b16 %v1317, %v1313
    %v1370 = vpack.c.b16 %v1318, %v1314
    %v1371 = vpack.c.b16 %v1323, %v1319
    %v1372 = vpack.c.b16 %v1324, %v1320
    %v1373 = vpack.c.b16 %v1325, %v1321
    %v1374 = vpack.c.b16 %v1326, %v1322
    %v1375 = vpack.c.b16 %v1331, %v1327
    %v1376 = vpack.c.b16 %v1332, %v1328
    %v1377 = vpack.c.b16 %v1333, %v1329
    %v1378 = vpack.c.b16 %v1334, %v1330
    %v1379 = vpack.c.b16 %v1339, %v1335
    %v1380 = vpack.c.b16 %v1340, %v1336
    %v1381 = vpack.c.b16 %v1341, %v1337
    %v1382 = vpack.c.b16 %v1342, %v1338
    %v1383 = vpack.c.b16 %v1347, %v1343
    %v1384 = vpack.c.b16 %v1348, %v1344
    %v1385 = vpack.c.b16 %v1349, %v1345
    %v1386 = vpack.c.b16 %v1350, %v1346
    %v1387 = vpack.c.b16 %v1355, %v1351
    %v1388 = vpack.c.b16 %v1356, %v1352
    %v1389 = vpack.c.b16 %v1357, %v1353
    %v1390 = vpack.c.b16 %v1358, %v1354
    %1423 = vmatprep.subr.bf16.mxu0 0
    %1424 = vmatpush1.bf16.msra.mxu0 %v1103
    %1425 = vmatprep.subr.bf16.mxu0 0
    %1426 = vmatpush1.bf16.msra.mxu0 %v1104
    %1427 = vmatprep.subr.bf16.mxu0 0
    %1428 = vmatpush1.bf16.msra.mxu0 %v1105
    %1429 = vmatprep.subr.bf16.mxu0 0
    %1430 = vmatpush1.bf16.msra.mxu0 %v1106
    %1431 = vmatprep.subr.bf16.mxu0 0
    %1432 = vmatpush1.bf16.msra.mxu0 %v1107
    %1433 = vmatprep.subr.bf16.mxu0 0
    %1434 = vmatpush1.bf16.msra.mxu0 %v1108
    %1435 = vmatprep.subr.bf16.mxu0 0
    %1436 = vmatpush1.bf16.msra.mxu0 %v1109
    %1437 = vmatprep.subr.bf16.mxu0 0
    %1438 = vmatpush1.bf16.msra.mxu0 %v1110
    %1439 = vmatprep.subr.bf16.mxu0 0
    %1440 = vmatpush1.bf16.msra.mxu0 %v1111
    %1441 = vmatprep.subr.bf16.mxu0 0
    %1442 = vmatpush1.bf16.msra.mxu0 %v1112
    %1443 = vmatprep.subr.bf16.mxu0 0
    %1444 = vmatpush1.bf16.msra.mxu0 %v1113
    %1445 = vmatprep.subr.bf16.mxu0 0
    %1446 = vmatpush1.bf16.msra.mxu0 %v1114
    %1447 = vmatprep.subr.bf16.mxu0 0
    %1448 = vmatpush1.bf16.msra.mxu0 %v1115
    %1449 = vmatprep.subr.bf16.mxu0 0
    %1450 = vmatpush1.bf16.msra.mxu0 %v1116
    %1451 = vmatprep.subr.bf16.mxu0 0
    %1452 = vmatpush1.bf16.msra.mxu0 %v1117
    %1453 = vmatprep.subr.bf16.mxu0 0
    %1454 = vmatpush1.bf16.msra.mxu0 %v1118
    %1455 = vmatprep.mubr.bf16.mxu0 %v1360
    %1456 = vmatmul.mubr.bf16.gmra.mrb[0].mxu0 %v1359
    %v1457 = vpop.f32.mrb[0].mxu0
    %v1458 = vadd.f32 %v1186, %v1457
    %v1459 = vpop.f32.mrb[0].mxu0
    %v1460 = vpop.f32.mrb[0].mxu0
    %v1461 = vadd.f32 %v1191, %v1460
    %v1462 = vpop.f32.mrb[0].mxu0
    %1463 = vmatprep.mubr.bf16.mxu0 %v1364
    %1464 = vmatmul.mubr.bf16.gmra.mrb[0].mxu0 %v1363
    %v1465 = vpop.f32.mrb[0].mxu0
    %v1466 = vadd.f32 %v1196, %v1465
    %v1467 = vpop.f32.mrb[0].mxu0
    %v1468 = vpop.f32.mrb[0].mxu0
    %v1469 = vadd.f32 %v1201, %v1468
    %v1470 = vpop.f32.mrb[0].mxu0
    %1471 = vmatprep.mubr.bf16.mxu0 %v1368
    %1472 = vmatmul.mubr.bf16.gmra.mrb[0].mxu0 %v1367
    %v1473 = vpop.f32.mrb[0].mxu0
    %v1474 = vadd.f32 %v1206, %v1473
    %v1475 = vpop.f32.mrb[0].mxu0
    %v1476 = vpop.f32.mrb[0].mxu0
    %v1477 = vadd.f32 %v1211, %v1476
    %v1478 = vpop.f32.mrb[0].mxu0
    %1479 = vmatprep.mubr.bf16.mxu0 %v1372
    %1480 = vmatmul.mubr.bf16.gmra.mrb[0].mxu0 %v1371
    %v1481 = vpop.f32.mrb[0].mxu0
    %v1482 = vadd.f32 %v1216, %v1481
    %v1483 = vpop.f32.mrb[0].mxu0
    %v1484 = vpop.f32.mrb[0].mxu0
    %v1485 = vadd.f32 %v1221, %v1484
    %v1486 = vpop.f32.mrb[0].mxu0
    %1487 = vmatprep.mubr.bf16.mxu0 %v1376
    %1488 = vmatmul.mubr.bf16.gmra.mrb[0].mxu0 %v1375
    %v1489 = vpop.f32.mrb[0].mxu0
    %v1490 = vadd.f32 %v1226, %v1489
    %v1491 = vpop.f32.mrb[0].mxu0
    %v1492 = vpop.f32.mrb[0].mxu0
    %v1493 = vadd.f32 %v1231, %v1492
    %v1494 = vpop.f32.mrb[0].mxu0
    %1495 = vmatprep.mubr.bf16.mxu0 %v1380
    %1496 = vmatmul.mubr.bf16.gmra.mrb[0].mxu0 %v1379
    %v1497 = vpop.f32.mrb[0].mxu0
    %v1498 = vadd.f32 %v1236, %v1497
    %v1499 = vpop.f32.mrb[0].mxu0
    %v1500 = vpop.f32.mrb[0].mxu0
    %v1501 = vadd.f32 %v1241, %v1500
    %v1502 = vpop.f32.mrb[0].mxu0
    %1503 = vmatprep.mubr.bf16.mxu0 %v1384
    %1504 = vmatmul.mubr.bf16.gmra.mrb[0].mxu0 %v1383
    %v1505 = vpop.f32.mrb[0].mxu0
    %v1506 = vadd.f32 %v1246, %v1505
    %v1507 = vpop.f32.mrb[0].mxu0
    %v1508 = vpop.f32.mrb[0].mxu0
    %v1509 = vadd.f32 %v1251, %v1508
    %v1510 = vpop.f32.mrb[0].mxu0
    %1511 = vmatprep.mubr.bf16.mxu0 %v1388
    %1512 = vmatmul.mubr.bf16.gmra.mrb[0].mxu0 %v1387
    %v1513 = vpop.f32.mrb[0].mxu0
    %v1514 = vadd.f32 %v1256, %v1513
    %v1515 = vpop.f32.mrb[0].mxu0
    %v1516 = vpop.f32.mrb[0].mxu0
    %v1517 = vadd.f32 %v1261, %v1516
    %v1518 = vpop.f32.mrb[0].mxu0
    %1519 = vdwg.mxu0
    %1520 = vmatprep.subr.bf16.mxu0 0
    %1521 = vmatpush1.bf16.msra.mxu0 %v1119
    %1522 = vmatprep.subr.bf16.mxu0 0
    %1523 = vmatpush1.bf16.msra.mxu0 %v1120
    %1524 = vmatprep.subr.bf16.mxu0 0
    %1525 = vmatpush1.bf16.msra.mxu0 %v1121
    %1526 = vmatprep.subr.bf16.mxu0 0
    %1527 = vmatpush1.bf16.msra.mxu0 %v1122
    %1528 = vmatprep.subr.bf16.mxu0 0
    %1529 = vmatpush1.bf16.msra.mxu0 %v1123
    %1530 = vmatprep.subr.bf16.mxu0 0
    %1531 = vmatpush1.bf16.msra.mxu0 %v1124
    %1532 = vmatprep.subr.bf16.mxu0 0
    %1533 = vmatpush1.bf16.msra.mxu0 %v1125
    %1534 = vmatprep.subr.bf16.mxu0 0
    %1535 = vmatpush1.bf16.msra.mxu0 %v1126
    %1536 = vmatprep.subr.bf16.mxu0 0
    %1537 = vmatpush1.bf16.msra.mxu0 %v1127
    %1538 = vmatprep.subr.bf16.mxu0 0
    %1539 = vmatpush1.bf16.msra.mxu0 %v1128
    %1540 = vmatprep.subr.bf16.mxu0 0
    %1541 = vmatpush1.bf16.msra.mxu0 %v1129
    %1542 = vmatprep.subr.bf16.mxu0 0
    %1543 = vmatpush1.bf16.msra.mxu0 %v1130
    %1544 = vmatprep.subr.bf16.mxu0 0
    %1545 = vmatpush1.bf16.msra.mxu0 %v1131
    %1546 = vmatprep.subr.bf16.mxu0 0
    %1547 = vmatpush1.bf16.msra.mxu0 %v1132
    %1548 = vmatprep.subr.bf16.mxu0 0
    %1549 = vmatpush1.bf16.msra.mxu0 %v1133
    %1550 = vmatprep.subr.bf16.mxu0 0
    %1551 = vmatpush1.bf16.msra.mxu0 %v1134
    %1552 = vmatprep.mubr.bf16.mxu0 %v1362
    %1553 = vmatmul.mubr.bf16.gmra.mrb[0].mxu0 %v1361
    %v1554 = vpop.f32.mrb[0].mxu0
    %v1555 = vadd.f32 %v1458, %v1554
    %v1556 = vpop.f32.mrb[0].mxu0
    %v1557 = vpop.f32.mrb[0].mxu0
    %v1558 = vadd.f32 %v1461, %v1557
    %v1559 = vpop.f32.mrb[0].mxu0
    %1560 = vmatprep.mubr.bf16.mxu0 %v1366
    %1561 = vmatmul.mubr.bf16.gmra.mrb[0].mxu0 %v1365
    %v1562 = vpop.f32.mrb[0].mxu0
    %v1563 = vadd.f32 %v1466, %v1562
    %v1564 = vpop.f32.mrb[0].mxu0
    %v1565 = vpop.f32.mrb[0].mxu0
    %v1566 = vadd.f32 %v1469, %v1565
    %v1567 = vpop.f32.mrb[0].mxu0
    %1568 = vmatprep.mubr.bf16.mxu0 %v1370
    %1569 = vmatmul.mubr.bf16.gmra.mrb[0].mxu0 %v1369
    %v1570 = vpop.f32.mrb[0].mxu0
    %v1571 = vadd.f32 %v1474, %v1570
    %v1572 = vpop.f32.mrb[0].mxu0
    %v1573 = vpop.f32.mrb[0].mxu0
    %v1574 = vadd.f32 %v1477, %v1573
    %v1575 = vpop.f32.mrb[0].mxu0
    %1576 = vmatprep.mubr.bf16.mxu0 %v1374
    %1577 = vmatmul.mubr.bf16.gmra.mrb[0].mxu0 %v1373
    %v1578 = vpop.f32.mrb[0].mxu0
    %v1579 = vadd.f32 %v1482, %v1578
    %v1580 = vpop.f32.mrb[0].mxu0
    %v1581 = vpop.f32.mrb[0].mxu0
    %v1582 = vadd.f32 %v1485, %v1581
    %v1583 = vpop.f32.mrb[0].mxu0
    %1584 = vmatprep.mubr.bf16.mxu0 %v1378
    %1585 = vmatmul.mubr.bf16.gmra.mrb[0].mxu0 %v1377
    %v1586 = vpop.f32.mrb[0].mxu0
    %v1587 = vadd.f32 %v1490, %v1586
    %v1588 = vpop.f32.mrb[0].mxu0
    %v1589 = vpop.f32.mrb[0].mxu0
    %v1590 = vadd.f32 %v1493, %v1589
    %v1591 = vpop.f32.mrb[0].mxu0
    %1592 = vmatprep.mubr.bf16.mxu0 %v1382
    %1593 = vmatmul.mubr.bf16.gmra.mrb[0].mxu0 %v1381
    %v1594 = vpop.f32.mrb[0].mxu0
    %v1595 = vadd.f32 %v1498, %v1594
    %v1596 = vpop.f32.mrb[0].mxu0
    %v1597 = vpop.f32.mrb[0].mxu0
    %v1598 = vadd.f32 %v1501, %v1597
    %v1599 = vpop.f32.mrb[0].mxu0
    %1600 = vmatprep.mubr.bf16.mxu0 %v1386
    %1601 = vmatmul.mubr.bf16.gmra.mrb[0].mxu0 %v1385
    %v1602 = vpop.f32.mrb[0].mxu0
    %v1603 = vadd.f32 %v1506, %v1602
    %v1604 = vpop.f32.mrb[0].mxu0
    %v1605 = vpop.f32.mrb[0].mxu0
    %v1606 = vadd.f32 %v1509, %v1605
    %v1607 = vpop.f32.mrb[0].mxu0
    %1608 = vmatprep.mubr.bf16.mxu0 %v1390
    %1609 = vmatmul.mubr.bf16.gmra.mrb[0].mxu0 %v1389
    %v1610 = vpop.f32.mrb[0].mxu0
    %v1611 = vadd.f32 %v1514, %v1610
    %v1612 = vpop.f32.mrb[0].mxu0
    %v1613 = vpop.f32.mrb[0].mxu0
    %v1614 = vadd.f32 %v1517, %v1613
    %v1615 = vpop.f32.mrb[0].mxu0
    %1616 = vdwg.mxu0
    %v1617 = vmax.f32 %v1555, 0.0
    %v1618 = vmax.f32 %v1558, 0.0
    %v1619 = vmax.f32 %v1563, 0.0
    %v1620 = vmax.f32 %v1566, 0.0
    %v1621 = vmax.f32 %v1571, 0.0
    %v1622 = vmax.f32 %v1574, 0.0
    %v1623 = vmax.f32 %v1579, 0.0
    %v1624 = vmax.f32 %v1582, 0.0
    %v1625 = vmax.f32 %v1587, 0.0
    %v1626 = vmax.f32 %v1590, 0.0
    %v1627 = vmax.f32 %v1595, 0.0
    %v1628 = vmax.f32 %v1598, 0.0
    %v1629 = vmax.f32 %v1603, 0.0
    %v1630 = vmax.f32 %v1606, 0.0
    %v1631 = vmax.f32 %v1611, 0.0
    %v1632 = vmax.f32 %v1614, 0.0
    %v1633 = vld [vmem:[%s5] sm:$0xff]
    %v1634 = vld [vmem:[%s5 + $0x8] sm:$0xff]
    %v1635 = vld [vmem:[%s5 + $0x10] sm:$0xff]
    %v1636 = vld [vmem:[%s5 + $0x18] sm:$0xff]
    %v1637 = vld [vmem:[%s5 + $0x20] sm:$0xff]
    %v1638 = vld [vmem:[%s5 + $0x28] sm:$0xff]
    %v1639 = vld [vmem:[%s5 + $0x30] sm:$0xff]
    %v1640 = vld [vmem:[%s5 + $0x38] sm:$0xff]
    %v1641 = vld [vmem:[%s5 + $0x40] sm:$0xff]
    %v1642 = vld [vmem:[%s5 + $0x48] sm:$0xff]
    %v1643 = vld [vmem:[%s5 + $0x50] sm:$0xff]
    %v1644 = vld [vmem:[%s5 + $0x58] sm:$0xff]
    %v1645 = vld [vmem:[%s5 + $0x60] sm:$0xff]
    %v1646 = vld [vmem:[%s5 + $0x68] sm:$0xff]
    %v1647 = vld [vmem:[%s5 + $0x70] sm:$0xff]
    %v1648 = vld [vmem:[%s5 + $0x78] sm:$0xff]
    %1650 = vset.pattern.permute.xlu0 0
    %1651 = vperm.xlu0 %1650, %v1633
    %v1652 = vpop.permute.xlu0 %1651
    %1655 = vset.pattern.permute.xlu0 0
    %1656 = vperm.xlu0 %1655, %v1634
    %v1657 = vpop.permute.xlu0 %1656
    %1660 = vset.pattern.permute.xlu0 0
    %1661 = vperm.xlu0 %1660, %v1635
    %v1662 = vpop.permute.xlu0 %1661
    %1665 = vset.pattern.permute.xlu0 0
    %1666 = vperm.xlu0 %1665, %v1636
    %v1667 = vpop.permute.xlu0 %1666
    %1670 = vset.pattern.permute.xlu0 0
    %1671 = vperm.xlu0 %1670, %v1637
    %v1672 = vpop.permute.xlu0 %1671
    %1675 = vset.pattern.permute.xlu0 0
    %1676 = vperm.xlu0 %1675, %v1638
    %v1677 = vpop.permute.xlu0 %1676
    %1680 = vset.pattern.permute.xlu0 0
    %1681 = vperm.xlu0 %1680, %v1639
    %v1682 = vpop.permute.xlu0 %1681
    %1685 = vset.pattern.permute.xlu0 0
    %1686 = vperm.xlu0 %1685, %v1640
    %v1687 = vpop.permute.xlu0 %1686
    %1690 = vset.pattern.permute.xlu0 0
    %1691 = vperm.xlu0 %1690, %v1641
    %v1692 = vpop.permute.xlu0 %1691
    %1695 = vset.pattern.permute.xlu0 0
    %1696 = vperm.xlu0 %1695, %v1642
    %v1697 = vpop.permute.xlu0 %1696
    %1700 = vset.pattern.permute.xlu0 0
    %1701 = vperm.xlu0 %1700, %v1643
    %v1702 = vpop.permute.xlu0 %1701
    %1705 = vset.pattern.permute.xlu0 0
    %1706 = vperm.xlu0 %1705, %v1644
    %v1707 = vpop.permute.xlu0 %1706
    %1710 = vset.pattern.permute.xlu0 0
    %1711 = vperm.xlu0 %1710, %v1645
    %v1712 = vpop.permute.xlu0 %1711
    %1715 = vset.pattern.permute.xlu0 0
    %1716 = vperm.xlu0 %1715, %v1646
    %v1717 = vpop.permute.xlu0 %1716
    %1720 = vset.pattern.permute.xlu0 0
    %1721 = vperm.xlu0 %1720, %v1647
    %v1722 = vpop.permute.xlu0 %1721
    %1725 = vset.pattern.permute.xlu0 0
    %1726 = vperm.xlu0 %1725, %v1648
    %v1727 = vpop.permute.xlu0 %1726
    %v1729 = vmul.f32 %v1617, %v1652
    %v1730 = vmul.f32 %v1618, %v1657
    %v1731 = vmul.f32 %v1619, %v1662
    %v1732 = vmul.f32 %v1620, %v1667
    %v1733 = vmul.f32 %v1621, %v1672
    %v1734 = vmul.f32 %v1622, %v1677
    %v1735 = vmul.f32 %v1623, %v1682
    %v1736 = vmul.f32 %v1624, %v1687
    %v1737 = vmul.f32 %v1625, %v1692
    %v1738 = vmul.f32 %v1626, %v1697
    %v1739 = vmul.f32 %v1627, %v1702
    %v1740 = vmul.f32 %v1628, %v1707
    %v1741 = vmul.f32 %v1629, %v1712
    %v1742 = vmul.f32 %v1630, %v1717
    %v1743 = vmul.f32 %v1631, %v1722
    %v1744 = vmul.f32 %v1632, %v1727
    %vm1745 = vcmask 64512
    %v1746 = vsel %vm1745, %v1729, 0.0
    %v1747 = vsel %vm1745, %v1730, 0.0
    %v1748 = vadd.f32 %v1746, %v1747
    %v1749 = vsel %vm1745, %v1731, 0.0
    %v1750 = vadd.f32 %v1748, %v1749
    %v1751 = vsel %vm1745, %v1732, 0.0
    %v1752 = vadd.f32 %v1750, %v1751
    %v1753 = vsel %vm1745, %v1733, 0.0
    %v1754 = vadd.f32 %v1752, %v1753
    %v1755 = vsel %vm1745, %v1734, 0.0
    %v1756 = vadd.f32 %v1754, %v1755
    %v1757 = vsel %vm1745, %v1735, 0.0
    %v1758 = vadd.f32 %v1756, %v1757
    %v1759 = vsel %vm1745, %v1736, 0.0
    %v1760 = vadd.f32 %v1758, %v1759
    %v1761 = vsel %vm1745, %v1737, 0.0
    %v1762 = vadd.f32 %v1760, %v1761
    %v1763 = vsel %vm1745, %v1738, 0.0
    %v1764 = vadd.f32 %v1762, %v1763
    %v1765 = vsel %vm1745, %v1739, 0.0
    %v1766 = vadd.f32 %v1764, %v1765
    %v1767 = vsel %vm1745, %v1740, 0.0
    %v1768 = vadd.f32 %v1766, %v1767
    %v1769 = vsel %vm1745, %v1741, 0.0
    %v1770 = vadd.f32 %v1768, %v1769
    %v1771 = vsel %vm1745, %v1742, 0.0
    %v1772 = vadd.f32 %v1770, %v1771
    %v1773 = vsel %vm1745, %v1743, 0.0
    %v1774 = vadd.f32 %v1772, %v1773
    %v1775 = vsel %vm1745, %v1744, 0.0
    %v1776 = vadd.f32 %v1774, %v1775
    %v1777 = vrot.slane %v1776, 4
    %v1778 = vadd.f32 %v1776, %v1777
    %v1779 = vrot.slane %v1778, 2
    %v1780 = vadd.f32 %v1778, %v1779
    %v1781 = vrot.slane %v1780, 1
    %v1782 = vadd.f32 %v1780, %v1781
    %v1783 = vld [vmem:[%s3 + $0x100] sm:$0xff]
    %v1784 = vld [vmem:[%s3 + $0x108] sm:$0xff]
    %v1785 = vld [vmem:[%s3 + $0x110] sm:$0xff]
    %v1786 = vld [vmem:[%s3 + $0x118] sm:$0xff]
    %v1787 = vld [vmem:[%s3 + $0x120] sm:$0xff]
    %v1788 = vld [vmem:[%s3 + $0x128] sm:$0xff]
    %v1789 = vld [vmem:[%s3 + $0x130] sm:$0xff]
    %v1790 = vld [vmem:[%s3 + $0x138] sm:$0xff]
    %v1791 = vld [vmem:[%s3 + $0x140] sm:$0xff]
    %v1792 = vld [vmem:[%s3 + $0x148] sm:$0xff]
    %v1793 = vld [vmem:[%s3 + $0x150] sm:$0xff]
    %v1794 = vld [vmem:[%s3 + $0x158] sm:$0xff]
    %v1795 = vld [vmem:[%s3 + $0x160] sm:$0xff]
    %v1796 = vld [vmem:[%s3 + $0x168] sm:$0xff]
    %v1797 = vld [vmem:[%s3 + $0x170] sm:$0xff]
    %v1798 = vld [vmem:[%s3 + $0x178] sm:$0xff]
    %v1799 = vld [vmem:[%s3 + $0x180] sm:$0xff]
    %v1800 = vld [vmem:[%s3 + $0x188] sm:$0xff]
    %v1801 = vld [vmem:[%s3 + $0x190] sm:$0xff]
    %v1802 = vld [vmem:[%s3 + $0x198] sm:$0xff]
    %v1803 = vld [vmem:[%s3 + $0x1a0] sm:$0xff]
    %v1804 = vld [vmem:[%s3 + $0x1a8] sm:$0xff]
    %v1805 = vld [vmem:[%s3 + $0x1b0] sm:$0xff]
    %v1806 = vld [vmem:[%s3 + $0x1b8] sm:$0xff]
    %v1807 = vld [vmem:[%s3 + $0x1c0] sm:$0xff]
    %v1808 = vld [vmem:[%s3 + $0x1c8] sm:$0xff]
    %v1809 = vld [vmem:[%s3 + $0x1d0] sm:$0xff]
    %v1810 = vld [vmem:[%s3 + $0x1d8] sm:$0xff]
    %v1811 = vld [vmem:[%s3 + $0x1e0] sm:$0xff]
    %v1812 = vld [vmem:[%s3 + $0x1e8] sm:$0xff]
    %v1813 = vld [vmem:[%s3 + $0x1f0] sm:$0xff]
    %v1814 = vld [vmem:[%s3 + $0x1f8] sm:$0xff]
    %v1815 = vld [vmem:[%s4 + $0x80] sm:$0xff]
    %v1816 = vld [vmem:[%s4 + $0x88] sm:$0xff]
    %v1817 = vld [vmem:[%s4 + $0x90] sm:$0xff]
    %v1818 = vld [vmem:[%s4 + $0x98] sm:$0xff]
    %v1819 = vld [vmem:[%s4 + $0xa0] sm:$0xff]
    %v1820 = vld [vmem:[%s4 + $0xa8] sm:$0xff]
    %v1821 = vld [vmem:[%s4 + $0xb0] sm:$0xff]
    %v1822 = vld [vmem:[%s4 + $0xb8] sm:$0xff]
    %v1823 = vld [vmem:[%s4 + $0xc0] sm:$0xff]
    %v1824 = vld [vmem:[%s4 + $0xc8] sm:$0xff]
    %v1825 = vld [vmem:[%s4 + $0xd0] sm:$0xff]
    %v1826 = vld [vmem:[%s4 + $0xd8] sm:$0xff]
    %v1827 = vld [vmem:[%s4 + $0xe0] sm:$0xff]
    %v1828 = vld [vmem:[%s4 + $0xe8] sm:$0xff]
    %v1829 = vld [vmem:[%s4 + $0xf0] sm:$0xff]
    %v1830 = vld [vmem:[%s4 + $0xf8] sm:$0xff]
    %1832 = vset.pattern.permute.xlu0 0
    %1833 = vperm.xlu0 %1832, %v1815
    %v1834 = vpop.permute.xlu0 %1833
    %1837 = vset.pattern.permute.xlu0 0
    %1838 = vperm.xlu0 %1837, %v1816
    %v1839 = vpop.permute.xlu0 %1838
    %1842 = vset.pattern.permute.xlu0 0
    %1843 = vperm.xlu0 %1842, %v1817
    %v1844 = vpop.permute.xlu0 %1843
    %1847 = vset.pattern.permute.xlu0 0
    %1848 = vperm.xlu0 %1847, %v1818
    %v1849 = vpop.permute.xlu0 %1848
    %1852 = vset.pattern.permute.xlu0 0
    %1853 = vperm.xlu0 %1852, %v1819
    %v1854 = vpop.permute.xlu0 %1853
    %1857 = vset.pattern.permute.xlu0 0
    %1858 = vperm.xlu0 %1857, %v1820
    %v1859 = vpop.permute.xlu0 %1858
    %1862 = vset.pattern.permute.xlu0 0
    %1863 = vperm.xlu0 %1862, %v1821
    %v1864 = vpop.permute.xlu0 %1863
    %1867 = vset.pattern.permute.xlu0 0
    %1868 = vperm.xlu0 %1867, %v1822
    %v1869 = vpop.permute.xlu0 %1868
    %1872 = vset.pattern.permute.xlu0 0
    %1873 = vperm.xlu0 %1872, %v1823
    %v1874 = vpop.permute.xlu0 %1873
    %1877 = vset.pattern.permute.xlu0 0
    %1878 = vperm.xlu0 %1877, %v1824
    %v1879 = vpop.permute.xlu0 %1878
    %1882 = vset.pattern.permute.xlu0 0
    %1883 = vperm.xlu0 %1882, %v1825
    %v1884 = vpop.permute.xlu0 %1883
    %1887 = vset.pattern.permute.xlu0 0
    %1888 = vperm.xlu0 %1887, %v1826
    %v1889 = vpop.permute.xlu0 %1888
    %1892 = vset.pattern.permute.xlu0 0
    %1893 = vperm.xlu0 %1892, %v1827
    %v1894 = vpop.permute.xlu0 %1893
    %1897 = vset.pattern.permute.xlu0 0
    %1898 = vperm.xlu0 %1897, %v1828
    %v1899 = vpop.permute.xlu0 %1898
    %1902 = vset.pattern.permute.xlu0 0
    %1903 = vperm.xlu0 %1902, %v1829
    %v1904 = vpop.permute.xlu0 %1903
    %1907 = vset.pattern.permute.xlu0 0
    %1908 = vperm.xlu0 %1907, %v1830
    %v1909 = vpop.permute.xlu0 %1908
    %v1943 = vunpack.c.l.b16 %v1783
    %v1944 = vunpack.c.h.b16 %v1783
    %v1945 = vunpack.c.l.b16 %v1784
    %v1946 = vunpack.c.h.b16 %v1784
    %v1947 = vunpack.c.l.b16 %v1785
    %v1948 = vunpack.c.h.b16 %v1785
    %v1949 = vunpack.c.l.b16 %v1786
    %v1950 = vunpack.c.h.b16 %v1786
    %v1951 = vunpack.c.l.b16 %v1787
    %v1952 = vunpack.c.h.b16 %v1787
    %v1953 = vunpack.c.l.b16 %v1788
    %v1954 = vunpack.c.h.b16 %v1788
    %v1955 = vunpack.c.l.b16 %v1789
    %v1956 = vunpack.c.h.b16 %v1789
    %v1957 = vunpack.c.l.b16 %v1790
    %v1958 = vunpack.c.h.b16 %v1790
    %v1959 = vunpack.c.l.b16 %v1791
    %v1960 = vunpack.c.h.b16 %v1791
    %v1961 = vunpack.c.l.b16 %v1792
    %v1962 = vunpack.c.h.b16 %v1792
    %v1963 = vunpack.c.l.b16 %v1793
    %v1964 = vunpack.c.h.b16 %v1793
    %v1965 = vunpack.c.l.b16 %v1794
    %v1966 = vunpack.c.h.b16 %v1794
    %v1967 = vunpack.c.l.b16 %v1795
    %v1968 = vunpack.c.h.b16 %v1795
    %v1969 = vunpack.c.l.b16 %v1796
    %v1970 = vunpack.c.h.b16 %v1796
    %v1971 = vunpack.c.l.b16 %v1797
    %v1972 = vunpack.c.h.b16 %v1797
    %v1973 = vunpack.c.l.b16 %v1798
    %v1974 = vunpack.c.h.b16 %v1798
    %v1975 = vunpack.c.l.b16 %v1799
    %v1976 = vunpack.c.h.b16 %v1799
    %v1977 = vunpack.c.l.b16 %v1800
    %v1978 = vunpack.c.h.b16 %v1800
    %v1979 = vunpack.c.l.b16 %v1801
    %v1980 = vunpack.c.h.b16 %v1801
    %v1981 = vunpack.c.l.b16 %v1802
    %v1982 = vunpack.c.h.b16 %v1802
    %v1983 = vunpack.c.l.b16 %v1803
    %v1984 = vunpack.c.h.b16 %v1803
    %v1985 = vunpack.c.l.b16 %v1804
    %v1986 = vunpack.c.h.b16 %v1804
    %v1987 = vunpack.c.l.b16 %v1805
    %v1988 = vunpack.c.h.b16 %v1805
    %v1989 = vunpack.c.l.b16 %v1806
    %v1990 = vunpack.c.h.b16 %v1806
    %v1991 = vunpack.c.l.b16 %v1807
    %v1992 = vunpack.c.h.b16 %v1807
    %v1993 = vunpack.c.l.b16 %v1808
    %v1994 = vunpack.c.h.b16 %v1808
    %v1995 = vunpack.c.l.b16 %v1809
    %v1996 = vunpack.c.h.b16 %v1809
    %v1997 = vunpack.c.l.b16 %v1810
    %v1998 = vunpack.c.h.b16 %v1810
    %v1999 = vunpack.c.l.b16 %v1811
    %v2000 = vunpack.c.h.b16 %v1811
    %v2001 = vunpack.c.l.b16 %v1812
    %v2002 = vunpack.c.h.b16 %v1812
    %v2003 = vunpack.c.l.b16 %v1813
    %v2004 = vunpack.c.h.b16 %v1813
    %v2005 = vunpack.c.l.b16 %v1814
    %v2006 = vunpack.c.h.b16 %v1814
    %v2007 = vpack.c.b16 %v1947, %v1943
    %v2008 = vpack.c.b16 %v1948, %v1944
    %v2009 = vpack.c.b16 %v1949, %v1945
    %v2010 = vpack.c.b16 %v1950, %v1946
    %v2011 = vpack.c.b16 %v1955, %v1951
    %v2012 = vpack.c.b16 %v1956, %v1952
    %v2013 = vpack.c.b16 %v1957, %v1953
    %v2014 = vpack.c.b16 %v1958, %v1954
    %v2015 = vpack.c.b16 %v1963, %v1959
    %v2016 = vpack.c.b16 %v1964, %v1960
    %v2017 = vpack.c.b16 %v1965, %v1961
    %v2018 = vpack.c.b16 %v1966, %v1962
    %v2019 = vpack.c.b16 %v1971, %v1967
    %v2020 = vpack.c.b16 %v1972, %v1968
    %v2021 = vpack.c.b16 %v1973, %v1969
    %v2022 = vpack.c.b16 %v1974, %v1970
    %v2023 = vpack.c.b16 %v1979, %v1975
    %v2024 = vpack.c.b16 %v1980, %v1976
    %v2025 = vpack.c.b16 %v1981, %v1977
    %v2026 = vpack.c.b16 %v1982, %v1978
    %v2027 = vpack.c.b16 %v1987, %v1983
    %v2028 = vpack.c.b16 %v1988, %v1984
    %v2029 = vpack.c.b16 %v1989, %v1985
    %v2030 = vpack.c.b16 %v1990, %v1986
    %v2031 = vpack.c.b16 %v1995, %v1991
    %v2032 = vpack.c.b16 %v1996, %v1992
    %v2033 = vpack.c.b16 %v1997, %v1993
    %v2034 = vpack.c.b16 %v1998, %v1994
    %v2035 = vpack.c.b16 %v2003, %v1999
    %v2036 = vpack.c.b16 %v2004, %v2000
    %v2037 = vpack.c.b16 %v2005, %v2001
    %v2038 = vpack.c.b16 %v2006, %v2002
    %2071 = vmatprep.subr.bf16.mxu0 0
    %2072 = vmatpush1.bf16.msra.mxu0 %v1103
    %2073 = vmatprep.subr.bf16.mxu0 0
    %2074 = vmatpush1.bf16.msra.mxu0 %v1104
    %2075 = vmatprep.subr.bf16.mxu0 0
    %2076 = vmatpush1.bf16.msra.mxu0 %v1105
    %2077 = vmatprep.subr.bf16.mxu0 0
    %2078 = vmatpush1.bf16.msra.mxu0 %v1106
    %2079 = vmatprep.subr.bf16.mxu0 0
    %2080 = vmatpush1.bf16.msra.mxu0 %v1107
    %2081 = vmatprep.subr.bf16.mxu0 0
    %2082 = vmatpush1.bf16.msra.mxu0 %v1108
    %2083 = vmatprep.subr.bf16.mxu0 0
    %2084 = vmatpush1.bf16.msra.mxu0 %v1109
    %2085 = vmatprep.subr.bf16.mxu0 0
    %2086 = vmatpush1.bf16.msra.mxu0 %v1110
    %2087 = vmatprep.subr.bf16.mxu0 0
    %2088 = vmatpush1.bf16.msra.mxu0 %v1111
    %2089 = vmatprep.subr.bf16.mxu0 0
    %2090 = vmatpush1.bf16.msra.mxu0 %v1112
    %2091 = vmatprep.subr.bf16.mxu0 0
    %2092 = vmatpush1.bf16.msra.mxu0 %v1113
    %2093 = vmatprep.subr.bf16.mxu0 0
    %2094 = vmatpush1.bf16.msra.mxu0 %v1114
    %2095 = vmatprep.subr.bf16.mxu0 0
    %2096 = vmatpush1.bf16.msra.mxu0 %v1115
    %2097 = vmatprep.subr.bf16.mxu0 0
    %2098 = vmatpush1.bf16.msra.mxu0 %v1116
    %2099 = vmatprep.subr.bf16.mxu0 0
    %2100 = vmatpush1.bf16.msra.mxu0 %v1117
    %2101 = vmatprep.subr.bf16.mxu0 0
    %2102 = vmatpush1.bf16.msra.mxu0 %v1118
    %2103 = vmatprep.mubr.bf16.mxu0 %v2008
    %2104 = vmatmul.mubr.bf16.gmra.mrb[0].mxu0 %v2007
    %v2105 = vpop.f32.mrb[0].mxu0
    %v2106 = vadd.f32 %v1834, %v2105
    %v2107 = vpop.f32.mrb[0].mxu0
    %v2108 = vpop.f32.mrb[0].mxu0
    %v2109 = vadd.f32 %v1839, %v2108
    %v2110 = vpop.f32.mrb[0].mxu0
    %2111 = vmatprep.mubr.bf16.mxu0 %v2012
    %2112 = vmatmul.mubr.bf16.gmra.mrb[0].mxu0 %v2011
    %v2113 = vpop.f32.mrb[0].mxu0
    %v2114 = vadd.f32 %v1844, %v2113
    %v2115 = vpop.f32.mrb[0].mxu0
    %v2116 = vpop.f32.mrb[0].mxu0
    %v2117 = vadd.f32 %v1849, %v2116
    %v2118 = vpop.f32.mrb[0].mxu0
    %2119 = vmatprep.mubr.bf16.mxu0 %v2016
    %2120 = vmatmul.mubr.bf16.gmra.mrb[0].mxu0 %v2015
    %v2121 = vpop.f32.mrb[0].mxu0
    %v2122 = vadd.f32 %v1854, %v2121
    %v2123 = vpop.f32.mrb[0].mxu0
    %v2124 = vpop.f32.mrb[0].mxu0
    %v2125 = vadd.f32 %v1859, %v2124
    %v2126 = vpop.f32.mrb[0].mxu0
    %2127 = vmatprep.mubr.bf16.mxu0 %v2020
    %2128 = vmatmul.mubr.bf16.gmra.mrb[0].mxu0 %v2019
    %v2129 = vpop.f32.mrb[0].mxu0
    %v2130 = vadd.f32 %v1864, %v2129
    %v2131 = vpop.f32.mrb[0].mxu0
    %v2132 = vpop.f32.mrb[0].mxu0
    %v2133 = vadd.f32 %v1869, %v2132
    %v2134 = vpop.f32.mrb[0].mxu0
    %2135 = vmatprep.mubr.bf16.mxu0 %v2024
    %2136 = vmatmul.mubr.bf16.gmra.mrb[0].mxu0 %v2023
    %v2137 = vpop.f32.mrb[0].mxu0
    %v2138 = vadd.f32 %v1874, %v2137
    %v2139 = vpop.f32.mrb[0].mxu0
    %v2140 = vpop.f32.mrb[0].mxu0
    %v2141 = vadd.f32 %v1879, %v2140
    %v2142 = vpop.f32.mrb[0].mxu0
    %2143 = vmatprep.mubr.bf16.mxu0 %v2028
    %2144 = vmatmul.mubr.bf16.gmra.mrb[0].mxu0 %v2027
    %v2145 = vpop.f32.mrb[0].mxu0
    %v2146 = vadd.f32 %v1884, %v2145
    %v2147 = vpop.f32.mrb[0].mxu0
    %v2148 = vpop.f32.mrb[0].mxu0
    %v2149 = vadd.f32 %v1889, %v2148
    %v2150 = vpop.f32.mrb[0].mxu0
    %2151 = vmatprep.mubr.bf16.mxu0 %v2032
    %2152 = vmatmul.mubr.bf16.gmra.mrb[0].mxu0 %v2031
    %v2153 = vpop.f32.mrb[0].mxu0
    %v2154 = vadd.f32 %v1894, %v2153
    %v2155 = vpop.f32.mrb[0].mxu0
    %v2156 = vpop.f32.mrb[0].mxu0
    %v2157 = vadd.f32 %v1899, %v2156
    %v2158 = vpop.f32.mrb[0].mxu0
    %2159 = vmatprep.mubr.bf16.mxu0 %v2036
    %2160 = vmatmul.mubr.bf16.gmra.mrb[0].mxu0 %v2035
    %v2161 = vpop.f32.mrb[0].mxu0
    %v2162 = vadd.f32 %v1904, %v2161
    %v2163 = vpop.f32.mrb[0].mxu0
    %v2164 = vpop.f32.mrb[0].mxu0
    %v2165 = vadd.f32 %v1909, %v2164
    %v2166 = vpop.f32.mrb[0].mxu0
    %2167 = vdwg.mxu0
    %2168 = vmatprep.subr.bf16.mxu0 0
    %2169 = vmatpush1.bf16.msra.mxu0 %v1119
    %2170 = vmatprep.subr.bf16.mxu0 0
    %2171 = vmatpush1.bf16.msra.mxu0 %v1120
    %2172 = vmatprep.subr.bf16.mxu0 0
    %2173 = vmatpush1.bf16.msra.mxu0 %v1121
    %2174 = vmatprep.subr.bf16.mxu0 0
    %2175 = vmatpush1.bf16.msra.mxu0 %v1122
    %2176 = vmatprep.subr.bf16.mxu0 0
    %2177 = vmatpush1.bf16.msra.mxu0 %v1123
    %2178 = vmatprep.subr.bf16.mxu0 0
    %2179 = vmatpush1.bf16.msra.mxu0 %v1124
    %2180 = vmatprep.subr.bf16.mxu0 0
    %2181 = vmatpush1.bf16.msra.mxu0 %v1125
    %2182 = vmatprep.subr.bf16.mxu0 0
    %2183 = vmatpush1.bf16.msra.mxu0 %v1126
    %2184 = vmatprep.subr.bf16.mxu0 0
    %2185 = vmatpush1.bf16.msra.mxu0 %v1127
    %2186 = vmatprep.subr.bf16.mxu0 0
    %2187 = vmatpush1.bf16.msra.mxu0 %v1128
    %2188 = vmatprep.subr.bf16.mxu0 0
    %2189 = vmatpush1.bf16.msra.mxu0 %v1129
    %2190 = vmatprep.subr.bf16.mxu0 0
    %2191 = vmatpush1.bf16.msra.mxu0 %v1130
    %2192 = vmatprep.subr.bf16.mxu0 0
    %2193 = vmatpush1.bf16.msra.mxu0 %v1131
    %2194 = vmatprep.subr.bf16.mxu0 0
    %2195 = vmatpush1.bf16.msra.mxu0 %v1132
    %2196 = vmatprep.subr.bf16.mxu0 0
    %2197 = vmatpush1.bf16.msra.mxu0 %v1133
    %2198 = vmatprep.subr.bf16.mxu0 0
    %2199 = vmatpush1.bf16.msra.mxu0 %v1134
    %2200 = vmatprep.mubr.bf16.mxu0 %v2010
    %2201 = vmatmul.mubr.bf16.gmra.mrb[0].mxu0 %v2009
    %v2202 = vpop.f32.mrb[0].mxu0
    %v2203 = vadd.f32 %v2106, %v2202
    %v2204 = vpop.f32.mrb[0].mxu0
    %v2205 = vpop.f32.mrb[0].mxu0
    %v2206 = vadd.f32 %v2109, %v2205
    %v2207 = vpop.f32.mrb[0].mxu0
    %2208 = vmatprep.mubr.bf16.mxu0 %v2014
    %2209 = vmatmul.mubr.bf16.gmra.mrb[0].mxu0 %v2013
    %v2210 = vpop.f32.mrb[0].mxu0
    %v2211 = vadd.f32 %v2114, %v2210
    %v2212 = vpop.f32.mrb[0].mxu0
    %v2213 = vpop.f32.mrb[0].mxu0
    %v2214 = vadd.f32 %v2117, %v2213
    %v2215 = vpop.f32.mrb[0].mxu0
    %2216 = vmatprep.mubr.bf16.mxu0 %v2018
    %2217 = vmatmul.mubr.bf16.gmra.mrb[0].mxu0 %v2017
    %v2218 = vpop.f32.mrb[0].mxu0
    %v2219 = vadd.f32 %v2122, %v2218
    %v2220 = vpop.f32.mrb[0].mxu0
    %v2221 = vpop.f32.mrb[0].mxu0
    %v2222 = vadd.f32 %v2125, %v2221
    %v2223 = vpop.f32.mrb[0].mxu0
    %2224 = vmatprep.mubr.bf16.mxu0 %v2022
    %2225 = vmatmul.mubr.bf16.gmra.mrb[0].mxu0 %v2021
    %v2226 = vpop.f32.mrb[0].mxu0
    %v2227 = vadd.f32 %v2130, %v2226
    %v2228 = vpop.f32.mrb[0].mxu0
    %v2229 = vpop.f32.mrb[0].mxu0
    %v2230 = vadd.f32 %v2133, %v2229
    %v2231 = vpop.f32.mrb[0].mxu0
    %2232 = vmatprep.mubr.bf16.mxu0 %v2026
    %2233 = vmatmul.mubr.bf16.gmra.mrb[0].mxu0 %v2025
    %v2234 = vpop.f32.mrb[0].mxu0
    %v2235 = vadd.f32 %v2138, %v2234
    %v2236 = vpop.f32.mrb[0].mxu0
    %v2237 = vpop.f32.mrb[0].mxu0
    %v2238 = vadd.f32 %v2141, %v2237
    %v2239 = vpop.f32.mrb[0].mxu0
    %2240 = vmatprep.mubr.bf16.mxu0 %v2030
    %2241 = vmatmul.mubr.bf16.gmra.mrb[0].mxu0 %v2029
    %v2242 = vpop.f32.mrb[0].mxu0
    %v2243 = vadd.f32 %v2146, %v2242
    %v2244 = vpop.f32.mrb[0].mxu0
    %v2245 = vpop.f32.mrb[0].mxu0
    %v2246 = vadd.f32 %v2149, %v2245
    %v2247 = vpop.f32.mrb[0].mxu0
    %2248 = vmatprep.mubr.bf16.mxu0 %v2034
    %2249 = vmatmul.mubr.bf16.gmra.mrb[0].mxu0 %v2033
    %v2250 = vpop.f32.mrb[0].mxu0
    %v2251 = vadd.f32 %v2154, %v2250
    %v2252 = vpop.f32.mrb[0].mxu0
    %v2253 = vpop.f32.mrb[0].mxu0
    %v2254 = vadd.f32 %v2157, %v2253
    %v2255 = vpop.f32.mrb[0].mxu0
    %2256 = vmatprep.mubr.bf16.mxu0 %v2038
    %2257 = vmatmul.mubr.bf16.gmra.mrb[0].mxu0 %v2037
    %v2258 = vpop.f32.mrb[0].mxu0
    %v2259 = vadd.f32 %v2162, %v2258
    %v2260 = vpop.f32.mrb[0].mxu0
    %v2261 = vpop.f32.mrb[0].mxu0
    %v2262 = vadd.f32 %v2165, %v2261
    %v2263 = vpop.f32.mrb[0].mxu0
    %2264 = vdwg.mxu0
    %v2265 = vmax.f32 %v2203, 0.0
    %v2266 = vmax.f32 %v2206, 0.0
    %v2267 = vmax.f32 %v2211, 0.0
    %v2268 = vmax.f32 %v2214, 0.0
    %v2269 = vmax.f32 %v2219, 0.0
    %v2270 = vmax.f32 %v2222, 0.0
    %v2271 = vmax.f32 %v2227, 0.0
    %v2272 = vmax.f32 %v2230, 0.0
    %v2273 = vmax.f32 %v2235, 0.0
    %v2274 = vmax.f32 %v2238, 0.0
    %v2275 = vmax.f32 %v2243, 0.0
    %v2276 = vmax.f32 %v2246, 0.0
    %v2277 = vmax.f32 %v2251, 0.0
    %v2278 = vmax.f32 %v2254, 0.0
    %v2279 = vmax.f32 %v2259, 0.0
    %v2280 = vmax.f32 %v2262, 0.0
    %v2281 = vld [vmem:[%s5 + $0x80] sm:$0xff]
    %v2282 = vld [vmem:[%s5 + $0x88] sm:$0xff]
    %v2283 = vld [vmem:[%s5 + $0x90] sm:$0xff]
    %v2284 = vld [vmem:[%s5 + $0x98] sm:$0xff]
    %v2285 = vld [vmem:[%s5 + $0xa0] sm:$0xff]
    %v2286 = vld [vmem:[%s5 + $0xa8] sm:$0xff]
    %v2287 = vld [vmem:[%s5 + $0xb0] sm:$0xff]
    %v2288 = vld [vmem:[%s5 + $0xb8] sm:$0xff]
    %v2289 = vld [vmem:[%s5 + $0xc0] sm:$0xff]
    %v2290 = vld [vmem:[%s5 + $0xc8] sm:$0xff]
    %v2291 = vld [vmem:[%s5 + $0xd0] sm:$0xff]
    %v2292 = vld [vmem:[%s5 + $0xd8] sm:$0xff]
    %v2293 = vld [vmem:[%s5 + $0xe0] sm:$0xff]
    %v2294 = vld [vmem:[%s5 + $0xe8] sm:$0xff]
    %v2295 = vld [vmem:[%s5 + $0xf0] sm:$0xff]
    %v2296 = vld [vmem:[%s5 + $0xf8] sm:$0xff]
    %2298 = vset.pattern.permute.xlu0 0
    %2299 = vperm.xlu0 %2298, %v2281
    %v2300 = vpop.permute.xlu0 %2299
    %2303 = vset.pattern.permute.xlu0 0
    %2304 = vperm.xlu0 %2303, %v2282
    %v2305 = vpop.permute.xlu0 %2304
    %2308 = vset.pattern.permute.xlu0 0
    %2309 = vperm.xlu0 %2308, %v2283
    %v2310 = vpop.permute.xlu0 %2309
    %2313 = vset.pattern.permute.xlu0 0
    %2314 = vperm.xlu0 %2313, %v2284
    %v2315 = vpop.permute.xlu0 %2314
    %2318 = vset.pattern.permute.xlu0 0
    %2319 = vperm.xlu0 %2318, %v2285
    %v2320 = vpop.permute.xlu0 %2319
    %2323 = vset.pattern.permute.xlu0 0
    %2324 = vperm.xlu0 %2323, %v2286
    %v2325 = vpop.permute.xlu0 %2324
    %2328 = vset.pattern.permute.xlu0 0
    %2329 = vperm.xlu0 %2328, %v2287
    %v2330 = vpop.permute.xlu0 %2329
    %2333 = vset.pattern.permute.xlu0 0
    %2334 = vperm.xlu0 %2333, %v2288
    %v2335 = vpop.permute.xlu0 %2334
    %2338 = vset.pattern.permute.xlu0 0
    %2339 = vperm.xlu0 %2338, %v2289
    %v2340 = vpop.permute.xlu0 %2339
    %2343 = vset.pattern.permute.xlu0 0
    %2344 = vperm.xlu0 %2343, %v2290
    %v2345 = vpop.permute.xlu0 %2344
    %2348 = vset.pattern.permute.xlu0 0
    %2349 = vperm.xlu0 %2348, %v2291
    %v2350 = vpop.permute.xlu0 %2349
    %2353 = vset.pattern.permute.xlu0 0
    %2354 = vperm.xlu0 %2353, %v2292
    %v2355 = vpop.permute.xlu0 %2354
    %2358 = vset.pattern.permute.xlu0 0
    %2359 = vperm.xlu0 %2358, %v2293
    %v2360 = vpop.permute.xlu0 %2359
    %2363 = vset.pattern.permute.xlu0 0
    %2364 = vperm.xlu0 %2363, %v2294
    %v2365 = vpop.permute.xlu0 %2364
    %2368 = vset.pattern.permute.xlu0 0
    %2369 = vperm.xlu0 %2368, %v2295
    %v2370 = vpop.permute.xlu0 %2369
    %2373 = vset.pattern.permute.xlu0 0
    %2374 = vperm.xlu0 %2373, %v2296
    %v2375 = vpop.permute.xlu0 %2374
    %v2377 = vmul.f32 %v2265, %v2300
    %v2378 = vmul.f32 %v2266, %v2305
    %v2379 = vmul.f32 %v2267, %v2310
    %v2380 = vmul.f32 %v2268, %v2315
    %v2381 = vmul.f32 %v2269, %v2320
    %v2382 = vmul.f32 %v2270, %v2325
    %v2383 = vmul.f32 %v2271, %v2330
    %v2384 = vmul.f32 %v2272, %v2335
    %v2385 = vmul.f32 %v2273, %v2340
    %v2386 = vmul.f32 %v2274, %v2345
    %v2387 = vmul.f32 %v2275, %v2350
    %v2388 = vmul.f32 %v2276, %v2355
    %v2389 = vmul.f32 %v2277, %v2360
    %v2390 = vmul.f32 %v2278, %v2365
    %v2391 = vmul.f32 %v2279, %v2370
    %v2392 = vmul.f32 %v2280, %v2375
    %v2393 = vsel %vm1745, %v2377, 0.0
    %v2394 = vsel %vm1745, %v2378, 0.0
    %v2395 = vadd.f32 %v2393, %v2394
    %v2396 = vsel %vm1745, %v2379, 0.0
    %v2397 = vadd.f32 %v2395, %v2396
    %v2398 = vsel %vm1745, %v2380, 0.0
    %v2399 = vadd.f32 %v2397, %v2398
    %v2400 = vsel %vm1745, %v2381, 0.0
    %v2401 = vadd.f32 %v2399, %v2400
    %v2402 = vsel %vm1745, %v2382, 0.0
    %v2403 = vadd.f32 %v2401, %v2402
    %v2404 = vsel %vm1745, %v2383, 0.0
    %v2405 = vadd.f32 %v2403, %v2404
    %v2406 = vsel %vm1745, %v2384, 0.0
    %v2407 = vadd.f32 %v2405, %v2406
    %v2408 = vsel %vm1745, %v2385, 0.0
    %v2409 = vadd.f32 %v2407, %v2408
    %v2410 = vsel %vm1745, %v2386, 0.0
    %v2411 = vadd.f32 %v2409, %v2410
    %v2412 = vsel %vm1745, %v2387, 0.0
    %v2413 = vadd.f32 %v2411, %v2412
    %v2414 = vsel %vm1745, %v2388, 0.0
    %v2415 = vadd.f32 %v2413, %v2414
    %v2416 = vsel %vm1745, %v2389, 0.0
    %v2417 = vadd.f32 %v2415, %v2416
    %v2418 = vsel %vm1745, %v2390, 0.0
    %v2419 = vadd.f32 %v2417, %v2418
    %v2420 = vsel %vm1745, %v2391, 0.0
    %v2421 = vadd.f32 %v2419, %v2420
    %v2422 = vsel %vm1745, %v2392, 0.0
    %v2423 = vadd.f32 %v2421, %v2422
    %v2424 = vrot.slane %v2423, 4
    %v2425 = vadd.f32 %v2423, %v2424
    %v2426 = vrot.slane %v2425, 2
    %v2427 = vadd.f32 %v2425, %v2426
    %v2428 = vrot.slane %v2427, 1
    %v2429 = vadd.f32 %v2427, %v2428
    %v2430 = vadd.f32 %v1782, %v2429
    %v2431 = vld [vmem:[%s3 + $0x200] sm:$0xff]
    %v2432 = vld [vmem:[%s3 + $0x208] sm:$0xff]
    %v2433 = vld [vmem:[%s3 + $0x210] sm:$0xff]
    %v2434 = vld [vmem:[%s3 + $0x218] sm:$0xff]
    %v2435 = vld [vmem:[%s3 + $0x220] sm:$0xff]
    %v2436 = vld [vmem:[%s3 + $0x228] sm:$0xff]
    %v2437 = vld [vmem:[%s3 + $0x230] sm:$0xff]
    %v2438 = vld [vmem:[%s3 + $0x238] sm:$0xff]
    %v2439 = vld [vmem:[%s3 + $0x240] sm:$0xff]
    %v2440 = vld [vmem:[%s3 + $0x248] sm:$0xff]
    %v2441 = vld [vmem:[%s3 + $0x250] sm:$0xff]
    %v2442 = vld [vmem:[%s3 + $0x258] sm:$0xff]
    %v2443 = vld [vmem:[%s3 + $0x260] sm:$0xff]
    %v2444 = vld [vmem:[%s3 + $0x268] sm:$0xff]
    %v2445 = vld [vmem:[%s3 + $0x270] sm:$0xff]
    %v2446 = vld [vmem:[%s3 + $0x278] sm:$0xff]
    %v2447 = vld [vmem:[%s3 + $0x280] sm:$0xff]
    %v2448 = vld [vmem:[%s3 + $0x288] sm:$0xff]
    %v2449 = vld [vmem:[%s3 + $0x290] sm:$0xff]
    %v2450 = vld [vmem:[%s3 + $0x298] sm:$0xff]
    %v2451 = vld [vmem:[%s3 + $0x2a0] sm:$0xff]
    %v2452 = vld [vmem:[%s3 + $0x2a8] sm:$0xff]
    %v2453 = vld [vmem:[%s3 + $0x2b0] sm:$0xff]
    %v2454 = vld [vmem:[%s3 + $0x2b8] sm:$0xff]
    %v2455 = vld [vmem:[%s3 + $0x2c0] sm:$0xff]
    %v2456 = vld [vmem:[%s3 + $0x2c8] sm:$0xff]
    %v2457 = vld [vmem:[%s3 + $0x2d0] sm:$0xff]
    %v2458 = vld [vmem:[%s3 + $0x2d8] sm:$0xff]
    %v2459 = vld [vmem:[%s3 + $0x2e0] sm:$0xff]
    %v2460 = vld [vmem:[%s3 + $0x2e8] sm:$0xff]
    %v2461 = vld [vmem:[%s3 + $0x2f0] sm:$0xff]
    %v2462 = vld [vmem:[%s3 + $0x2f8] sm:$0xff]
    %v2463 = vld [vmem:[%s4 + $0x100] sm:$0xff]
    %v2464 = vld [vmem:[%s4 + $0x108] sm:$0xff]
    %v2465 = vld [vmem:[%s4 + $0x110] sm:$0xff]
    %v2466 = vld [vmem:[%s4 + $0x118] sm:$0xff]
    %v2467 = vld [vmem:[%s4 + $0x120] sm:$0xff]
    %v2468 = vld [vmem:[%s4 + $0x128] sm:$0xff]
    %v2469 = vld [vmem:[%s4 + $0x130] sm:$0xff]
    %v2470 = vld [vmem:[%s4 + $0x138] sm:$0xff]
    %v2471 = vld [vmem:[%s4 + $0x140] sm:$0xff]
    %v2472 = vld [vmem:[%s4 + $0x148] sm:$0xff]
    %v2473 = vld [vmem:[%s4 + $0x150] sm:$0xff]
    %v2474 = vld [vmem:[%s4 + $0x158] sm:$0xff]
    %v2475 = vld [vmem:[%s4 + $0x160] sm:$0xff]
    %v2476 = vld [vmem:[%s4 + $0x168] sm:$0xff]
    %v2477 = vld [vmem:[%s4 + $0x170] sm:$0xff]
    %v2478 = vld [vmem:[%s4 + $0x178] sm:$0xff]
    %2480 = vset.pattern.permute.xlu0 0
    %2481 = vperm.xlu0 %2480, %v2463
    %v2482 = vpop.permute.xlu0 %2481
    %2485 = vset.pattern.permute.xlu0 0
    %2486 = vperm.xlu0 %2485, %v2464
    %v2487 = vpop.permute.xlu0 %2486
    %2490 = vset.pattern.permute.xlu0 0
    %2491 = vperm.xlu0 %2490, %v2465
    %v2492 = vpop.permute.xlu0 %2491
    %2495 = vset.pattern.permute.xlu0 0
    %2496 = vperm.xlu0 %2495, %v2466
    %v2497 = vpop.permute.xlu0 %2496
    %2500 = vset.pattern.permute.xlu0 0
    %2501 = vperm.xlu0 %2500, %v2467
    %v2502 = vpop.permute.xlu0 %2501
    %2505 = vset.pattern.permute.xlu0 0
    %2506 = vperm.xlu0 %2505, %v2468
    %v2507 = vpop.permute.xlu0 %2506
    %2510 = vset.pattern.permute.xlu0 0
    %2511 = vperm.xlu0 %2510, %v2469
    %v2512 = vpop.permute.xlu0 %2511
    %2515 = vset.pattern.permute.xlu0 0
    %2516 = vperm.xlu0 %2515, %v2470
    %v2517 = vpop.permute.xlu0 %2516
    %2520 = vset.pattern.permute.xlu0 0
    %2521 = vperm.xlu0 %2520, %v2471
    %v2522 = vpop.permute.xlu0 %2521
    %2525 = vset.pattern.permute.xlu0 0
    %2526 = vperm.xlu0 %2525, %v2472
    %v2527 = vpop.permute.xlu0 %2526
    %2530 = vset.pattern.permute.xlu0 0
    %2531 = vperm.xlu0 %2530, %v2473
    %v2532 = vpop.permute.xlu0 %2531
    %2535 = vset.pattern.permute.xlu0 0
    %2536 = vperm.xlu0 %2535, %v2474
    %v2537 = vpop.permute.xlu0 %2536
    %2540 = vset.pattern.permute.xlu0 0
    %2541 = vperm.xlu0 %2540, %v2475
    %v2542 = vpop.permute.xlu0 %2541
    %2545 = vset.pattern.permute.xlu0 0
    %2546 = vperm.xlu0 %2545, %v2476
    %v2547 = vpop.permute.xlu0 %2546
    %2550 = vset.pattern.permute.xlu0 0
    %2551 = vperm.xlu0 %2550, %v2477
    %v2552 = vpop.permute.xlu0 %2551
    %2555 = vset.pattern.permute.xlu0 0
    %2556 = vperm.xlu0 %2555, %v2478
    %v2557 = vpop.permute.xlu0 %2556
    %v2591 = vunpack.c.l.b16 %v2431
    %v2592 = vunpack.c.h.b16 %v2431
    %v2593 = vunpack.c.l.b16 %v2432
    %v2594 = vunpack.c.h.b16 %v2432
    %v2595 = vunpack.c.l.b16 %v2433
    %v2596 = vunpack.c.h.b16 %v2433
    %v2597 = vunpack.c.l.b16 %v2434
    %v2598 = vunpack.c.h.b16 %v2434
    %v2599 = vunpack.c.l.b16 %v2435
    %v2600 = vunpack.c.h.b16 %v2435
    %v2601 = vunpack.c.l.b16 %v2436
    %v2602 = vunpack.c.h.b16 %v2436
    %v2603 = vunpack.c.l.b16 %v2437
    %v2604 = vunpack.c.h.b16 %v2437
    %v2605 = vunpack.c.l.b16 %v2438
    %v2606 = vunpack.c.h.b16 %v2438
    %v2607 = vunpack.c.l.b16 %v2439
    %v2608 = vunpack.c.h.b16 %v2439
    %v2609 = vunpack.c.l.b16 %v2440
    %v2610 = vunpack.c.h.b16 %v2440
    %v2611 = vunpack.c.l.b16 %v2441
    %v2612 = vunpack.c.h.b16 %v2441
    %v2613 = vunpack.c.l.b16 %v2442
    %v2614 = vunpack.c.h.b16 %v2442
    %v2615 = vunpack.c.l.b16 %v2443
    %v2616 = vunpack.c.h.b16 %v2443
    %v2617 = vunpack.c.l.b16 %v2444
    %v2618 = vunpack.c.h.b16 %v2444
    %v2619 = vunpack.c.l.b16 %v2445
    %v2620 = vunpack.c.h.b16 %v2445
    %v2621 = vunpack.c.l.b16 %v2446
    %v2622 = vunpack.c.h.b16 %v2446
    %v2623 = vunpack.c.l.b16 %v2447
    %v2624 = vunpack.c.h.b16 %v2447
    %v2625 = vunpack.c.l.b16 %v2448
    %v2626 = vunpack.c.h.b16 %v2448
    %v2627 = vunpack.c.l.b16 %v2449
    %v2628 = vunpack.c.h.b16 %v2449
    %v2629 = vunpack.c.l.b16 %v2450
    %v2630 = vunpack.c.h.b16 %v2450
    %v2631 = vunpack.c.l.b16 %v2451
    %v2632 = vunpack.c.h.b16 %v2451
    %v2633 = vunpack.c.l.b16 %v2452
    %v2634 = vunpack.c.h.b16 %v2452
    %v2635 = vunpack.c.l.b16 %v2453
    %v2636 = vunpack.c.h.b16 %v2453
    %v2637 = vunpack.c.l.b16 %v2454
    %v2638 = vunpack.c.h.b16 %v2454
    %v2639 = vunpack.c.l.b16 %v2455
    %v2640 = vunpack.c.h.b16 %v2455
    %v2641 = vunpack.c.l.b16 %v2456
    %v2642 = vunpack.c.h.b16 %v2456
    %v2643 = vunpack.c.l.b16 %v2457
    %v2644 = vunpack.c.h.b16 %v2457
    %v2645 = vunpack.c.l.b16 %v2458
    %v2646 = vunpack.c.h.b16 %v2458
    %v2647 = vunpack.c.l.b16 %v2459
    %v2648 = vunpack.c.h.b16 %v2459
    %v2649 = vunpack.c.l.b16 %v2460
    %v2650 = vunpack.c.h.b16 %v2460
    %v2651 = vunpack.c.l.b16 %v2461
    %v2652 = vunpack.c.h.b16 %v2461
    %v2653 = vunpack.c.l.b16 %v2462
    %v2654 = vunpack.c.h.b16 %v2462
    %v2655 = vpack.c.b16 %v2595, %v2591
    %v2656 = vpack.c.b16 %v2596, %v2592
    %v2657 = vpack.c.b16 %v2597, %v2593
    %v2658 = vpack.c.b16 %v2598, %v2594
    %v2659 = vpack.c.b16 %v2603, %v2599
    %v2660 = vpack.c.b16 %v2604, %v2600
    %v2661 = vpack.c.b16 %v2605, %v2601
    %v2662 = vpack.c.b16 %v2606, %v2602
    %v2663 = vpack.c.b16 %v2611, %v2607
    %v2664 = vpack.c.b16 %v2612, %v2608
    %v2665 = vpack.c.b16 %v2613, %v2609
    %v2666 = vpack.c.b16 %v2614, %v2610
    %v2667 = vpack.c.b16 %v2619, %v2615
    %v2668 = vpack.c.b16 %v2620, %v2616
    %v2669 = vpack.c.b16 %v2621, %v2617
    %v2670 = vpack.c.b16 %v2622, %v2618
    %v2671 = vpack.c.b16 %v2627, %v2623
    %v2672 = vpack.c.b16 %v2628, %v2624
    %v2673 = vpack.c.b16 %v2629, %v2625
    %v2674 = vpack.c.b16 %v2630, %v2626
    %v2675 = vpack.c.b16 %v2635, %v2631
    %v2676 = vpack.c.b16 %v2636, %v2632
    %v2677 = vpack.c.b16 %v2637, %v2633
    %v2678 = vpack.c.b16 %v2638, %v2634
    %v2679 = vpack.c.b16 %v2643, %v2639
    %v2680 = vpack.c.b16 %v2644, %v2640
    %v2681 = vpack.c.b16 %v2645, %v2641
    %v2682 = vpack.c.b16 %v2646, %v2642
    %v2683 = vpack.c.b16 %v2651, %v2647
    %v2684 = vpack.c.b16 %v2652, %v2648
    %v2685 = vpack.c.b16 %v2653, %v2649
    %v2686 = vpack.c.b16 %v2654, %v2650
    %2719 = vmatprep.subr.bf16.mxu0 0
    %2720 = vmatpush1.bf16.msra.mxu0 %v1103
    %2721 = vmatprep.subr.bf16.mxu0 0
    %2722 = vmatpush1.bf16.msra.mxu0 %v1104
    %2723 = vmatprep.subr.bf16.mxu0 0
    %2724 = vmatpush1.bf16.msra.mxu0 %v1105
    %2725 = vmatprep.subr.bf16.mxu0 0
    %2726 = vmatpush1.bf16.msra.mxu0 %v1106
    %2727 = vmatprep.subr.bf16.mxu0 0
    %2728 = vmatpush1.bf16.msra.mxu0 %v1107
    %2729 = vmatprep.subr.bf16.mxu0 0
    %2730 = vmatpush1.bf16.msra.mxu0 %v1108
    %2731 = vmatprep.subr.bf16.mxu0 0
    %2732 = vmatpush1.bf16.msra.mxu0 %v1109
    %2733 = vmatprep.subr.bf16.mxu0 0
    %2734 = vmatpush1.bf16.msra.mxu0 %v1110
    %2735 = vmatprep.subr.bf16.mxu0 0
    %2736 = vmatpush1.bf16.msra.mxu0 %v1111
    %2737 = vmatprep.subr.bf16.mxu0 0
    %2738 = vmatpush1.bf16.msra.mxu0 %v1112
    %2739 = vmatprep.subr.bf16.mxu0 0
    %2740 = vmatpush1.bf16.msra.mxu0 %v1113
    %2741 = vmatprep.subr.bf16.mxu0 0
    %2742 = vmatpush1.bf16.msra.mxu0 %v1114
    %2743 = vmatprep.subr.bf16.mxu0 0
    %2744 = vmatpush1.bf16.msra.mxu0 %v1115
    %2745 = vmatprep.subr.bf16.mxu0 0
    %2746 = vmatpush1.bf16.msra.mxu0 %v1116
    %2747 = vmatprep.subr.bf16.mxu0 0
    %2748 = vmatpush1.bf16.msra.mxu0 %v1117
    %2749 = vmatprep.subr.bf16.mxu0 0
    %2750 = vmatpush1.bf16.msra.mxu0 %v1118
    %2751 = vmatprep.mubr.bf16.mxu0 %v2656
    %2752 = vmatmul.mubr.bf16.gmra.mrb[0].mxu0 %v2655
    %v2753 = vpop.f32.mrb[0].mxu0
    %v2754 = vadd.f32 %v2482, %v2753
    %v2755 = vpop.f32.mrb[0].mxu0
    %v2756 = vpop.f32.mrb[0].mxu0
    %v2757 = vadd.f32 %v2487, %v2756
    %v2758 = vpop.f32.mrb[0].mxu0
    %2759 = vmatprep.mubr.bf16.mxu0 %v2660
    %2760 = vmatmul.mubr.bf16.gmra.mrb[0].mxu0 %v2659
    %v2761 = vpop.f32.mrb[0].mxu0
    %v2762 = vadd.f32 %v2492, %v2761
    %v2763 = vpop.f32.mrb[0].mxu0
    %v2764 = vpop.f32.mrb[0].mxu0
    %v2765 = vadd.f32 %v2497, %v2764
    %v2766 = vpop.f32.mrb[0].mxu0
    %2767 = vmatprep.mubr.bf16.mxu0 %v2664
    %2768 = vmatmul.mubr.bf16.gmra.mrb[0].mxu0 %v2663
    %v2769 = vpop.f32.mrb[0].mxu0
    %v2770 = vadd.f32 %v2502, %v2769
    %v2771 = vpop.f32.mrb[0].mxu0
    %v2772 = vpop.f32.mrb[0].mxu0
    %v2773 = vadd.f32 %v2507, %v2772
    %v2774 = vpop.f32.mrb[0].mxu0
    %2775 = vmatprep.mubr.bf16.mxu0 %v2668
    %2776 = vmatmul.mubr.bf16.gmra.mrb[0].mxu0 %v2667
    %v2777 = vpop.f32.mrb[0].mxu0
    %v2778 = vadd.f32 %v2512, %v2777
    %v2779 = vpop.f32.mrb[0].mxu0
    %v2780 = vpop.f32.mrb[0].mxu0
    %v2781 = vadd.f32 %v2517, %v2780
    %v2782 = vpop.f32.mrb[0].mxu0
    %2783 = vmatprep.mubr.bf16.mxu0 %v2672
    %2784 = vmatmul.mubr.bf16.gmra.mrb[0].mxu0 %v2671
    %v2785 = vpop.f32.mrb[0].mxu0
    %v2786 = vadd.f32 %v2522, %v2785
    %v2787 = vpop.f32.mrb[0].mxu0
    %v2788 = vpop.f32.mrb[0].mxu0
    %v2789 = vadd.f32 %v2527, %v2788
    %v2790 = vpop.f32.mrb[0].mxu0
    %2791 = vmatprep.mubr.bf16.mxu0 %v2676
    %2792 = vmatmul.mubr.bf16.gmra.mrb[0].mxu0 %v2675
    %v2793 = vpop.f32.mrb[0].mxu0
    %v2794 = vadd.f32 %v2532, %v2793
    %v2795 = vpop.f32.mrb[0].mxu0
    %v2796 = vpop.f32.mrb[0].mxu0
    %v2797 = vadd.f32 %v2537, %v2796
    %v2798 = vpop.f32.mrb[0].mxu0
    %2799 = vmatprep.mubr.bf16.mxu0 %v2680
    %2800 = vmatmul.mubr.bf16.gmra.mrb[0].mxu0 %v2679
    %v2801 = vpop.f32.mrb[0].mxu0
    %v2802 = vadd.f32 %v2542, %v2801
    %v2803 = vpop.f32.mrb[0].mxu0
    %v2804 = vpop.f32.mrb[0].mxu0
    %v2805 = vadd.f32 %v2547, %v2804
    %v2806 = vpop.f32.mrb[0].mxu0
    %2807 = vmatprep.mubr.bf16.mxu0 %v2684
    %2808 = vmatmul.mubr.bf16.gmra.mrb[0].mxu0 %v2683
    %v2809 = vpop.f32.mrb[0].mxu0
    %v2810 = vadd.f32 %v2552, %v2809
    %v2811 = vpop.f32.mrb[0].mxu0
    %v2812 = vpop.f32.mrb[0].mxu0
    %v2813 = vadd.f32 %v2557, %v2812
    %v2814 = vpop.f32.mrb[0].mxu0
    %2815 = vdwg.mxu0
    %2816 = vmatprep.subr.bf16.mxu0 0
    %2817 = vmatpush1.bf16.msra.mxu0 %v1119
    %2818 = vmatprep.subr.bf16.mxu0 0
    %2819 = vmatpush1.bf16.msra.mxu0 %v1120
    %2820 = vmatprep.subr.bf16.mxu0 0
    %2821 = vmatpush1.bf16.msra.mxu0 %v1121
    %2822 = vmatprep.subr.bf16.mxu0 0
    %2823 = vmatpush1.bf16.msra.mxu0 %v1122
    %2824 = vmatprep.subr.bf16.mxu0 0
    %2825 = vmatpush1.bf16.msra.mxu0 %v1123
    %2826 = vmatprep.subr.bf16.mxu0 0
    %2827 = vmatpush1.bf16.msra.mxu0 %v1124
    %2828 = vmatprep.subr.bf16.mxu0 0
    %2829 = vmatpush1.bf16.msra.mxu0 %v1125
    %2830 = vmatprep.subr.bf16.mxu0 0
    %2831 = vmatpush1.bf16.msra.mxu0 %v1126
    %2832 = vmatprep.subr.bf16.mxu0 0
    %2833 = vmatpush1.bf16.msra.mxu0 %v1127
    %2834 = vmatprep.subr.bf16.mxu0 0
    %2835 = vmatpush1.bf16.msra.mxu0 %v1128
    %2836 = vmatprep.subr.bf16.mxu0 0
    %2837 = vmatpush1.bf16.msra.mxu0 %v1129
    %2838 = vmatprep.subr.bf16.mxu0 0
    %2839 = vmatpush1.bf16.msra.mxu0 %v1130
    %2840 = vmatprep.subr.bf16.mxu0 0
    %2841 = vmatpush1.bf16.msra.mxu0 %v1131
    %2842 = vmatprep.subr.bf16.mxu0 0
    %2843 = vmatpush1.bf16.msra.mxu0 %v1132
    %2844 = vmatprep.subr.bf16.mxu0 0
    %2845 = vmatpush1.bf16.msra.mxu0 %v1133
    %2846 = vmatprep.subr.bf16.mxu0 0
    %2847 = vmatpush1.bf16.msra.mxu0 %v1134
    %2848 = vmatprep.mubr.bf16.mxu0 %v2658
    %2849 = vmatmul.mubr.bf16.gmra.mrb[0].mxu0 %v2657
    %v2850 = vpop.f32.mrb[0].mxu0
    %v2851 = vadd.f32 %v2754, %v2850
    %v2852 = vpop.f32.mrb[0].mxu0
    %v2853 = vpop.f32.mrb[0].mxu0
    %v2854 = vadd.f32 %v2757, %v2853
    %v2855 = vpop.f32.mrb[0].mxu0
    %2856 = vmatprep.mubr.bf16.mxu0 %v2662
    %2857 = vmatmul.mubr.bf16.gmra.mrb[0].mxu0 %v2661
    %v2858 = vpop.f32.mrb[0].mxu0
    %v2859 = vadd.f32 %v2762, %v2858
    %v2860 = vpop.f32.mrb[0].mxu0
    %v2861 = vpop.f32.mrb[0].mxu0
    %v2862 = vadd.f32 %v2765, %v2861
    %v2863 = vpop.f32.mrb[0].mxu0
    %2864 = vmatprep.mubr.bf16.mxu0 %v2666
    %2865 = vmatmul.mubr.bf16.gmra.mrb[0].mxu0 %v2665
    %v2866 = vpop.f32.mrb[0].mxu0
    %v2867 = vadd.f32 %v2770, %v2866
    %v2868 = vpop.f32.mrb[0].mxu0
    %v2869 = vpop.f32.mrb[0].mxu0
    %v2870 = vadd.f32 %v2773, %v2869
    %v2871 = vpop.f32.mrb[0].mxu0
    %2872 = vmatprep.mubr.bf16.mxu0 %v2670
    %2873 = vmatmul.mubr.bf16.gmra.mrb[0].mxu0 %v2669
    %v2874 = vpop.f32.mrb[0].mxu0
    %v2875 = vadd.f32 %v2778, %v2874
    %v2876 = vpop.f32.mrb[0].mxu0
    %v2877 = vpop.f32.mrb[0].mxu0
    %v2878 = vadd.f32 %v2781, %v2877
    %v2879 = vpop.f32.mrb[0].mxu0
    %2880 = vmatprep.mubr.bf16.mxu0 %v2674
    %2881 = vmatmul.mubr.bf16.gmra.mrb[0].mxu0 %v2673
    %v2882 = vpop.f32.mrb[0].mxu0
    %v2883 = vadd.f32 %v2786, %v2882
    %v2884 = vpop.f32.mrb[0].mxu0
    %v2885 = vpop.f32.mrb[0].mxu0
    %v2886 = vadd.f32 %v2789, %v2885
    %v2887 = vpop.f32.mrb[0].mxu0
    %2888 = vmatprep.mubr.bf16.mxu0 %v2678
    %2889 = vmatmul.mubr.bf16.gmra.mrb[0].mxu0 %v2677
    %v2890 = vpop.f32.mrb[0].mxu0
    %v2891 = vadd.f32 %v2794, %v2890
    %v2892 = vpop.f32.mrb[0].mxu0
    %v2893 = vpop.f32.mrb[0].mxu0
    %v2894 = vadd.f32 %v2797, %v2893
    %v2895 = vpop.f32.mrb[0].mxu0
    %2896 = vmatprep.mubr.bf16.mxu0 %v2682
    %2897 = vmatmul.mubr.bf16.gmra.mrb[0].mxu0 %v2681
    %v2898 = vpop.f32.mrb[0].mxu0
    %v2899 = vadd.f32 %v2802, %v2898
    %v2900 = vpop.f32.mrb[0].mxu0
    %v2901 = vpop.f32.mrb[0].mxu0
    %v2902 = vadd.f32 %v2805, %v2901
    %v2903 = vpop.f32.mrb[0].mxu0
    %2904 = vmatprep.mubr.bf16.mxu0 %v2686
    %2905 = vmatmul.mubr.bf16.gmra.mrb[0].mxu0 %v2685
    %v2906 = vpop.f32.mrb[0].mxu0
    %v2907 = vadd.f32 %v2810, %v2906
    %v2908 = vpop.f32.mrb[0].mxu0
    %v2909 = vpop.f32.mrb[0].mxu0
    %v2910 = vadd.f32 %v2813, %v2909
    %v2911 = vpop.f32.mrb[0].mxu0
    %2912 = vdwg.mxu0
    %v2913 = vmax.f32 %v2851, 0.0
    %v2914 = vmax.f32 %v2854, 0.0
    %v2915 = vmax.f32 %v2859, 0.0
    %v2916 = vmax.f32 %v2862, 0.0
    %v2917 = vmax.f32 %v2867, 0.0
    %v2918 = vmax.f32 %v2870, 0.0
    %v2919 = vmax.f32 %v2875, 0.0
    %v2920 = vmax.f32 %v2878, 0.0
    %v2921 = vmax.f32 %v2883, 0.0
    %v2922 = vmax.f32 %v2886, 0.0
    %v2923 = vmax.f32 %v2891, 0.0
    %v2924 = vmax.f32 %v2894, 0.0
    %v2925 = vmax.f32 %v2899, 0.0
    %v2926 = vmax.f32 %v2902, 0.0
    %v2927 = vmax.f32 %v2907, 0.0
    %v2928 = vmax.f32 %v2910, 0.0
    %v2929 = vld [vmem:[%s5 + $0x100] sm:$0xff]
    %v2930 = vld [vmem:[%s5 + $0x108] sm:$0xff]
    %v2931 = vld [vmem:[%s5 + $0x110] sm:$0xff]
    %v2932 = vld [vmem:[%s5 + $0x118] sm:$0xff]
    %v2933 = vld [vmem:[%s5 + $0x120] sm:$0xff]
    %v2934 = vld [vmem:[%s5 + $0x128] sm:$0xff]
    %v2935 = vld [vmem:[%s5 + $0x130] sm:$0xff]
    %v2936 = vld [vmem:[%s5 + $0x138] sm:$0xff]
    %v2937 = vld [vmem:[%s5 + $0x140] sm:$0xff]
    %v2938 = vld [vmem:[%s5 + $0x148] sm:$0xff]
    %v2939 = vld [vmem:[%s5 + $0x150] sm:$0xff]
    %v2940 = vld [vmem:[%s5 + $0x158] sm:$0xff]
    %v2941 = vld [vmem:[%s5 + $0x160] sm:$0xff]
    %v2942 = vld [vmem:[%s5 + $0x168] sm:$0xff]
    %v2943 = vld [vmem:[%s5 + $0x170] sm:$0xff]
    %v2944 = vld [vmem:[%s5 + $0x178] sm:$0xff]
    %2946 = vset.pattern.permute.xlu0 0
    %2947 = vperm.xlu0 %2946, %v2929
    %v2948 = vpop.permute.xlu0 %2947
    %2951 = vset.pattern.permute.xlu0 0
    %2952 = vperm.xlu0 %2951, %v2930
    %v2953 = vpop.permute.xlu0 %2952
    %2956 = vset.pattern.permute.xlu0 0
    %2957 = vperm.xlu0 %2956, %v2931
    %v2958 = vpop.permute.xlu0 %2957
    %2961 = vset.pattern.permute.xlu0 0
    %2962 = vperm.xlu0 %2961, %v2932
    %v2963 = vpop.permute.xlu0 %2962
    %2966 = vset.pattern.permute.xlu0 0
    %2967 = vperm.xlu0 %2966, %v2933
    %v2968 = vpop.permute.xlu0 %2967
    %2971 = vset.pattern.permute.xlu0 0
    %2972 = vperm.xlu0 %2971, %v2934
    %v2973 = vpop.permute.xlu0 %2972
    %2976 = vset.pattern.permute.xlu0 0
    %2977 = vperm.xlu0 %2976, %v2935
    %v2978 = vpop.permute.xlu0 %2977
    %2981 = vset.pattern.permute.xlu0 0
    %2982 = vperm.xlu0 %2981, %v2936
    %v2983 = vpop.permute.xlu0 %2982
    %2986 = vset.pattern.permute.xlu0 0
    %2987 = vperm.xlu0 %2986, %v2937
    %v2988 = vpop.permute.xlu0 %2987
    %2991 = vset.pattern.permute.xlu0 0
    %2992 = vperm.xlu0 %2991, %v2938
    %v2993 = vpop.permute.xlu0 %2992
    %2996 = vset.pattern.permute.xlu0 0
    %2997 = vperm.xlu0 %2996, %v2939
    %v2998 = vpop.permute.xlu0 %2997
    %3001 = vset.pattern.permute.xlu0 0
    %3002 = vperm.xlu0 %3001, %v2940
    %v3003 = vpop.permute.xlu0 %3002
    %3006 = vset.pattern.permute.xlu0 0
    %3007 = vperm.xlu0 %3006, %v2941
    %v3008 = vpop.permute.xlu0 %3007
    %3011 = vset.pattern.permute.xlu0 0
    %3012 = vperm.xlu0 %3011, %v2942
    %v3013 = vpop.permute.xlu0 %3012
    %3016 = vset.pattern.permute.xlu0 0
    %3017 = vperm.xlu0 %3016, %v2943
    %v3018 = vpop.permute.xlu0 %3017
    %3021 = vset.pattern.permute.xlu0 0
    %3022 = vperm.xlu0 %3021, %v2944
    %v3023 = vpop.permute.xlu0 %3022
    %v3025 = vmul.f32 %v2913, %v2948
    %v3026 = vmul.f32 %v2914, %v2953
    %v3027 = vmul.f32 %v2915, %v2958
    %v3028 = vmul.f32 %v2916, %v2963
    %v3029 = vmul.f32 %v2917, %v2968
    %v3030 = vmul.f32 %v2918, %v2973
    %v3031 = vmul.f32 %v2919, %v2978
    %v3032 = vmul.f32 %v2920, %v2983
    %v3033 = vmul.f32 %v2921, %v2988
    %v3034 = vmul.f32 %v2922, %v2993
    %v3035 = vmul.f32 %v2923, %v2998
    %v3036 = vmul.f32 %v2924, %v3003
    %v3037 = vmul.f32 %v2925, %v3008
    %v3038 = vmul.f32 %v2926, %v3013
    %v3039 = vmul.f32 %v2927, %v3018
    %v3040 = vmul.f32 %v2928, %v3023
    %v3041 = vsel %vm1745, %v3025, 0.0
    %v3042 = vsel %vm1745, %v3026, 0.0
    %v3043 = vadd.f32 %v3041, %v3042
    %v3044 = vsel %vm1745, %v3027, 0.0
    %v3045 = vadd.f32 %v3043, %v3044
    %v3046 = vsel %vm1745, %v3028, 0.0
    %v3047 = vadd.f32 %v3045, %v3046
    %v3048 = vsel %vm1745, %v3029, 0.0
    %v3049 = vadd.f32 %v3047, %v3048
    %v3050 = vsel %vm1745, %v3030, 0.0
    %v3051 = vadd.f32 %v3049, %v3050
    %v3052 = vsel %vm1745, %v3031, 0.0
    %v3053 = vadd.f32 %v3051, %v3052
    %v3054 = vsel %vm1745, %v3032, 0.0
    %v3055 = vadd.f32 %v3053, %v3054
    %v3056 = vsel %vm1745, %v3033, 0.0
    %v3057 = vadd.f32 %v3055, %v3056
    %v3058 = vsel %vm1745, %v3034, 0.0
    %v3059 = vadd.f32 %v3057, %v3058
    %v3060 = vsel %vm1745, %v3035, 0.0
    %v3061 = vadd.f32 %v3059, %v3060
    %v3062 = vsel %vm1745, %v3036, 0.0
    %v3063 = vadd.f32 %v3061, %v3062
    %v3064 = vsel %vm1745, %v3037, 0.0
    %v3065 = vadd.f32 %v3063, %v3064
    %v3066 = vsel %vm1745, %v3038, 0.0
    %v3067 = vadd.f32 %v3065, %v3066
    %v3068 = vsel %vm1745, %v3039, 0.0
    %v3069 = vadd.f32 %v3067, %v3068
    %v3070 = vsel %vm1745, %v3040, 0.0
    %v3071 = vadd.f32 %v3069, %v3070
    %v3072 = vrot.slane %v3071, 4
    %v3073 = vadd.f32 %v3071, %v3072
    %v3074 = vrot.slane %v3073, 2
    %v3075 = vadd.f32 %v3073, %v3074
    %v3076 = vrot.slane %v3075, 1
    %v3077 = vadd.f32 %v3075, %v3076
    %v3078 = vadd.f32 %v2430, %v3077
    %v3079 = vld [vmem:[%s3 + $0x300] sm:$0xff]
    %v3080 = vld [vmem:[%s3 + $0x308] sm:$0xff]
    %v3081 = vld [vmem:[%s3 + $0x310] sm:$0xff]
    %v3082 = vld [vmem:[%s3 + $0x318] sm:$0xff]
    %v3083 = vld [vmem:[%s3 + $0x320] sm:$0xff]
    %v3084 = vld [vmem:[%s3 + $0x328] sm:$0xff]
    %v3085 = vld [vmem:[%s3 + $0x330] sm:$0xff]
    %v3086 = vld [vmem:[%s3 + $0x338] sm:$0xff]
    %v3087 = vld [vmem:[%s3 + $0x340] sm:$0xff]
    %v3088 = vld [vmem:[%s3 + $0x348] sm:$0xff]
    %v3089 = vld [vmem:[%s3 + $0x350] sm:$0xff]
    %v3090 = vld [vmem:[%s3 + $0x358] sm:$0xff]
    %v3091 = vld [vmem:[%s3 + $0x360] sm:$0xff]
    %v3092 = vld [vmem:[%s3 + $0x368] sm:$0xff]
    %v3093 = vld [vmem:[%s3 + $0x370] sm:$0xff]
    %v3094 = vld [vmem:[%s3 + $0x378] sm:$0xff]
    %v3095 = vld [vmem:[%s3 + $0x380] sm:$0xff]
    %v3096 = vld [vmem:[%s3 + $0x388] sm:$0xff]
    %v3097 = vld [vmem:[%s3 + $0x390] sm:$0xff]
    %v3098 = vld [vmem:[%s3 + $0x398] sm:$0xff]
    %v3099 = vld [vmem:[%s3 + $0x3a0] sm:$0xff]
    %v3100 = vld [vmem:[%s3 + $0x3a8] sm:$0xff]
    %v3101 = vld [vmem:[%s3 + $0x3b0] sm:$0xff]
    %v3102 = vld [vmem:[%s3 + $0x3b8] sm:$0xff]
    %v3103 = vld [vmem:[%s3 + $0x3c0] sm:$0xff]
    %v3104 = vld [vmem:[%s3 + $0x3c8] sm:$0xff]
    %v3105 = vld [vmem:[%s3 + $0x3d0] sm:$0xff]
    %v3106 = vld [vmem:[%s3 + $0x3d8] sm:$0xff]
    %v3107 = vld [vmem:[%s3 + $0x3e0] sm:$0xff]
    %v3108 = vld [vmem:[%s3 + $0x3e8] sm:$0xff]
    %v3109 = vld [vmem:[%s3 + $0x3f0] sm:$0xff]
    %v3110 = vld [vmem:[%s3 + $0x3f8] sm:$0xff]
    %v3111 = vld [vmem:[%s4 + $0x180] sm:$0xff]
    %v3112 = vld [vmem:[%s4 + $0x188] sm:$0xff]
    %v3113 = vld [vmem:[%s4 + $0x190] sm:$0xff]
    %v3114 = vld [vmem:[%s4 + $0x198] sm:$0xff]
    %v3115 = vld [vmem:[%s4 + $0x1a0] sm:$0xff]
    %v3116 = vld [vmem:[%s4 + $0x1a8] sm:$0xff]
    %v3117 = vld [vmem:[%s4 + $0x1b0] sm:$0xff]
    %v3118 = vld [vmem:[%s4 + $0x1b8] sm:$0xff]
    %v3119 = vld [vmem:[%s4 + $0x1c0] sm:$0xff]
    %v3120 = vld [vmem:[%s4 + $0x1c8] sm:$0xff]
    %v3121 = vld [vmem:[%s4 + $0x1d0] sm:$0xff]
    %v3122 = vld [vmem:[%s4 + $0x1d8] sm:$0xff]
    %v3123 = vld [vmem:[%s4 + $0x1e0] sm:$0xff]
    %v3124 = vld [vmem:[%s4 + $0x1e8] sm:$0xff]
    %v3125 = vld [vmem:[%s4 + $0x1f0] sm:$0xff]
    %v3126 = vld [vmem:[%s4 + $0x1f8] sm:$0xff]
    %3128 = vset.pattern.permute.xlu0 0
    %3129 = vperm.xlu0 %3128, %v3111
    %v3130 = vpop.permute.xlu0 %3129
    %3133 = vset.pattern.permute.xlu0 0
    %3134 = vperm.xlu0 %3133, %v3112
    %v3135 = vpop.permute.xlu0 %3134
    %3138 = vset.pattern.permute.xlu0 0
    %3139 = vperm.xlu0 %3138, %v3113
    %v3140 = vpop.permute.xlu0 %3139
    %3143 = vset.pattern.permute.xlu0 0
    %3144 = vperm.xlu0 %3143, %v3114
    %v3145 = vpop.permute.xlu0 %3144
    %3148 = vset.pattern.permute.xlu0 0
    %3149 = vperm.xlu0 %3148, %v3115
    %v3150 = vpop.permute.xlu0 %3149
    %3153 = vset.pattern.permute.xlu0 0
    %3154 = vperm.xlu0 %3153, %v3116
    %v3155 = vpop.permute.xlu0 %3154
    %3158 = vset.pattern.permute.xlu0 0
    %3159 = vperm.xlu0 %3158, %v3117
    %v3160 = vpop.permute.xlu0 %3159
    %3163 = vset.pattern.permute.xlu0 0
    %3164 = vperm.xlu0 %3163, %v3118
    %v3165 = vpop.permute.xlu0 %3164
    %3168 = vset.pattern.permute.xlu0 0
    %3169 = vperm.xlu0 %3168, %v3119
    %v3170 = vpop.permute.xlu0 %3169
    %3173 = vset.pattern.permute.xlu0 0
    %3174 = vperm.xlu0 %3173, %v3120
    %v3175 = vpop.permute.xlu0 %3174
    %3178 = vset.pattern.permute.xlu0 0
    %3179 = vperm.xlu0 %3178, %v3121
    %v3180 = vpop.permute.xlu0 %3179
    %3183 = vset.pattern.permute.xlu0 0
    %3184 = vperm.xlu0 %3183, %v3122
    %v3185 = vpop.permute.xlu0 %3184
    %3188 = vset.pattern.permute.xlu0 0
    %3189 = vperm.xlu0 %3188, %v3123
    %v3190 = vpop.permute.xlu0 %3189
    %3193 = vset.pattern.permute.xlu0 0
    %3194 = vperm.xlu0 %3193, %v3124
    %v3195 = vpop.permute.xlu0 %3194
    %3198 = vset.pattern.permute.xlu0 0
    %3199 = vperm.xlu0 %3198, %v3125
    %v3200 = vpop.permute.xlu0 %3199
    %3203 = vset.pattern.permute.xlu0 0
    %3204 = vperm.xlu0 %3203, %v3126
    %v3205 = vpop.permute.xlu0 %3204
    %v3239 = vunpack.c.l.b16 %v3079
    %v3240 = vunpack.c.h.b16 %v3079
    %v3241 = vunpack.c.l.b16 %v3080
    %v3242 = vunpack.c.h.b16 %v3080
    %v3243 = vunpack.c.l.b16 %v3081
    %v3244 = vunpack.c.h.b16 %v3081
    %v3245 = vunpack.c.l.b16 %v3082
    %v3246 = vunpack.c.h.b16 %v3082
    %v3247 = vunpack.c.l.b16 %v3083
    %v3248 = vunpack.c.h.b16 %v3083
    %v3249 = vunpack.c.l.b16 %v3084
    %v3250 = vunpack.c.h.b16 %v3084
    %v3251 = vunpack.c.l.b16 %v3085
    %v3252 = vunpack.c.h.b16 %v3085
    %v3253 = vunpack.c.l.b16 %v3086
    %v3254 = vunpack.c.h.b16 %v3086
    %v3255 = vunpack.c.l.b16 %v3087
    %v3256 = vunpack.c.h.b16 %v3087
    %v3257 = vunpack.c.l.b16 %v3088
    %v3258 = vunpack.c.h.b16 %v3088
    %v3259 = vunpack.c.l.b16 %v3089
    %v3260 = vunpack.c.h.b16 %v3089
    %v3261 = vunpack.c.l.b16 %v3090
    %v3262 = vunpack.c.h.b16 %v3090
    %v3263 = vunpack.c.l.b16 %v3091
    %v3264 = vunpack.c.h.b16 %v3091
    %v3265 = vunpack.c.l.b16 %v3092
    %v3266 = vunpack.c.h.b16 %v3092
    %v3267 = vunpack.c.l.b16 %v3093
    %v3268 = vunpack.c.h.b16 %v3093
    %v3269 = vunpack.c.l.b16 %v3094
    %v3270 = vunpack.c.h.b16 %v3094
    %v3271 = vunpack.c.l.b16 %v3095
    %v3272 = vunpack.c.h.b16 %v3095
    %v3273 = vunpack.c.l.b16 %v3096
    %v3274 = vunpack.c.h.b16 %v3096
    %v3275 = vunpack.c.l.b16 %v3097
    %v3276 = vunpack.c.h.b16 %v3097
    %v3277 = vunpack.c.l.b16 %v3098
    %v3278 = vunpack.c.h.b16 %v3098
    %v3279 = vunpack.c.l.b16 %v3099
    %v3280 = vunpack.c.h.b16 %v3099
    %v3281 = vunpack.c.l.b16 %v3100
    %v3282 = vunpack.c.h.b16 %v3100
    %v3283 = vunpack.c.l.b16 %v3101
    %v3284 = vunpack.c.h.b16 %v3101
    %v3285 = vunpack.c.l.b16 %v3102
    %v3286 = vunpack.c.h.b16 %v3102
    %v3287 = vunpack.c.l.b16 %v3103
    %v3288 = vunpack.c.h.b16 %v3103
    %v3289 = vunpack.c.l.b16 %v3104
    %v3290 = vunpack.c.h.b16 %v3104
    %v3291 = vunpack.c.l.b16 %v3105
    %v3292 = vunpack.c.h.b16 %v3105
    %v3293 = vunpack.c.l.b16 %v3106
    %v3294 = vunpack.c.h.b16 %v3106
    %v3295 = vunpack.c.l.b16 %v3107
    %v3296 = vunpack.c.h.b16 %v3107
    %v3297 = vunpack.c.l.b16 %v3108
    %v3298 = vunpack.c.h.b16 %v3108
    %v3299 = vunpack.c.l.b16 %v3109
    %v3300 = vunpack.c.h.b16 %v3109
    %v3301 = vunpack.c.l.b16 %v3110
    %v3302 = vunpack.c.h.b16 %v3110
    %v3303 = vpack.c.b16 %v3243, %v3239
    %v3304 = vpack.c.b16 %v3244, %v3240
    %v3305 = vpack.c.b16 %v3245, %v3241
    %v3306 = vpack.c.b16 %v3246, %v3242
    %v3307 = vpack.c.b16 %v3251, %v3247
    %v3308 = vpack.c.b16 %v3252, %v3248
    %v3309 = vpack.c.b16 %v3253, %v3249
    %v3310 = vpack.c.b16 %v3254, %v3250
    %v3311 = vpack.c.b16 %v3259, %v3255
    %v3312 = vpack.c.b16 %v3260, %v3256
    %v3313 = vpack.c.b16 %v3261, %v3257
    %v3314 = vpack.c.b16 %v3262, %v3258
    %v3315 = vpack.c.b16 %v3267, %v3263
    %v3316 = vpack.c.b16 %v3268, %v3264
    %v3317 = vpack.c.b16 %v3269, %v3265
    %v3318 = vpack.c.b16 %v3270, %v3266
    %v3319 = vpack.c.b16 %v3275, %v3271
    %v3320 = vpack.c.b16 %v3276, %v3272
    %v3321 = vpack.c.b16 %v3277, %v3273
    %v3322 = vpack.c.b16 %v3278, %v3274
    %v3323 = vpack.c.b16 %v3283, %v3279
    %v3324 = vpack.c.b16 %v3284, %v3280
    %v3325 = vpack.c.b16 %v3285, %v3281
    %v3326 = vpack.c.b16 %v3286, %v3282
    %v3327 = vpack.c.b16 %v3291, %v3287
    %v3328 = vpack.c.b16 %v3292, %v3288
    %v3329 = vpack.c.b16 %v3293, %v3289
    %v3330 = vpack.c.b16 %v3294, %v3290
    %v3331 = vpack.c.b16 %v3299, %v3295
    %v3332 = vpack.c.b16 %v3300, %v3296
    %v3333 = vpack.c.b16 %v3301, %v3297
    %v3334 = vpack.c.b16 %v3302, %v3298
    %3367 = vmatprep.subr.bf16.mxu0 0
    %3368 = vmatpush1.bf16.msra.mxu0 %v1103
    %3369 = vmatprep.subr.bf16.mxu0 0
    %3370 = vmatpush1.bf16.msra.mxu0 %v1104
    %3371 = vmatprep.subr.bf16.mxu0 0
    %3372 = vmatpush1.bf16.msra.mxu0 %v1105
    %3373 = vmatprep.subr.bf16.mxu0 0
    %3374 = vmatpush1.bf16.msra.mxu0 %v1106
    %3375 = vmatprep.subr.bf16.mxu0 0
    %3376 = vmatpush1.bf16.msra.mxu0 %v1107
    %3377 = vmatprep.subr.bf16.mxu0 0
    %3378 = vmatpush1.bf16.msra.mxu0 %v1108
    %3379 = vmatprep.subr.bf16.mxu0 0
    %3380 = vmatpush1.bf16.msra.mxu0 %v1109
    %3381 = vmatprep.subr.bf16.mxu0 0
    %3382 = vmatpush1.bf16.msra.mxu0 %v1110
    %3383 = vmatprep.subr.bf16.mxu0 0
    %3384 = vmatpush1.bf16.msra.mxu0 %v1111
    %3385 = vmatprep.subr.bf16.mxu0 0
    %3386 = vmatpush1.bf16.msra.mxu0 %v1112
    %3387 = vmatprep.subr.bf16.mxu0 0
    %3388 = vmatpush1.bf16.msra.mxu0 %v1113
    %3389 = vmatprep.subr.bf16.mxu0 0
    %3390 = vmatpush1.bf16.msra.mxu0 %v1114
    %3391 = vmatprep.subr.bf16.mxu0 0
    %3392 = vmatpush1.bf16.msra.mxu0 %v1115
    %3393 = vmatprep.subr.bf16.mxu0 0
    %3394 = vmatpush1.bf16.msra.mxu0 %v1116
    %3395 = vmatprep.subr.bf16.mxu0 0
    %3396 = vmatpush1.bf16.msra.mxu0 %v1117
    %3397 = vmatprep.subr.bf16.mxu0 0
    %3398 = vmatpush1.bf16.msra.mxu0 %v1118
    %3399 = vmatprep.mubr.bf16.mxu0 %v3304
    %3400 = vmatmul.mubr.bf16.gmra.mrb[0].mxu0 %v3303
    %v3401 = vpop.f32.mrb[0].mxu0
    %v3402 = vadd.f32 %v3130, %v3401
    %v3403 = vpop.f32.mrb[0].mxu0
    %v3404 = vpop.f32.mrb[0].mxu0
    %v3405 = vadd.f32 %v3135, %v3404
    %v3406 = vpop.f32.mrb[0].mxu0
    %3407 = vmatprep.mubr.bf16.mxu0 %v3308
    %3408 = vmatmul.mubr.bf16.gmra.mrb[0].mxu0 %v3307
    %v3409 = vpop.f32.mrb[0].mxu0
    %v3410 = vadd.f32 %v3140, %v3409
    %v3411 = vpop.f32.mrb[0].mxu0
    %v3412 = vpop.f32.mrb[0].mxu0
    %v3413 = vadd.f32 %v3145, %v3412
    %v3414 = vpop.f32.mrb[0].mxu0
    %3415 = vmatprep.mubr.bf16.mxu0 %v3312
    %3416 = vmatmul.mubr.bf16.gmra.mrb[0].mxu0 %v3311
    %v3417 = vpop.f32.mrb[0].mxu0
    %v3418 = vadd.f32 %v3150, %v3417
    %v3419 = vpop.f32.mrb[0].mxu0
    %v3420 = vpop.f32.mrb[0].mxu0
    %v3421 = vadd.f32 %v3155, %v3420
    %v3422 = vpop.f32.mrb[0].mxu0
    %3423 = vmatprep.mubr.bf16.mxu0 %v3316
    %3424 = vmatmul.mubr.bf16.gmra.mrb[0].mxu0 %v3315
    %v3425 = vpop.f32.mrb[0].mxu0
    %v3426 = vadd.f32 %v3160, %v3425
    %v3427 = vpop.f32.mrb[0].mxu0
    %v3428 = vpop.f32.mrb[0].mxu0
    %v3429 = vadd.f32 %v3165, %v3428
    %v3430 = vpop.f32.mrb[0].mxu0
    %3431 = vmatprep.mubr.bf16.mxu0 %v3320
    %3432 = vmatmul.mubr.bf16.gmra.mrb[0].mxu0 %v3319
    %v3433 = vpop.f32.mrb[0].mxu0
    %v3434 = vadd.f32 %v3170, %v3433
    %v3435 = vpop.f32.mrb[0].mxu0
    %v3436 = vpop.f32.mrb[0].mxu0
    %v3437 = vadd.f32 %v3175, %v3436
    %v3438 = vpop.f32.mrb[0].mxu0
    %3439 = vmatprep.mubr.bf16.mxu0 %v3324
    %3440 = vmatmul.mubr.bf16.gmra.mrb[0].mxu0 %v3323
    %v3441 = vpop.f32.mrb[0].mxu0
    %v3442 = vadd.f32 %v3180, %v3441
    %v3443 = vpop.f32.mrb[0].mxu0
    %v3444 = vpop.f32.mrb[0].mxu0
    %v3445 = vadd.f32 %v3185, %v3444
    %v3446 = vpop.f32.mrb[0].mxu0
    %3447 = vmatprep.mubr.bf16.mxu0 %v3328
    %3448 = vmatmul.mubr.bf16.gmra.mrb[0].mxu0 %v3327
    %v3449 = vpop.f32.mrb[0].mxu0
    %v3450 = vadd.f32 %v3190, %v3449
    %v3451 = vpop.f32.mrb[0].mxu0
    %v3452 = vpop.f32.mrb[0].mxu0
    %v3453 = vadd.f32 %v3195, %v3452
    %v3454 = vpop.f32.mrb[0].mxu0
    %3455 = vmatprep.mubr.bf16.mxu0 %v3332
    %3456 = vmatmul.mubr.bf16.gmra.mrb[0].mxu0 %v3331
    %v3457 = vpop.f32.mrb[0].mxu0
    %v3458 = vadd.f32 %v3200, %v3457
    %v3459 = vpop.f32.mrb[0].mxu0
    %v3460 = vpop.f32.mrb[0].mxu0
    %v3461 = vadd.f32 %v3205, %v3460
    %v3462 = vpop.f32.mrb[0].mxu0
    %3463 = vdwg.mxu0
    %3464 = vmatprep.subr.bf16.mxu0 0
    %3465 = vmatpush1.bf16.msra.mxu0 %v1119
    %3466 = vmatprep.subr.bf16.mxu0 0
    %3467 = vmatpush1.bf16.msra.mxu0 %v1120
    %3468 = vmatprep.subr.bf16.mxu0 0
    %3469 = vmatpush1.bf16.msra.mxu0 %v1121
    %3470 = vmatprep.subr.bf16.mxu0 0
    %3471 = vmatpush1.bf16.msra.mxu0 %v1122
    %3472 = vmatprep.subr.bf16.mxu0 0
    %3473 = vmatpush1.bf16.msra.mxu0 %v1123
    %3474 = vmatprep.subr.bf16.mxu0 0
    %3475 = vmatpush1.bf16.msra.mxu0 %v1124
    %3476 = vmatprep.subr.bf16.mxu0 0
    %3477 = vmatpush1.bf16.msra.mxu0 %v1125
    %3478 = vmatprep.subr.bf16.mxu0 0
    %3479 = vmatpush1.bf16.msra.mxu0 %v1126
    %3480 = vmatprep.subr.bf16.mxu0 0
    %3481 = vmatpush1.bf16.msra.mxu0 %v1127
    %3482 = vmatprep.subr.bf16.mxu0 0
    %3483 = vmatpush1.bf16.msra.mxu0 %v1128
    %3484 = vmatprep.subr.bf16.mxu0 0
    %3485 = vmatpush1.bf16.msra.mxu0 %v1129
    %3486 = vmatprep.subr.bf16.mxu0 0
    %3487 = vmatpush1.bf16.msra.mxu0 %v1130
    %3488 = vmatprep.subr.bf16.mxu0 0
    %3489 = vmatpush1.bf16.msra.mxu0 %v1131
    %3490 = vmatprep.subr.bf16.mxu0 0
    %3491 = vmatpush1.bf16.msra.mxu0 %v1132
    %3492 = vmatprep.subr.bf16.mxu0 0
    %3493 = vmatpush1.bf16.msra.mxu0 %v1133
    %3494 = vmatprep.subr.bf16.mxu0 0
    %3495 = vmatpush1.bf16.msra.mxu0 %v1134
    %3496 = vmatprep.mubr.bf16.mxu0 %v3306
    %3497 = vmatmul.mubr.bf16.gmra.mrb[0].mxu0 %v3305
    %v3498 = vpop.f32.mrb[0].mxu0
    %v3499 = vadd.f32 %v3402, %v3498
    %v3500 = vpop.f32.mrb[0].mxu0
    %v3501 = vpop.f32.mrb[0].mxu0
    %v3502 = vadd.f32 %v3405, %v3501
    %v3503 = vpop.f32.mrb[0].mxu0
    %3504 = vmatprep.mubr.bf16.mxu0 %v3310
    %3505 = vmatmul.mubr.bf16.gmra.mrb[0].mxu0 %v3309
    %v3506 = vpop.f32.mrb[0].mxu0
    %v3507 = vadd.f32 %v3410, %v3506
    %v3508 = vpop.f32.mrb[0].mxu0
    %v3509 = vpop.f32.mrb[0].mxu0
    %v3510 = vadd.f32 %v3413, %v3509
    %v3511 = vpop.f32.mrb[0].mxu0
    %3512 = vmatprep.mubr.bf16.mxu0 %v3314
    %3513 = vmatmul.mubr.bf16.gmra.mrb[0].mxu0 %v3313
    %v3514 = vpop.f32.mrb[0].mxu0
    %v3515 = vadd.f32 %v3418, %v3514
    %v3516 = vpop.f32.mrb[0].mxu0
    %v3517 = vpop.f32.mrb[0].mxu0
    %v3518 = vadd.f32 %v3421, %v3517
    %v3519 = vpop.f32.mrb[0].mxu0
    %3520 = vmatprep.mubr.bf16.mxu0 %v3318
    %3521 = vmatmul.mubr.bf16.gmra.mrb[0].mxu0 %v3317
    %v3522 = vpop.f32.mrb[0].mxu0
    %v3523 = vadd.f32 %v3426, %v3522
    %v3524 = vpop.f32.mrb[0].mxu0
    %v3525 = vpop.f32.mrb[0].mxu0
    %v3526 = vadd.f32 %v3429, %v3525
    %v3527 = vpop.f32.mrb[0].mxu0
    %3528 = vmatprep.mubr.bf16.mxu0 %v3322
    %3529 = vmatmul.mubr.bf16.gmra.mrb[0].mxu0 %v3321
    %v3530 = vpop.f32.mrb[0].mxu0
    %v3531 = vadd.f32 %v3434, %v3530
    %v3532 = vpop.f32.mrb[0].mxu0
    %v3533 = vpop.f32.mrb[0].mxu0
    %v3534 = vadd.f32 %v3437, %v3533
    %v3535 = vpop.f32.mrb[0].mxu0
    %3536 = vmatprep.mubr.bf16.mxu0 %v3326
    %3537 = vmatmul.mubr.bf16.gmra.mrb[0].mxu0 %v3325
    %v3538 = vpop.f32.mrb[0].mxu0
    %v3539 = vadd.f32 %v3442, %v3538
    %v3540 = vpop.f32.mrb[0].mxu0
    %v3541 = vpop.f32.mrb[0].mxu0
    %v3542 = vadd.f32 %v3445, %v3541
    %v3543 = vpop.f32.mrb[0].mxu0
    %3544 = vmatprep.mubr.bf16.mxu0 %v3330
    %3545 = vmatmul.mubr.bf16.gmra.mrb[0].mxu0 %v3329
    %v3546 = vpop.f32.mrb[0].mxu0
    %v3547 = vadd.f32 %v3450, %v3546
    %v3548 = vpop.f32.mrb[0].mxu0
    %v3549 = vpop.f32.mrb[0].mxu0
    %v3550 = vadd.f32 %v3453, %v3549
    %v3551 = vpop.f32.mrb[0].mxu0
    %3552 = vmatprep.mubr.bf16.mxu0 %v3334
    %3553 = vmatmul.mubr.bf16.gmra.mrb[0].mxu0 %v3333
    %v3554 = vpop.f32.mrb[0].mxu0
    %v3555 = vadd.f32 %v3458, %v3554
    %v3556 = vpop.f32.mrb[0].mxu0
    %v3557 = vpop.f32.mrb[0].mxu0
    %v3558 = vadd.f32 %v3461, %v3557
    %v3559 = vpop.f32.mrb[0].mxu0
    %3560 = vdwg.mxu0
    %v3561 = vmax.f32 %v3499, 0.0
    %v3562 = vmax.f32 %v3502, 0.0
    %v3563 = vmax.f32 %v3507, 0.0
    %v3564 = vmax.f32 %v3510, 0.0
    %v3565 = vmax.f32 %v3515, 0.0
    %v3566 = vmax.f32 %v3518, 0.0
    %v3567 = vmax.f32 %v3523, 0.0
    %v3568 = vmax.f32 %v3526, 0.0
    %v3569 = vmax.f32 %v3531, 0.0
    %v3570 = vmax.f32 %v3534, 0.0
    %v3571 = vmax.f32 %v3539, 0.0
    %v3572 = vmax.f32 %v3542, 0.0
    %v3573 = vmax.f32 %v3547, 0.0
    %v3574 = vmax.f32 %v3550, 0.0
    %v3575 = vmax.f32 %v3555, 0.0
    %v3576 = vmax.f32 %v3558, 0.0
    %v3577 = vld [vmem:[%s5 + $0x180] sm:$0xff]
    %v3578 = vld [vmem:[%s5 + $0x188] sm:$0xff]
    %v3579 = vld [vmem:[%s5 + $0x190] sm:$0xff]
    %v3580 = vld [vmem:[%s5 + $0x198] sm:$0xff]
    %v3581 = vld [vmem:[%s5 + $0x1a0] sm:$0xff]
    %v3582 = vld [vmem:[%s5 + $0x1a8] sm:$0xff]
    %v3583 = vld [vmem:[%s5 + $0x1b0] sm:$0xff]
    %v3584 = vld [vmem:[%s5 + $0x1b8] sm:$0xff]
    %v3585 = vld [vmem:[%s5 + $0x1c0] sm:$0xff]
    %v3586 = vld [vmem:[%s5 + $0x1c8] sm:$0xff]
    %v3587 = vld [vmem:[%s5 + $0x1d0] sm:$0xff]
    %v3588 = vld [vmem:[%s5 + $0x1d8] sm:$0xff]
    %v3589 = vld [vmem:[%s5 + $0x1e0] sm:$0xff]
    %v3590 = vld [vmem:[%s5 + $0x1e8] sm:$0xff]
    %v3591 = vld [vmem:[%s5 + $0x1f0] sm:$0xff]
    %v3592 = vld [vmem:[%s5 + $0x1f8] sm:$0xff]
    %3594 = vset.pattern.permute.xlu0 0
    %3595 = vperm.xlu0 %3594, %v3577
    %v3596 = vpop.permute.xlu0 %3595
    %3599 = vset.pattern.permute.xlu0 0
    %3600 = vperm.xlu0 %3599, %v3578
    %v3601 = vpop.permute.xlu0 %3600
    %3604 = vset.pattern.permute.xlu0 0
    %3605 = vperm.xlu0 %3604, %v3579
    %v3606 = vpop.permute.xlu0 %3605
    %3609 = vset.pattern.permute.xlu0 0
    %3610 = vperm.xlu0 %3609, %v3580
    %v3611 = vpop.permute.xlu0 %3610
    %3614 = vset.pattern.permute.xlu0 0
    %3615 = vperm.xlu0 %3614, %v3581
    %v3616 = vpop.permute.xlu0 %3615
    %3619 = vset.pattern.permute.xlu0 0
    %3620 = vperm.xlu0 %3619, %v3582
    %v3621 = vpop.permute.xlu0 %3620
    %3624 = vset.pattern.permute.xlu0 0
    %3625 = vperm.xlu0 %3624, %v3583
    %v3626 = vpop.permute.xlu0 %3625
    %3629 = vset.pattern.permute.xlu0 0
    %3630 = vperm.xlu0 %3629, %v3584
    %v3631 = vpop.permute.xlu0 %3630
    %3634 = vset.pattern.permute.xlu0 0
    %3635 = vperm.xlu0 %3634, %v3585
    %v3636 = vpop.permute.xlu0 %3635
    %3639 = vset.pattern.permute.xlu0 0
    %3640 = vperm.xlu0 %3639, %v3586
    %v3641 = vpop.permute.xlu0 %3640
    %3644 = vset.pattern.permute.xlu0 0
    %3645 = vperm.xlu0 %3644, %v3587
    %v3646 = vpop.permute.xlu0 %3645
    %3649 = vset.pattern.permute.xlu0 0
    %3650 = vperm.xlu0 %3649, %v3588
    %v3651 = vpop.permute.xlu0 %3650
    %3654 = vset.pattern.permute.xlu0 0
    %3655 = vperm.xlu0 %3654, %v3589
    %v3656 = vpop.permute.xlu0 %3655
    %3659 = vset.pattern.permute.xlu0 0
    %3660 = vperm.xlu0 %3659, %v3590
    %v3661 = vpop.permute.xlu0 %3660
    %3664 = vset.pattern.permute.xlu0 0
    %3665 = vperm.xlu0 %3664, %v3591
    %v3666 = vpop.permute.xlu0 %3665
    %3669 = vset.pattern.permute.xlu0 0
    %3670 = vperm.xlu0 %3669, %v3592
    %v3671 = vpop.permute.xlu0 %3670
    %v3673 = vmul.f32 %v3561, %v3596
    %v3674 = vmul.f32 %v3562, %v3601
    %v3675 = vmul.f32 %v3563, %v3606
    %v3676 = vmul.f32 %v3564, %v3611
    %v3677 = vmul.f32 %v3565, %v3616
    %v3678 = vmul.f32 %v3566, %v3621
    %v3679 = vmul.f32 %v3567, %v3626
    %v3680 = vmul.f32 %v3568, %v3631
    %v3681 = vmul.f32 %v3569, %v3636
    %v3682 = vmul.f32 %v3570, %v3641
    %v3683 = vmul.f32 %v3571, %v3646
    %v3684 = vmul.f32 %v3572, %v3651
    %v3685 = vmul.f32 %v3573, %v3656
    %v3686 = vmul.f32 %v3574, %v3661
    %v3687 = vmul.f32 %v3575, %v3666
    %v3688 = vmul.f32 %v3576, %v3671
    %v3689 = vsel %vm1745, %v3673, 0.0
    %v3690 = vsel %vm1745, %v3674, 0.0
    %v3691 = vadd.f32 %v3689, %v3690
    %v3692 = vsel %vm1745, %v3675, 0.0
    %v3693 = vadd.f32 %v3691, %v3692
    %v3694 = vsel %vm1745, %v3676, 0.0
    %v3695 = vadd.f32 %v3693, %v3694
    %v3696 = vsel %vm1745, %v3677, 0.0
    %v3697 = vadd.f32 %v3695, %v3696
    %v3698 = vsel %vm1745, %v3678, 0.0
    %v3699 = vadd.f32 %v3697, %v3698
    %v3700 = vsel %vm1745, %v3679, 0.0
    %v3701 = vadd.f32 %v3699, %v3700
    %v3702 = vsel %vm1745, %v3680, 0.0
    %v3703 = vadd.f32 %v3701, %v3702
    %v3704 = vsel %vm1745, %v3681, 0.0
    %v3705 = vadd.f32 %v3703, %v3704
    %v3706 = vsel %vm1745, %v3682, 0.0
    %v3707 = vadd.f32 %v3705, %v3706
    %v3708 = vsel %vm1745, %v3683, 0.0
    %v3709 = vadd.f32 %v3707, %v3708
    %v3710 = vsel %vm1745, %v3684, 0.0
    %v3711 = vadd.f32 %v3709, %v3710
    %v3712 = vsel %vm1745, %v3685, 0.0
    %v3713 = vadd.f32 %v3711, %v3712
    %v3714 = vsel %vm1745, %v3686, 0.0
    %v3715 = vadd.f32 %v3713, %v3714
    %v3716 = vsel %vm1745, %v3687, 0.0
    %v3717 = vadd.f32 %v3715, %v3716
    %v3718 = vsel %vm1745, %v3688, 0.0
    %v3719 = vadd.f32 %v3717, %v3718
    %v3720 = vrot.slane %v3719, 4
    %v3721 = vadd.f32 %v3719, %v3720
    %v3722 = vrot.slane %v3721, 2
    %v3723 = vadd.f32 %v3721, %v3722
    %v3724 = vrot.slane %v3723, 1
    %v3725 = vadd.f32 %v3723, %v3724
    %v3726 = vadd.f32 %v3078, %v3725
    %s3727 = sld [smem:[#allocation2]]
    %v3728 = vstv %s3727
    %v3729 = vadd.f32 %v3726, %v3728
    %vm3730 = vcmask 57344
    %3731 = vst.msk [vmem:[#allocation3] sm:$0x1] %vm3730, %v3729
    // Predicated region
    $region30: #{critic_forward.1} parent=1 // pred_check
      _
    $region31: #{critic_forward.1} parent=1 // pred_check_branch
      %3733 = sbr.rel (0) target = $region33
    $region32: #{critic_forward.1} parent=1 // pred_region
      %s3735 = ssub.s32 16, 16
      %3736 = vsyncadd [#allocation4], %s3735
      %s3738 = sshll.u32 [#allocation3], 4
      %s3739 = int_to_ptr.vmem [resolvable:$true] %s3738
      %3741 = dma.vmem_to_hbm [thread:$0]  %s3739, 16, %s7, [#allocation4]
    $region33: #{critic_forward.1} parent=1 // pred_fallthru
      _
    // Predicated region
    $region34: #{critic_forward.1} parent=1 // pred_check
      _
    $region35: #{critic_forward.1} parent=1 // pred_check_branch
      %3743 = sbr.rel (0) target = $region37
    $region36: #{critic_forward.1} parent=1 // pred_region
      %3744 = dma.done [#allocation4], 16
    $region37: #{critic_forward.1} parent=1 // pred_fallthru
      _
    %3745 = vsyncpa [#allocation4], 1

</llo_original>
